<compile_context>
chip_gen: v7x
topology: tpu7x:2x2x1
jax: 0.10.0
libtpu: 0.0.40
codegen_flags: <defaults>
</compile_context>

<pallas_src>
import jax
import jax.numpy as jnp
from jax.experimental import pallas as pl
from jax.experimental.pallas import tpu as pltpu


def _round_up(x, m):
    return (x + m - 1) // m * m


# ----------------------------- fused Pallas kernel ---------------------------

def _make_kernel(BB, NROWS, PR, M, TAIL, tap_offsets, n_pol):
    def kernel(p1_ref, w1_ref, w2_ref, b2_ref, wh_ref, bh_ref,
               wpfc_ref, bpfc_ref, wvfc_ref, bvfc_ref,
               pol_ref, val_ref, h1_ref):
        C = w2_ref.shape[-1]

        # ---- conv1 (1->C) + ReLU over the whole BB-board row stack.  The
        # bias and the interior mask ride in the augmented K column, so halo
        # and slack rows are exactly 0 (conv2's implicit zero padding).
        h1 = jnp.dot(p1_ref[...], w1_ref[...],
                     preferred_element_type=jnp.float32)
        h1 = jnp.maximum(h1, 0.0)                                # (M, C) f32
        h1_ref[pl.ds(0, M), :] = h1
        # Tap windows read up to TAIL rows past the stack; keep them finite.
        h1_ref[pl.ds(M, TAIL), :] = jnp.zeros((TAIL, C), jnp.float32)

        # ---- conv2 (C->C): 9 statically shifted tap matmuls over the whole
        # stack, bf16 on the MXU with f32 accumulation.
        acc = jnp.zeros((M, C), jnp.float32)
        for t, off in enumerate(tap_offsets):
            lhs = h1_ref[pl.ds(off, M), :].astype(jnp.bfloat16)
            acc = acc + jnp.dot(lhs, w2_ref[t],
                                preferred_element_type=jnp.float32)
        h2 = jnp.maximum(acc + b2_ref[...], 0.0)                 # (M, C) f32
        h2b = h2.astype(jnp.bfloat16)

        # ---- fused policy/value 1x1 head convs + ReLU: (M, C) @ (C, 3).
        hv = jnp.dot(h2b, wh_ref[...], preferred_element_type=jnp.float32)
        hv = jnp.maximum(hv + bh_ref[...], 0.0)                  # (M, 3) f32

        # ---- per-board head FCs (tiny; 128-aligned static row slices).
        logit_rows = []
        value_rows = []
        for b in range(BB):
            blk = hv[b * NROWS:b * NROWS + PR, :]                # (PR, 3)
            lg = bpfc_ref[...]                                   # (1, A)
            for c in range(n_pol):
                lg = lg + jnp.sum(blk[:, c:c + 1] * wpfc_ref[c],
                                  axis=0, keepdims=True)
            logit_rows.append(lg)
            value_rows.append(jnp.sum(blk[:, n_pol:n_pol + 1] * wvfc_ref[...],
                                      axis=0, keepdims=True))    # (1, 1)

        logits = jnp.concatenate(logit_rows, axis=0)             # (BB, A)
        m = jnp.max(logits, axis=-1, keepdims=True)
        e = jnp.exp(logits - m)
        pol_ref[...] = e / jnp.sum(e, axis=-1, keepdims=True)

        v = jnp.concatenate(value_rows, axis=0)                  # (BB, 1)
        val_ref[...] = jnp.tanh(v + bvfc_ref[...])

    return kernel


# ------------------------------ forward wrapper -------------------------------

def alphazero_forward(board_nchw, p, block_batch=8):
    """board_nchw: (B, 1, H, W).  p: output of prepare_params.  -> (policy, value)."""
    B, _, H, W = board_nchw.shape
    A = p["bpfc"].shape[1]
    C = p["w2t"].shape[1]
    n_pol = p["wpfc"].shape[0]
    K1 = p["w1aug"].shape[0]                         # 9 taps + 1 mask/bias col

    Hp, Wp = H + 2, W + 2
    P = Hp * Wp
    EXT = Wp + 1
    PR = _round_up(P, 8)
    NROWS = _round_up(PR + 2 * EXT, 8)
    off_max = 2 * EXT
    # Geometry invariants the halo handling relies on (review correctness note).
    assert PR + off_max <= NROWS, "tap window exceeds per-board row slab"
    assert EXT + P <= NROWS, "padded grid does not fit the row slab"
    tap_offsets = tuple(EXT + (kh - 1) * Wp + (kw - 1)
                        for kh in range(3) for kw in range(3))

    BB = max(1, min(block_batch, B))                 # boards per grid step
    Bp = _round_up(B, BB)
    nsteps = Bp // BB
    M = BB * NROWS
    TAIL = _round_up(off_max, 8)

    # Cheap XLA glue (bf16): 3x3 board patches + an interior-indicator column
    # (carries conv1's bias through the matmul and doubles as the halo mask),
    # laid out on the padded row-flattened grid and stacked for all boards.
    x = board_nchw.astype(jnp.float32).reshape(B, H, W)
    xp = jnp.pad(x, ((0, 0), (1, 1), (1, 1)))
    patches = jnp.stack([xp[:, dy:dy + H, dx:dx + W]
                         for dy in range(3) for dx in range(3)], axis=-1)
    patches = jnp.concatenate(
        [patches, jnp.ones((B, H, W, 1), jnp.float32)], axis=-1)   # (B,H,W,10)
    patches = jnp.pad(patches, ((0, 0), (1, 1), (1, 1), (0, 0)))   # (B,Hp,Wp,10)
    patches = patches.reshape(B, P, K1)
    p1 = jnp.pad(patches, ((0, Bp - B), (EXT, NROWS - P - EXT), (0, 0)))
    p1 = p1.reshape(Bp * NROWS, K1).astype(jnp.bfloat16)

    def _const(ndim):
        return lambda i, _n=ndim: (0,) * _n

    in_specs = [
        pl.BlockSpec((M, K1), lambda i: (i, 0)),                   # patches stack
        pl.BlockSpec((K1, C), _const(2)),                          # w1 (augmented)
        pl.BlockSpec((9, C, C), _const(3)),                        # w2 taps
        pl.BlockSpec((1, C), _const(2)),                           # b2
        pl.BlockSpec((C, n_pol + 1), _const(2)),                   # fused head conv W
        pl.BlockSpec((1, n_pol + 1), _const(2)),                   # fused head conv b
        pl.BlockSpec((n_pol, PR, A), _const(3)),                   # policy FC W
        pl.BlockSpec((1, A), _const(2)),                           # policy FC b
        pl.BlockSpec((PR, 1), _const(2)),                          # value FC W
        pl.BlockSpec((1, 1), _const(2)),                           # value FC b
    ]
    out_specs = [
        pl.BlockSpec((BB, A), lambda i: (i, 0)),                   # policy
        pl.BlockSpec((BB, 1), lambda i: (i, 0)),                   # value
    ]

    flops = nsteps * (2 * M * K1 * C + 2 * 9 * M * C * C
                      + 2 * M * C * (n_pol + 1)
                      + BB * (2 * PR * A * n_pol + 2 * PR))
    bytes_accessed = (Bp * NROWS * K1 * 2 + Bp * (A + 1) * 4
                      + 9 * C * C * 2 + K1 * C * 2 + C * (n_pol + 1) * 2
                      + (n_pol * PR * A + PR + A + C + n_pol + 2) * 4)

    policy, value = pl.pallas_call(
        _make_kernel(BB, NROWS, PR, M, TAIL, tap_offsets, n_pol),
        grid_spec=pltpu.PrefetchScalarGridSpec(
            num_scalar_prefetch=0,
            grid=(nsteps,),
            in_specs=in_specs,
            out_specs=out_specs,
            scratch_shapes=[pltpu.VMEM((M + TAIL, C), jnp.float32)],
        ),
        out_shape=(jax.ShapeDtypeStruct((Bp, A), jnp.float32),
                   jax.ShapeDtypeStruct((Bp, 1), jnp.float32)),
        compiler_params=pltpu.CompilerParams(
            dimension_semantics=("parallel",),
            vmem_limit_bytes=32 * 1024 * 1024),
        cost_estimate=pl.CostEstimate(flops=flops,
                                      transcendentals=Bp * (A + 1),
                                      bytes_accessed=bytes_accessed),
    )(p1, p["w1aug"], p["w2t"], p["b2"], p["wh"], p["bh"],
      p["wpfc"], p["bpfc"], p["wvfc"], p["bvfc"])

    return policy[:B], value[:B]


# ------------------------------ parameter prep --------------------------------

def init_params(key, board_shape, num_actions):
    H, W = board_shape
    ks = jax.random.split(key, 12)
    s = 0.1
    return {
        "w1": jax.random.normal(ks[0], (128, 1, 3, 3), jnp.float32) * s,
        "b1": jax.random.normal(ks[1], (128,), jnp.float32) * s,
        "w2": jax.random.normal(ks[2], (128, 128, 3, 3), jnp.float32) * s,
        "b2": jax.random.normal(ks[3], (128,), jnp.float32) * s,
        "wp_conv": jax.random.normal(ks[4], (2, 128, 1, 1), jnp.float32) * s,
        "bp_conv": jax.random.normal(ks[5], (2,), jnp.float32) * s,
        "wp_fc": jax.random.normal(ks[6], (num_actions, 2 * H * W), jnp.float32) * s,
        "bp_fc": jax.random.normal(ks[7], (num_actions,), jnp.float32) * s,
        "wv_conv": jax.random.normal(ks[8], (1, 128, 1, 1), jnp.float32) * s,
        "bv_conv": jax.random.normal(ks[9], (1,), jnp.float32) * s,
        "wv_fc": jax.random.normal(ks[10], (1, H * W), jnp.float32) * s,
        "bv_fc": jax.random.normal(ks[11], (1,), jnp.float32) * s,
    }


def prepare_params(params, board_shape, num_actions):
    """One-time weight preprocessing, kept OUT of the traced forward:
    conv->matmul reshapes, the NCHW-flatten permutation of the head FC
    weights scattered onto the kernel's padded row grid, bias/mask folding
    into conv1's augmented column, head-conv fusion, and bf16 MXU casts."""
    H, W = board_shape
    A = num_actions
    Hp, Wp = H + 2, W + 2
    P = Hp * Wp
    PR = _round_up(P, 8)

    c1, cin1, kh, kw = params["w1"].shape
    c2 = params["w2"].shape[0]
    n_pol = params["wp_conv"].shape[0]

    # conv1 as a matmul; the bias rides on an extra input column that is 1 on
    # interior board cells and 0 on halo/slack rows (so it also masks halos).
    w1m = jnp.transpose(params["w1"], (2, 3, 1, 0)).reshape(kh * kw * cin1, c1)
    w1aug = jnp.concatenate([w1m, params["b1"].reshape(1, c1)], axis=0)

    w2t = jnp.transpose(params["w2"], (2, 3, 1, 0)).reshape(9, c2, c2)

    # Fused 1x1 head-conv weights: columns [policy ch0, policy ch1, value].
    wp = params["wp_conv"].reshape(n_pol, c2).T                  # (C, 2)
    wv = params["wv_conv"].reshape(1, c2).T                      # (C, 1)
    wh = jnp.concatenate([wp, wv], axis=1)                       # (C, 3)
    bh = jnp.concatenate([params["bp_conv"],
                          params["bv_conv"]]).reshape(1, n_pol + 1)

    # Policy FC weight: (A, 2*H*W) NCHW-flatten order -> (2, PR, A) on the
    # kernel's padded grid rows, zeros on halo / slack rows.
    wpfc = params["wp_fc"].reshape(A, n_pol, H, W)
    wpfc = jnp.transpose(wpfc, (1, 2, 3, 0))                     # (2, H, W, A)
    wpfc = jnp.pad(wpfc, ((0, 0), (1, 1), (1, 1), (0, 0))).reshape(n_pol, P, A)
    wpfc = jnp.pad(wpfc, ((0, 0), (0, PR - P), (0, 0)))

    # Value FC weight: (1, H*W) -> (PR, 1) on the padded grid rows.
    wvfc = params["wv_fc"].reshape(H, W, 1)
    wvfc = jnp.pad(wvfc, ((1, 1), (1, 1), (0, 0))).reshape(P, 1)
    wvfc = jnp.pad(wvfc, ((0, PR - P), (0, 0)))

    return {
        "w1aug": w1aug.astype(jnp.bfloat16),
        "w2t": w2t.astype(jnp.bfloat16),
        "b2": params["b2"].reshape(1, c2).astype(jnp.float32),
        "wh": wh.astype(jnp.bfloat16),
        "bh": bh.astype(jnp.float32),
        "wpfc": wpfc.astype(jnp.float32),
        "bpfc": params["bp_fc"].reshape(1, A).astype(jnp.float32),
        "wvfc": wvfc.astype(jnp.float32),
        "bvfc": params["bv_fc"].reshape(1, 1).astype(jnp.float32),
    }


# ------------------------------ pure-XLA reference ----------------------------

def _reference_forward(board, params):
    dn = ("NCHW", "OIHW", "NCHW")
    x = board.astype(jnp.float32)
    y = jax.lax.conv_general_dilated(x, params["w1"], (1, 1), "SAME",
                                     dimension_numbers=dn)
    y = jnp.maximum(y + params["b1"].reshape(1, -1, 1, 1), 0.0)
    y = jax.lax.conv_general_dilated(y, params["w2"], (1, 1), "SAME",
                                     dimension_numbers=dn)
    y = jnp.maximum(y + params["b2"].reshape(1, -1, 1, 1), 0.0)
    B = x.shape[0]
    pc = jax.lax.conv_general_dilated(y, params["wp_conv"], (1, 1), "SAME",
                                      dimension_numbers=dn)
    pc = jnp.maximum(pc + params["bp_conv"].reshape(1, -1, 1, 1), 0.0)
    logits = pc.reshape(B, -1) @ params["wp_fc"].T + params["bp_fc"]
    policy = jax.nn.softmax(logits, axis=1)
    vc = jax.lax.conv_general_dilated(y, params["wv_conv"], (1, 1), "SAME",
                                      dimension_numbers=dn)
    vc = jnp.maximum(vc + params["bv_conv"].reshape(1, -1, 1, 1), 0.0)
    value = jnp.tanh(vc.reshape(B, -1) @ params["wv_fc"].T + params["bv_fc"])
    return policy, value


# ------------------------------------ main ------------------------------------

if __name__ == "__main__":
    B = 2
    board_shape = (8, 8)
    num_actions = 8

    key = jax.random.PRNGKey(0)
    k_in, k_par = jax.random.split(key)

    # Integer-like board states (e.g. {-1, 0, 1}) cast to float in forward.
    board = jax.random.randint(
        k_in, (B, 1, board_shape[0], board_shape[1]), -1, 2).astype(jnp.float32)

    params = init_params(k_par, board_shape, num_actions)
    prepped = prepare_params(params, board_shape, num_actions)   # one-time prep

    fwd = jax.jit(alphazero_forward)
    policy, value = fwd(board, prepped)
    jax.block_until_ready((policy, value))

    assert policy.shape == (B, num_actions)
    assert value.shape == (B, 1)

    ref_policy, ref_value = _reference_forward(board, params)
    assert float(jnp.max(jnp.abs(policy - ref_policy))) < 3e-2, "policy mismatch"
    assert float(jnp.max(jnp.abs(value - ref_value))) < 3e-2, "value mismatch"

    print("KERNEL_OK")
</pallas_src>

<mosaic_0001>
module attributes {stable_mosaic.version = 11 : i64} {
  func.func @kernel(%arg0: i32, %arg1: memref<256x10xbf16, #tpu.memory_space<vmem>>, %arg2: memref<10x128xbf16, #tpu.memory_space<vmem>>, %arg3: memref<9x128x128xbf16, #tpu.memory_space<vmem>>, %arg4: memref<1x128xf32, #tpu.memory_space<vmem>>, %arg5: memref<128x3xbf16, #tpu.memory_space<vmem>>, %arg6: memref<1x3xf32, #tpu.memory_space<vmem>>, %arg7: memref<2x104x8xf32, #tpu.memory_space<vmem>>, %arg8: memref<1x8xf32, #tpu.memory_space<vmem>>, %arg9: memref<104x1xf32, #tpu.memory_space<vmem>>, %arg10: memref<1x1xf32, #tpu.memory_space<vmem>>, %arg11: memref<2x8xf32, #tpu.memory_space<vmem>>, %arg12: memref<2x1xf32, #tpu.memory_space<vmem>>, %arg13: memref<280x128xf32, #tpu.memory_space<vmem>>) attributes {dimension_semantics = [#tpu.dimension_semantics<parallel>], iteration_bounds = array<i64: 1>, scalar_prefetch = 0 : i64, scratch_operands = 1 : i64, tpu.core_type = #tpu.core_type<tc>, window_params = [{transform_indices = @transform_0, window_bounds = array<i64: 256, 10>}, {pipeline_mode = #tpu.pipeline_mode<synchronous>, transform_indices = @transform_1, window_bounds = array<i64: 10, 128>}, {pipeline_mode = #tpu.pipeline_mode<synchronous>, transform_indices = @transform_2, window_bounds = array<i64: 9, 128, 128>}, {pipeline_mode = #tpu.pipeline_mode<synchronous>, transform_indices = @transform_3, window_bounds = array<i64: 1, 128>}, {pipeline_mode = #tpu.pipeline_mode<synchronous>, transform_indices = @transform_4, window_bounds = array<i64: 128, 3>}, {pipeline_mode = #tpu.pipeline_mode<synchronous>, transform_indices = @transform_5, window_bounds = array<i64: 1, 3>}, {pipeline_mode = #tpu.pipeline_mode<synchronous>, transform_indices = @transform_6, window_bounds = array<i64: 2, 104, 8>}, {pipeline_mode = #tpu.pipeline_mode<synchronous>, transform_indices = @transform_7, window_bounds = array<i64: 1, 8>}, {pipeline_mode = #tpu.pipeline_mode<synchronous>, transform_indices = @transform_8, window_bounds = array<i64: 104, 1>}, {pipeline_mode = #tpu.pipeline_mode<synchronous>, transform_indices = @transform_9, window_bounds = array<i64: 1, 1>}, {transform_indices = @transform_10, window_bounds = array<i64: 2, 8>}, {transform_indices = @transform_11, window_bounds = array<i64: 2, 1>}]} {
    %c0 = arith.constant 0 : index
    %c0_0 = arith.constant 0 : index
    %0 = vector.load %arg1[%c0, %c0_0] : memref<256x10xbf16, #tpu.memory_space<vmem>>, vector<256x10xbf16>
    %c0_1 = arith.constant 0 : index
    %c0_2 = arith.constant 0 : index
    %1 = vector.load %arg2[%c0_1, %c0_2] : memref<10x128xbf16, #tpu.memory_space<vmem>>, vector<10x128xbf16>
    %cst = arith.constant dense<0.000000e+00> : vector<256x128xf32>
    %2 = tpu.matmul %0, %1, %cst {dimension_numbers = #tpu.dot_dimension_numbers<[1], [0], [0], [1], [0, 0, 1, 1], [], []>} : vector<256x10xbf16>, vector<10x128xbf16>, vector<256x128xf32> -> vector<256x128xf32>
    %cst_3 = arith.constant 0.000000e+00 : f32
    %3 = vector.broadcast %cst_3 : f32 to vector<256x128xf32>
    %4 = arith.maximumf %2, %3 : vector<256x128xf32>
    %c0_4 = arith.constant 0 : index
    %c0_5 = arith.constant 0 : index
    %5 = vector.load %arg13[%c0_4, %c0_5] : memref<280x128xf32, #tpu.memory_space<vmem>>, vector<256x128xf32>
    tpu.vector_store %arg13[%c0_4, %c0_5], %4 {strides = array<i32>} : memref<280x128xf32, #tpu.memory_space<vmem>>, vector<256x128xf32>,
    %cst_6 = arith.constant 0.000000e+00 : f32
    %6 = vector.broadcast %cst_6 : f32 to vector<24x128xf32>
    %c256 = arith.constant 256 : index
    %c0_7 = arith.constant 0 : index
    %7 = vector.load %arg13[%c256, %c0_7] : memref<280x128xf32, #tpu.memory_space<vmem>>, vector<24x128xf32>
    tpu.vector_store %arg13[%c256, %c0_7], %6 {strides = array<i32>} : memref<280x128xf32, #tpu.memory_space<vmem>>, vector<24x128xf32>,
    %cst_8 = arith.constant 0.000000e+00 : f32
    %8 = vector.broadcast %cst_8 : f32 to vector<256x128xf32>
    %c0_9 = arith.constant 0 : index
    %c0_10 = arith.constant 0 : index
    %9 = vector.load %arg13[%c0_9, %c0_10] : memref<280x128xf32, #tpu.memory_space<vmem>>, vector<256x128xf32>
    %10 = arith.truncf %9 : vector<256x128xf32> to vector<256x128xbf16>
    %c0_11 = arith.constant 0 : index
    %c0_12 = arith.constant 0 : index
    %c0_13 = arith.constant 0 : index
    %11 = vector.load %arg3[%c0_11, %c0_12, %c0_13] : memref<9x128x128xbf16, #tpu.memory_space<vmem>>, vector<1x128x128xbf16>
    %12 = vector.shape_cast %11 : vector<1x128x128xbf16> to vector<128x128xbf16>
    %cst_14 = arith.constant dense<0.000000e+00> : vector<256x128xf32>
    %13 = tpu.matmul %10, %12, %cst_14 {dimension_numbers = #tpu.dot_dimension_numbers<[1], [0], [0], [1], [0, 0, 1, 1], [], []>} : vector<256x128xbf16>, vector<128x128xbf16>, vector<256x128xf32> -> vector<256x128xf32>
    %14 = arith.addf %8, %13 : vector<256x128xf32>
    %c1 = arith.constant 1 : index
    %c0_15 = arith.constant 0 : index
    %15 = vector.load %arg13[%c1, %c0_15] : memref<280x128xf32, #tpu.memory_space<vmem>>, vector<256x128xf32>
    %16 = arith.truncf %15 : vector<256x128xf32> to vector<256x128xbf16>
    %c1_16 = arith.constant 1 : index
    %c0_17 = arith.constant 0 : index
    %c0_18 = arith.constant 0 : index
    %17 = vector.load %arg3[%c1_16, %c0_17, %c0_18] : memref<9x128x128xbf16, #tpu.memory_space<vmem>>, vector<1x128x128xbf16>
    %18 = vector.shape_cast %17 : vector<1x128x128xbf16> to vector<128x128xbf16>
    %cst_19 = arith.constant dense<0.000000e+00> : vector<256x128xf32>
    %19 = tpu.matmul %16, %18, %cst_19 {dimension_numbers = #tpu.dot_dimension_numbers<[1], [0], [0], [1], [0, 0, 1, 1], [], []>} : vector<256x128xbf16>, vector<128x128xbf16>, vector<256x128xf32> -> vector<256x128xf32>
    %20 = arith.addf %14, %19 : vector<256x128xf32>
    %c2 = arith.constant 2 : index
    %c0_20 = arith.constant 0 : index
    %21 = vector.load %arg13[%c2, %c0_20] : memref<280x128xf32, #tpu.memory_space<vmem>>, vector<256x128xf32>
    %22 = arith.truncf %21 : vector<256x128xf32> to vector<256x128xbf16>
    %c2_21 = arith.constant 2 : index
    %c0_22 = arith.constant 0 : index
    %c0_23 = arith.constant 0 : index
    %23 = vector.load %arg3[%c2_21, %c0_22, %c0_23] : memref<9x128x128xbf16, #tpu.memory_space<vmem>>, vector<1x128x128xbf16>
    %24 = vector.shape_cast %23 : vector<1x128x128xbf16> to vector<128x128xbf16>
    %cst_24 = arith.constant dense<0.000000e+00> : vector<256x128xf32>
    %25 = tpu.matmul %22, %24, %cst_24 {dimension_numbers = #tpu.dot_dimension_numbers<[1], [0], [0], [1], [0, 0, 1, 1], [], []>} : vector<256x128xbf16>, vector<128x128xbf16>, vector<256x128xf32> -> vector<256x128xf32>
    %26 = arith.addf %20, %25 : vector<256x128xf32>
    %c10 = arith.constant 10 : index
    %c0_25 = arith.constant 0 : index
    %27 = vector.load %arg13[%c10, %c0_25] : memref<280x128xf32, #tpu.memory_space<vmem>>, vector<256x128xf32>
    %28 = arith.truncf %27 : vector<256x128xf32> to vector<256x128xbf16>
    %c3 = arith.constant 3 : index
    %c0_26 = arith.constant 0 : index
    %c0_27 = arith.constant 0 : index
    %29 = vector.load %arg3[%c3, %c0_26, %c0_27] : memref<9x128x128xbf16, #tpu.memory_space<vmem>>, vector<1x128x128xbf16>
    %30 = vector.shape_cast %29 : vector<1x128x128xbf16> to vector<128x128xbf16>
    %cst_28 = arith.constant dense<0.000000e+00> : vector<256x128xf32>
    %31 = tpu.matmul %28, %30, %cst_28 {dimension_numbers = #tpu.dot_dimension_numbers<[1], [0], [0], [1], [0, 0, 1, 1], [], []>} : vector<256x128xbf16>, vector<128x128xbf16>, vector<256x128xf32> -> vector<256x128xf32>
    %32 = arith.addf %26, %31 : vector<256x128xf32>
    %c11 = arith.constant 11 : index
    %c0_29 = arith.constant 0 : index
    %33 = vector.load %arg13[%c11, %c0_29] : memref<280x128xf32, #tpu.memory_space<vmem>>, vector<256x128xf32>
    %34 = arith.truncf %33 : vector<256x128xf32> to vector<256x128xbf16>
    %c4 = arith.constant 4 : index
    %c0_30 = arith.constant 0 : index
    %c0_31 = arith.constant 0 : index
    %35 = vector.load %arg3[%c4, %c0_30, %c0_31] : memref<9x128x128xbf16, #tpu.memory_space<vmem>>, vector<1x128x128xbf16>
    %36 = vector.shape_cast %35 : vector<1x128x128xbf16> to vector<128x128xbf16>
    %cst_32 = arith.constant dense<0.000000e+00> : vector<256x128xf32>
    %37 = tpu.matmul %34, %36, %cst_32 {dimension_numbers = #tpu.dot_dimension_numbers<[1], [0], [0], [1], [0, 0, 1, 1], [], []>} : vector<256x128xbf16>, vector<128x128xbf16>, vector<256x128xf32> -> vector<256x128xf32>
    %38 = arith.addf %32, %37 : vector<256x128xf32>
    %c12 = arith.constant 12 : index
    %c0_33 = arith.constant 0 : index
    %39 = vector.load %arg13[%c12, %c0_33] : memref<280x128xf32, #tpu.memory_space<vmem>>, vector<256x128xf32>
    %40 = arith.truncf %39 : vector<256x128xf32> to vector<256x128xbf16>
    %c5 = arith.constant 5 : index
    %c0_34 = arith.constant 0 : index
    %c0_35 = arith.constant 0 : index
    %41 = vector.load %arg3[%c5, %c0_34, %c0_35] : memref<9x128x128xbf16, #tpu.memory_space<vmem>>, vector<1x128x128xbf16>
    %42 = vector.shape_cast %41 : vector<1x128x128xbf16> to vector<128x128xbf16>
    %cst_36 = arith.constant dense<0.000000e+00> : vector<256x128xf32>
    %43 = tpu.matmul %40, %42, %cst_36 {dimension_numbers = #tpu.dot_dimension_numbers<[1], [0], [0], [1], [0, 0, 1, 1], [], []>} : vector<256x128xbf16>, vector<128x128xbf16>, vector<256x128xf32> -> vector<256x128xf32>
    %44 = arith.addf %38, %43 : vector<256x128xf32>
    %c20 = arith.constant 20 : index
    %c0_37 = arith.constant 0 : index
    %45 = vector.load %arg13[%c20, %c0_37] : memref<280x128xf32, #tpu.memory_space<vmem>>, vector<256x128xf32>
    %46 = arith.truncf %45 : vector<256x128xf32> to vector<256x128xbf16>
    %c6 = arith.constant 6 : index
    %c0_38 = arith.constant 0 : index
    %c0_39 = arith.constant 0 : index
    %47 = vector.load %arg3[%c6, %c0_38, %c0_39] : memref<9x128x128xbf16, #tpu.memory_space<vmem>>, vector<1x128x128xbf16>
    %48 = vector.shape_cast %47 : vector<1x128x128xbf16> to vector<128x128xbf16>
    %cst_40 = arith.constant dense<0.000000e+00> : vector<256x128xf32>
    %49 = tpu.matmul %46, %48, %cst_40 {dimension_numbers = #tpu.dot_dimension_numbers<[1], [0], [0], [1], [0, 0, 1, 1], [], []>} : vector<256x128xbf16>, vector<128x128xbf16>, vector<256x128xf32> -> vector<256x128xf32>
    %50 = arith.addf %44, %49 : vector<256x128xf32>
    %c21 = arith.constant 21 : index
    %c0_41 = arith.constant 0 : index
    %51 = vector.load %arg13[%c21, %c0_41] : memref<280x128xf32, #tpu.memory_space<vmem>>, vector<256x128xf32>
    %52 = arith.truncf %51 : vector<256x128xf32> to vector<256x128xbf16>
    %c7 = arith.constant 7 : index
    %c0_42 = arith.constant 0 : index
    %c0_43 = arith.constant 0 : index
    %53 = vector.load %arg3[%c7, %c0_42, %c0_43] : memref<9x128x128xbf16, #tpu.memory_space<vmem>>, vector<1x128x128xbf16>
    %54 = vector.shape_cast %53 : vector<1x128x128xbf16> to vector<128x128xbf16>
    %cst_44 = arith.constant dense<0.000000e+00> : vector<256x128xf32>
    %55 = tpu.matmul %52, %54, %cst_44 {dimension_numbers = #tpu.dot_dimension_numbers<[1], [0], [0], [1], [0, 0, 1, 1], [], []>} : vector<256x128xbf16>, vector<128x128xbf16>, vector<256x128xf32> -> vector<256x128xf32>
    %56 = arith.addf %50, %55 : vector<256x128xf32>
    %c22 = arith.constant 22 : index
    %c0_45 = arith.constant 0 : index
    %57 = vector.load %arg13[%c22, %c0_45] : memref<280x128xf32, #tpu.memory_space<vmem>>, vector<256x128xf32>
    %58 = arith.truncf %57 : vector<256x128xf32> to vector<256x128xbf16>
    %c8 = arith.constant 8 : index
    %c0_46 = arith.constant 0 : index
    %c0_47 = arith.constant 0 : index
    %59 = vector.load %arg3[%c8, %c0_46, %c0_47] : memref<9x128x128xbf16, #tpu.memory_space<vmem>>, vector<1x128x128xbf16>
    %60 = vector.shape_cast %59 : vector<1x128x128xbf16> to vector<128x128xbf16>
    %cst_48 = arith.constant dense<0.000000e+00> : vector<256x128xf32>
    %61 = tpu.matmul %58, %60, %cst_48 {dimension_numbers = #tpu.dot_dimension_numbers<[1], [0], [0], [1], [0, 0, 1, 1], [], []>} : vector<256x128xbf16>, vector<128x128xbf16>, vector<256x128xf32> -> vector<256x128xf32>
    %62 = arith.addf %56, %61 : vector<256x128xf32>
    %c0_49 = arith.constant 0 : index
    %c0_50 = arith.constant 0 : index
    %63 = vector.load %arg4[%c0_49, %c0_50] : memref<1x128xf32, #tpu.memory_space<vmem>>, vector<1x128xf32>
    %64 = vector.broadcast %63 : vector<1x128xf32> to vector<256x128xf32>
    %65 = arith.addf %62, %64 : vector<256x128xf32>
    %cst_51 = arith.constant 0.000000e+00 : f32
    %66 = vector.broadcast %cst_51 : f32 to vector<256x128xf32>
    %67 = arith.maximumf %65, %66 : vector<256x128xf32>
    %68 = arith.truncf %67 : vector<256x128xf32> to vector<256x128xbf16>
    %c0_52 = arith.constant 0 : index
    %c0_53 = arith.constant 0 : index
    %69 = vector.load %arg5[%c0_52, %c0_53] : memref<128x3xbf16, #tpu.memory_space<vmem>>, vector<128x3xbf16>
    %cst_54 = arith.constant dense<0.000000e+00> : vector<256x3xf32>
    %70 = tpu.matmul %68, %69, %cst_54 {dimension_numbers = #tpu.dot_dimension_numbers<[1], [0], [0], [1], [0, 0, 1, 1], [], []>} : vector<256x128xbf16>, vector<128x3xbf16>, vector<256x3xf32> -> vector<256x3xf32>
    %c0_55 = arith.constant 0 : index
    %c0_56 = arith.constant 0 : index
    %71 = vector.load %arg6[%c0_55, %c0_56] : memref<1x3xf32, #tpu.memory_space<vmem>>, vector<1x3xf32>
    %72 = vector.broadcast %71 : vector<1x3xf32> to vector<256x3xf32>
    %73 = arith.addf %70, %72 : vector<256x3xf32>
    %cst_57 = arith.constant 0.000000e+00 : f32
    %74 = vector.broadcast %cst_57 : f32 to vector<256x3xf32>
    %75 = arith.maximumf %73, %74 : vector<256x3xf32>
    %76 = vector.extract_strided_slice %75 {offsets = [0, 0], sizes = [104, 3], strides = [1, 1]} : vector<256x3xf32> to vector<104x3xf32>
    %c0_58 = arith.constant 0 : index
    %c0_59 = arith.constant 0 : index
    %77 = vector.load %arg8[%c0_58, %c0_59] : memref<1x8xf32, #tpu.memory_space<vmem>>, vector<1x8xf32>
    %78 = vector.extract_strided_slice %76 {offsets = [0, 0], sizes = [104, 1], strides = [1, 1]} : vector<104x3xf32> to vector<104x1xf32>
    %c0_60 = arith.constant 0 : index
    %c0_61 = arith.constant 0 : index
    %c0_62 = arith.constant 0 : index
    %79 = vector.load %arg7[%c0_60, %c0_61, %c0_62] : memref<2x104x8xf32, #tpu.memory_space<vmem>>, vector<1x104x8xf32>
    %80 = vector.shape_cast %79 : vector<1x104x8xf32> to vector<104x8xf32>
    %81 = vector.broadcast %78 : vector<104x1xf32> to vector<104x8xf32>
    %82 = arith.mulf %81, %80 : vector<104x8xf32>
    %cst_63 = arith.constant dense<0.000000e+00> : vector<8xf32>
    %83 = vector.multi_reduction <add>, %82, %cst_63 [0] : vector<104x8xf32> to vector<8xf32>
    %84 = vector.shape_cast %83 : vector<8xf32> to vector<1x8xf32>
    %85 = arith.addf %77, %84 : vector<1x8xf32>
    %86 = vector.extract_strided_slice %76 {offsets = [0, 1], sizes = [104, 1], strides = [1, 1]} : vector<104x3xf32> to vector<104x1xf32>
    %c1_64 = arith.constant 1 : index
    %c0_65 = arith.constant 0 : index
    %c0_66 = arith.constant 0 : index
    %87 = vector.load %arg7[%c1_64, %c0_65, %c0_66] : memref<2x104x8xf32, #tpu.memory_space<vmem>>, vector<1x104x8xf32>
    %88 = vector.shape_cast %87 : vector<1x104x8xf32> to vector<104x8xf32>
    %89 = vector.broadcast %86 : vector<104x1xf32> to vector<104x8xf32>
    %90 = arith.mulf %89, %88 : vector<104x8xf32>
    %cst_67 = arith.constant dense<0.000000e+00> : vector<8xf32>
    %91 = vector.multi_reduction <add>, %90, %cst_67 [0] : vector<104x8xf32> to vector<8xf32>
    %92 = vector.shape_cast %91 : vector<8xf32> to vector<1x8xf32>
    %93 = arith.addf %85, %92 : vector<1x8xf32>
    %94 = vector.extract_strided_slice %76 {offsets = [0, 2], sizes = [104, 1], strides = [1, 1]} : vector<104x3xf32> to vector<104x1xf32>
    %c0_68 = arith.constant 0 : index
    %c0_69 = arith.constant 0 : index
    %95 = vector.load %arg9[%c0_68, %c0_69] : memref<104x1xf32, #tpu.memory_space<vmem>>, vector<104x1xf32>
    %96 = arith.mulf %94, %95 : vector<104x1xf32>
    %cst_70 = arith.constant dense<0.000000e+00> : vector<1xf32>
    %97 = vector.multi_reduction <add>, %96, %cst_70 [0] : vector<104x1xf32> to vector<1xf32>
    %98 = vector.shape_cast %97 : vector<1xf32> to vector<1x1xf32>
    %99 = vector.extract_strided_slice %75 {offsets = [128, 0], sizes = [104, 3], strides = [1, 1]} : vector<256x3xf32> to vector<104x3xf32>
    %c0_71 = arith.constant 0 : index
    %c0_72 = arith.constant 0 : index
    %100 = vector.load %arg8[%c0_71, %c0_72] : memref<1x8xf32, #tpu.memory_space<vmem>>, vector<1x8xf32>
    %101 = vector.extract_strided_slice %99 {offsets = [0, 0], sizes = [104, 1], strides = [1, 1]} : vector<104x3xf32> to vector<104x1xf32>
    %c0_73 = arith.constant 0 : index
    %c0_74 = arith.constant 0 : index
    %c0_75 = arith.constant 0 : index
    %102 = vector.load %arg7[%c0_73, %c0_74, %c0_75] : memref<2x104x8xf32, #tpu.memory_space<vmem>>, vector<1x104x8xf32>
    %103 = vector.shape_cast %102 : vector<1x104x8xf32> to vector<104x8xf32>
    %104 = vector.broadcast %101 : vector<104x1xf32> to vector<104x8xf32>
    %105 = arith.mulf %104, %103 : vector<104x8xf32>
    %cst_76 = arith.constant dense<0.000000e+00> : vector<8xf32>
    %106 = vector.multi_reduction <add>, %105, %cst_76 [0] : vector<104x8xf32> to vector<8xf32>
    %107 = vector.shape_cast %106 : vector<8xf32> to vector<1x8xf32>
    %108 = arith.addf %100, %107 : vector<1x8xf32>
    %109 = vector.extract_strided_slice %99 {offsets = [0, 1], sizes = [104, 1], strides = [1, 1]} : vector<104x3xf32> to vector<104x1xf32>
    %c1_77 = arith.constant 1 : index
    %c0_78 = arith.constant 0 : index
    %c0_79 = arith.constant 0 : index
    %110 = vector.load %arg7[%c1_77, %c0_78, %c0_79] : memref<2x104x8xf32, #tpu.memory_space<vmem>>, vector<1x104x8xf32>
    %111 = vector.shape_cast %110 : vector<1x104x8xf32> to vector<104x8xf32>
    %112 = vector.broadcast %109 : vector<104x1xf32> to vector<104x8xf32>
    %113 = arith.mulf %112, %111 : vector<104x8xf32>
    %cst_80 = arith.constant dense<0.000000e+00> : vector<8xf32>
    %114 = vector.multi_reduction <add>, %113, %cst_80 [0] : vector<104x8xf32> to vector<8xf32>
    %115 = vector.shape_cast %114 : vector<8xf32> to vector<1x8xf32>
    %116 = arith.addf %108, %115 : vector<1x8xf32>
    %117 = vector.extract_strided_slice %99 {offsets = [0, 2], sizes = [104, 1], strides = [1, 1]} : vector<104x3xf32> to vector<104x1xf32>
    %c0_81 = arith.constant 0 : index
    %c0_82 = arith.constant 0 : index
    %118 = vector.load %arg9[%c0_81, %c0_82] : memref<104x1xf32, #tpu.memory_space<vmem>>, vector<104x1xf32>
    %119 = arith.mulf %117, %118 : vector<104x1xf32>
    %cst_83 = arith.constant dense<0.000000e+00> : vector<1xf32>
    %120 = vector.multi_reduction <add>, %119, %cst_83 [0] : vector<104x1xf32> to vector<1xf32>
    %121 = vector.shape_cast %120 : vector<1xf32> to vector<1x1xf32>
    %122 = tpu.concatenate %93, %116 in 0 : vector<1x8xf32>, vector<1x8xf32> -> vector<2x8xf32>
    %cst_84 = arith.constant dense<0xFF800000> : vector<2xf32>
    %123 = vector.multi_reduction <maximumf>, %122, %cst_84 [1] : vector<2x8xf32> to vector<2xf32>
    %124 = vector.shape_cast %123 : vector<2xf32> to vector<2x1xf32>
    %125 = vector.broadcast %124 : vector<2x1xf32> to vector<2x8xf32>
    %126 = arith.subf %122, %125 : vector<2x8xf32>
    %127 = math.exp %126 : vector<2x8xf32>
    %cst_85 = arith.constant dense<0.000000e+00> : vector<2xf32>
    %128 = vector.multi_reduction <add>, %127, %cst_85 [1] : vector<2x8xf32> to vector<2xf32>
    %129 = vector.shape_cast %128 : vector<2xf32> to vector<2x1xf32>
    %130 = vector.broadcast %129 : vector<2x1xf32> to vector<2x8xf32>
    %131 = arith.divf %127, %130 : vector<2x8xf32>
    %c0_86 = arith.constant 0 : index
    %c0_87 = arith.constant 0 : index
    %132 = vector.load %arg11[%c0_86, %c0_87] : memref<2x8xf32, #tpu.memory_space<vmem>>, vector<2x8xf32>
    tpu.vector_store %arg11[%c0_86, %c0_87], %131 {strides = array<i32>} : memref<2x8xf32, #tpu.memory_space<vmem>>, vector<2x8xf32>,
    %133 = tpu.concatenate %98, %121 in 0 : vector<1x1xf32>, vector<1x1xf32> -> vector<2x1xf32>
    %c0_88 = arith.constant 0 : index
    %c0_89 = arith.constant 0 : index
    %134 = vector.load %arg10[%c0_88, %c0_89] : memref<1x1xf32, #tpu.memory_space<vmem>>, vector<1x1xf32>
    %135 = vector.broadcast %134 : vector<1x1xf32> to vector<2x1xf32>
    %136 = arith.addf %133, %135 : vector<2x1xf32>
    %137 = math.tanh %136 : vector<2x1xf32>
    %c0_90 = arith.constant 0 : index
    %c0_91 = arith.constant 0 : index
    %138 = vector.load %arg12[%c0_90, %c0_91] : memref<2x1xf32, #tpu.memory_space<vmem>>, vector<2x1xf32>
    tpu.vector_store %arg12[%c0_90, %c0_91], %137 {strides = array<i32>} : memref<2x1xf32, #tpu.memory_space<vmem>>, vector<2x1xf32>,
    return
  }
  func.func @transform_0(%arg0: i32) -> (i32, i32) {
    %c0_i32 = arith.constant 0 : i32
    %c0_i32_0 = arith.constant 0 : i32
    return %arg0, %c0_i32 : i32, i32
  }
  func.func @transform_1(%arg0: i32) -> (i32, i32) {
    %c0_i32 = arith.constant 0 : i32
    %c0_i32_0 = arith.constant 0 : i32
    %c0_i32_1 = arith.constant 0 : i32
    return %c0_i32, %c0_i32_0 : i32, i32
  }
  func.func @transform_2(%arg0: i32) -> (i32, i32, i32) {
    %c0_i32 = arith.constant 0 : i32
    %c0_i32_0 = arith.constant 0 : i32
    %c0_i32_1 = arith.constant 0 : i32
    %c0_i32_2 = arith.constant 0 : i32
    return %c0_i32, %c0_i32_0, %c0_i32_1 : i32, i32, i32
  }
  func.func @transform_3(%arg0: i32) -> (i32, i32) {
    %c0_i32 = arith.constant 0 : i32
    %c0_i32_0 = arith.constant 0 : i32
    %c0_i32_1 = arith.constant 0 : i32
    return %c0_i32, %c0_i32_0 : i32, i32
  }
  func.func @transform_4(%arg0: i32) -> (i32, i32) {
    %c0_i32 = arith.constant 0 : i32
    %c0_i32_0 = arith.constant 0 : i32
    %c0_i32_1 = arith.constant 0 : i32
    return %c0_i32, %c0_i32_0 : i32, i32
  }
  func.func @transform_5(%arg0: i32) -> (i32, i32) {
    %c0_i32 = arith.constant 0 : i32
    %c0_i32_0 = arith.constant 0 : i32
    %c0_i32_1 = arith.constant 0 : i32
    return %c0_i32, %c0_i32_0 : i32, i32
  }
  func.func @transform_6(%arg0: i32) -> (i32, i32, i32) {
    %c0_i32 = arith.constant 0 : i32
    %c0_i32_0 = arith.constant 0 : i32
    %c0_i32_1 = arith.constant 0 : i32
    %c0_i32_2 = arith.constant 0 : i32
    return %c0_i32, %c0_i32_0, %c0_i32_1 : i32, i32, i32
  }
  func.func @transform_7(%arg0: i32) -> (i32, i32) {
    %c0_i32 = arith.constant 0 : i32
    %c0_i32_0 = arith.constant 0 : i32
    %c0_i32_1 = arith.constant 0 : i32
    return %c0_i32, %c0_i32_0 : i32, i32
  }
  func.func @transform_8(%arg0: i32) -> (i32, i32) {
    %c0_i32 = arith.constant 0 : i32
    %c0_i32_0 = arith.constant 0 : i32
    %c0_i32_1 = arith.constant 0 : i32
    return %c0_i32, %c0_i32_0 : i32, i32
  }
  func.func @transform_9(%arg0: i32) -> (i32, i32) {
    %c0_i32 = arith.constant 0 : i32
    %c0_i32_0 = arith.constant 0 : i32
    %c0_i32_1 = arith.constant 0 : i32
    return %c0_i32, %c0_i32_0 : i32, i32
  }
  func.func @transform_10(%arg0: i32) -> (i32, i32) {
    %c0_i32 = arith.constant 0 : i32
    %c0_i32_0 = arith.constant 0 : i32
    return %arg0, %c0_i32 : i32, i32
  }
  func.func @transform_11(%arg0: i32) -> (i32, i32) {
    %c0_i32 = arith.constant 0 : i32
    %c0_i32_0 = arith.constant 0 : i32
    return %arg0, %c0_i32 : i32, i32
  }
}

</mosaic_0001>

<llo_original>
// kernel: alphazero_forward.1
$region0: #{alphazero_forward.1}
  #allocation0 [shape = 'u32[]', space=smem, size = 0x4, offset = 0x4, fixed_abs, tag = 'smem constant byte address 0x4 - core index']
  #allocation1 [shape = 'u32[144,128]{1,0:T(1,128)}', space=vmem, size = 0x12000, scoped, tag = 'internal scratch']
  #allocation2 [shape = 'f32[280,128]{1,0:T(8,128)}', space=vmem, size = 0x23000, scoped, tag = 'scratch operand']
  #allocation3 [shape = 'f32[1,1]{1,0:T(1,128)S(1)}', space=vmem, size = 0x200, scoped, tag = 'scoped memory for alphazero_forward.1']
  %s0 = inlined_call_operand.vmem [shape: bf16[256,10], index: 0, kind: input, shape index: {}]
  %s1 = inlined_call_operand.vmem [shape: bf16[10,128], index: 1, kind: input, shape index: {}]
  %s2 = inlined_call_operand.vmem [shape: bf16[9,128,128], index: 2, kind: input, shape index: {}]
  %s3 = inlined_call_operand.vmem [shape: f32[1,128], index: 3, kind: input, shape index: {}]
  %s4 = inlined_call_operand.vmem [shape: bf16[128,3], index: 4, kind: input, shape index: {}]
  %s5 = inlined_call_operand.vmem [shape: f32[1,3], index: 5, kind: input, shape index: {}]
  %s6 = inlined_call_operand.vmem [shape: f32[2,104,8], index: 6, kind: input, shape index: {}]
  %s7 = inlined_call_operand.vmem [shape: f32[1,8], index: 7, kind: input, shape index: {}]
  %s8 = inlined_call_operand.vmem [shape: f32[104,1], index: 8, kind: input, shape index: {}]
  %s9 = inlined_call_operand.<no memory space> [shape: f32[1,1], index: 9, kind: input, shape index: {}]
  %s10 = inlined_call_operand.hbm [shape: f32[2,8], index: 10, kind: output, shape index: {0}]
  %s11 = inlined_call_operand.vmem [shape: f32[2,1], index: 11, kind: output, shape index: {1}]
  %12 = xla_tuple %s10, %s11
  %s13 = sld [smem:[#allocation0]]
  $region58: #{alphazero_forward.1} parent=0
    _
  %s15 = ssub.s32 1, %s13
  %s16 = scalar_select 0, %s15, %s13
  %v17 = vstv %s9
  %18 = vst [vmem:[#allocation3] sm:$0x1] %v17
  $region1: #{alphazero_forward.1} parent=0
    #allocation4 [shape = 'u8[1024]{0}', space=vmem, size = 0x400, scoped, tag = 'output window, operand 0, single buffered']
    #allocation5 [shape = 's32[1]{0}', space=sflag, size = 0x4, scoped, tag = 'scoped memory for alphazero_forward.1']
    %19 = vsyncpa [#allocation5], 0
    // Predicated region
    $region2: #{alphazero_forward.1} parent=1 // pred_check
      _
    $region3: #{alphazero_forward.1} parent=1 // pred_check_branch
      %21 = sbr.rel (0) target = $region5
    $region4: #{alphazero_forward.1} parent=1 // pred_region
      _
    $region5: #{alphazero_forward.1} parent=1 // pred_fallthru
      _
    // Predicated region
    $region6: #{alphazero_forward.1} parent=1 // pred_check
      _
    $region7: #{alphazero_forward.1} parent=1 // pred_check_branch
      %23 = sbr.rel (0) target = $region9
    $region8: #{alphazero_forward.1} parent=1 // pred_region
      _
    $region9: #{alphazero_forward.1} parent=1 // pred_fallthru
      _
    // Predicated region
    $region10: #{alphazero_forward.1} parent=1 // pred_check
      _
    $region11: #{alphazero_forward.1} parent=1 // pred_check_branch
      %25 = sbr.rel (0) target = $region13
    $region12: #{alphazero_forward.1} parent=1 // pred_region
      _
    $region13: #{alphazero_forward.1} parent=1 // pred_fallthru
      _
    // Predicated region
    $region14: #{alphazero_forward.1} parent=1 // pred_check
      _
    $region15: #{alphazero_forward.1} parent=1 // pred_check_branch
      %27 = sbr.rel (0) target = $region17
    $region16: #{alphazero_forward.1} parent=1 // pred_region
      _
    $region17: #{alphazero_forward.1} parent=1 // pred_fallthru
      _
    // Predicated region
    $region18: #{alphazero_forward.1} parent=1 // pred_check
      _
    $region19: #{alphazero_forward.1} parent=1 // pred_check_branch
      %29 = sbr.rel (0) target = $region21
    $region20: #{alphazero_forward.1} parent=1 // pred_region
      _
    $region21: #{alphazero_forward.1} parent=1 // pred_fallthru
      _
    // Predicated region
    $region22: #{alphazero_forward.1} parent=1 // pred_check
      _
    $region23: #{alphazero_forward.1} parent=1 // pred_check_branch
      %31 = sbr.rel (0) target = $region25
    $region24: #{alphazero_forward.1} parent=1 // pred_region
      _
    $region25: #{alphazero_forward.1} parent=1 // pred_fallthru
      _
    // Predicated region
    $region26: #{alphazero_forward.1} parent=1 // pred_check
      _
    $region27: #{alphazero_forward.1} parent=1 // pred_check_branch
      %33 = sbr.rel (0) target = $region29
    $region28: #{alphazero_forward.1} parent=1 // pred_region
      _
    $region29: #{alphazero_forward.1} parent=1 // pred_fallthru
      _
    // Predicated region
    $region30: #{alphazero_forward.1} parent=1 // pred_check
      _
    $region31: #{alphazero_forward.1} parent=1 // pred_check_branch
      %35 = sbr.rel (0) target = $region33
    $region32: #{alphazero_forward.1} parent=1 // pred_region
      _
    $region33: #{alphazero_forward.1} parent=1 // pred_fallthru
      _
    // Predicated region
    $region34: #{alphazero_forward.1} parent=1 // pred_check
      _
    $region35: #{alphazero_forward.1} parent=1 // pred_check_branch
      %37 = sbr.rel (0) target = $region37
    $region36: #{alphazero_forward.1} parent=1 // pred_region
      _
    $region37: #{alphazero_forward.1} parent=1 // pred_fallthru
      _
    // Predicated region
    $region38: #{alphazero_forward.1} parent=1 // pred_check
      _
    $region39: #{alphazero_forward.1} parent=1 // pred_check_branch
      %39 = sbr.rel (0) target = $region41
    $region40: #{alphazero_forward.1} parent=1 // pred_region
      _
    $region41: #{alphazero_forward.1} parent=1 // pred_fallthru
      _
    %v41 = vld [vmem:[%s0] sm:$0xf]
    %v42 = vld [vmem:[%s0 + $0x4] sm:$0xf]
    %v43 = vld [vmem:[%s0 + $0x8] sm:$0xf]
    %v44 = vld [vmem:[%s0 + $0xc] sm:$0xf]
    %v45 = vld [vmem:[%s0 + $0x10] sm:$0xf]
    %v46 = vld [vmem:[%s0 + $0x14] sm:$0xf]
    %v47 = vld [vmem:[%s0 + $0x18] sm:$0xf]
    %v48 = vld [vmem:[%s0 + $0x1c] sm:$0xf]
    %v49 = vld [vmem:[%s0 + $0x20] sm:$0xf]
    %v50 = vld [vmem:[%s0 + $0x24] sm:$0xf]
    %v51 = vld [vmem:[%s0 + $0x28] sm:$0xf]
    %v52 = vld [vmem:[%s0 + $0x2c] sm:$0xf]
    %v53 = vld [vmem:[%s0 + $0x30] sm:$0xf]
    %v54 = vld [vmem:[%s0 + $0x34] sm:$0xf]
    %v55 = vld [vmem:[%s0 + $0x38] sm:$0xf]
    %v56 = vld [vmem:[%s0 + $0x3c] sm:$0xf]
    %v57 = vld [vmem:[%s0 + $0x40] sm:$0xf]
    %v58 = vld [vmem:[%s0 + $0x44] sm:$0xf]
    %v59 = vld [vmem:[%s0 + $0x48] sm:$0xf]
    %v60 = vld [vmem:[%s0 + $0x4c] sm:$0xf]
    %v61 = vld [vmem:[%s0 + $0x50] sm:$0xf]
    %v62 = vld [vmem:[%s0 + $0x54] sm:$0xf]
    %v63 = vld [vmem:[%s0 + $0x58] sm:$0xf]
    %v64 = vld [vmem:[%s0 + $0x5c] sm:$0xf]
    %v65 = vld [vmem:[%s0 + $0x60] sm:$0xf]
    %v66 = vld [vmem:[%s0 + $0x64] sm:$0xf]
    %v67 = vld [vmem:[%s0 + $0x68] sm:$0xf]
    %v68 = vld [vmem:[%s0 + $0x6c] sm:$0xf]
    %v69 = vld [vmem:[%s0 + $0x70] sm:$0xf]
    %v70 = vld [vmem:[%s0 + $0x74] sm:$0xf]
    %v71 = vld [vmem:[%s0 + $0x78] sm:$0xf]
    %v72 = vld [vmem:[%s0 + $0x7c] sm:$0xf]
    %v73 = vld [vmem:[%s1] sm:$0xf]
    %v74 = vld [vmem:[%s1 + $0x4] sm:$0x1]
    %v107 = vunpack.c.l.b16 %v41
    %v108 = vunpack.c.l.b16 %v42
    %v109 = vunpack.c.l.b16 %v43
    %v110 = vunpack.c.l.b16 %v44
    %v111 = vunpack.c.l.b16 %v45
    %v112 = vunpack.c.l.b16 %v46
    %v113 = vunpack.c.l.b16 %v47
    %v114 = vunpack.c.l.b16 %v48
    %v115 = vunpack.c.l.b16 %v49
    %v116 = vunpack.c.l.b16 %v50
    %v117 = vunpack.c.l.b16 %v51
    %v118 = vunpack.c.l.b16 %v52
    %v119 = vunpack.c.l.b16 %v53
    %v120 = vunpack.c.l.b16 %v54
    %v121 = vunpack.c.l.b16 %v55
    %v122 = vunpack.c.l.b16 %v56
    %v123 = vunpack.c.l.b16 %v57
    %v124 = vunpack.c.l.b16 %v58
    %v125 = vunpack.c.l.b16 %v59
    %v126 = vunpack.c.l.b16 %v60
    %v127 = vunpack.c.l.b16 %v61
    %v128 = vunpack.c.l.b16 %v62
    %v129 = vunpack.c.l.b16 %v63
    %v130 = vunpack.c.l.b16 %v64
    %v131 = vunpack.c.l.b16 %v65
    %v132 = vunpack.c.l.b16 %v66
    %v133 = vunpack.c.l.b16 %v67
    %v134 = vunpack.c.l.b16 %v68
    %v135 = vunpack.c.l.b16 %v69
    %v136 = vunpack.c.l.b16 %v70
    %v137 = vunpack.c.l.b16 %v71
    %v138 = vunpack.c.l.b16 %v72
    %v139 = vpack.c.b16 %v108, %v107
    %v140 = vpack.c.b16 %v110, %v109
    %v141 = vpack.c.b16 %v112, %v111
    %v142 = vpack.c.b16 %v114, %v113
    %v143 = vpack.c.b16 %v116, %v115
    %v144 = vpack.c.b16 %v118, %v117
    %v145 = vpack.c.b16 %v120, %v119
    %v146 = vpack.c.b16 %v122, %v121
    %v147 = vpack.c.b16 %v124, %v123
    %v148 = vpack.c.b16 %v126, %v125
    %v149 = vpack.c.b16 %v128, %v127
    %v150 = vpack.c.b16 %v130, %v129
    %v151 = vpack.c.b16 %v132, %v131
    %v152 = vpack.c.b16 %v134, %v133
    %v153 = vpack.c.b16 %v136, %v135
    %v154 = vpack.c.b16 %v138, %v137
    %v157 = vunpack.c.l.b16 %v73
    %v158 = vunpack.c.l.b16 %v74
    %v159 = vpack.c.b16 %v158, %v157
    %vm160 = vcmask 80896
    %v162 = vsel %vm160, %v139, 0
    %v165 = vsel %vm160, %v140, 0
    %v168 = vsel %vm160, %v141, 0
    %v171 = vsel %vm160, %v142, 0
    %v174 = vsel %vm160, %v143, 0
    %v177 = vsel %vm160, %v144, 0
    %v180 = vsel %vm160, %v145, 0
    %v183 = vsel %vm160, %v146, 0
    %v186 = vsel %vm160, %v147, 0
    %v189 = vsel %vm160, %v148, 0
    %v192 = vsel %vm160, %v149, 0
    %v195 = vsel %vm160, %v150, 0
    %v198 = vsel %vm160, %v151, 0
    %v201 = vsel %vm160, %v152, 0
    %v204 = vsel %vm160, %v153, 0
    %v207 = vsel %vm160, %v154, 0
    %vm209 = vcmask 1044480
    %v211 = vsel %vm209, %v159, 0
    %213 = vmatprep.subr.bf16.mxu0 0
    %214 = vmatpush1.bf16.msra.mxu0 %v211
    %215 = vmatprep.subr.bf16.mxu0 0
    %216 = vmatpush1.bf16.msra.mxu0 0
    %217 = vmatprep.subr.bf16.mxu0 0
    %218 = vmatpush1.bf16.msra.mxu0 0
    %219 = vmatprep.subr.bf16.mxu0 0
    %220 = vmatpush1.bf16.msra.mxu0 0
    %221 = vmatprep.subr.bf16.mxu0 0
    %222 = vmatpush1.bf16.msra.mxu0 0
    %223 = vmatprep.subr.bf16.mxu0 0
    %224 = vmatpush1.bf16.msra.mxu0 0
    %225 = vmatprep.subr.bf16.mxu0 0
    %226 = vmatpush1.bf16.msra.mxu0 0
    %227 = vmatprep.subr.bf16.mxu0 0
    %228 = vmatpush1.bf16.msra.mxu0 0
    %229 = vmatprep.subr.bf16.mxu0 0
    %230 = vmatpush1.bf16.msra.mxu0 0
    %231 = vmatprep.subr.bf16.mxu0 0
    %232 = vmatpush1.bf16.msra.mxu0 0
    %233 = vmatprep.subr.bf16.mxu0 0
    %234 = vmatpush1.bf16.msra.mxu0 0
    %235 = vmatprep.subr.bf16.mxu0 0
    %236 = vmatpush1.bf16.msra.mxu0 0
    %237 = vmatprep.subr.bf16.mxu0 0
    %238 = vmatpush1.bf16.msra.mxu0 0
    %239 = vmatprep.subr.bf16.mxu0 0
    %240 = vmatpush1.bf16.msra.mxu0 0
    %241 = vmatprep.subr.bf16.mxu0 0
    %242 = vmatpush1.bf16.msra.mxu0 0
    %243 = vmatprep.subr.bf16.mxu0 0
    %244 = vmatpush1.bf16.msra.mxu0 0
    %245 = vmatprep.mubr.bf16.mxu0 0
    %246 = vmatmul.mubr.bf16.gmra.mrb[0].mxu0 %v162
    %v247 = vpop.f32.mrb[0].mxu0
    %v248 = vadd.f32 0.0, %v247
    %v249 = vpop.f32.mrb[0].mxu0
    %v250 = vpop.f32.mrb[0].mxu0
    %v251 = vadd.f32 0.0, %v250
    %v252 = vpop.f32.mrb[0].mxu0
    %253 = vmatprep.mubr.bf16.mxu0 0
    %254 = vmatmul.mubr.bf16.gmra.mrb[0].mxu0 %v165
    %v255 = vpop.f32.mrb[0].mxu0
    %v256 = vadd.f32 0.0, %v255
    %v257 = vpop.f32.mrb[0].mxu0
    %v258 = vpop.f32.mrb[0].mxu0
    %v259 = vadd.f32 0.0, %v258
    %v260 = vpop.f32.mrb[0].mxu0
    %261 = vmatprep.mubr.bf16.mxu0 0
    %262 = vmatmul.mubr.bf16.gmra.mrb[0].mxu0 %v168
    %v263 = vpop.f32.mrb[0].mxu0
    %v264 = vadd.f32 0.0, %v263
    %v265 = vpop.f32.mrb[0].mxu0
    %v266 = vpop.f32.mrb[0].mxu0
    %v267 = vadd.f32 0.0, %v266
    %v268 = vpop.f32.mrb[0].mxu0
    %269 = vmatprep.mubr.bf16.mxu0 0
    %270 = vmatmul.mubr.bf16.gmra.mrb[0].mxu0 %v171
    %v271 = vpop.f32.mrb[0].mxu0
    %v272 = vadd.f32 0.0, %v271
    %v273 = vpop.f32.mrb[0].mxu0
    %v274 = vpop.f32.mrb[0].mxu0
    %v275 = vadd.f32 0.0, %v274
    %v276 = vpop.f32.mrb[0].mxu0
    %277 = vmatprep.mubr.bf16.mxu0 0
    %278 = vmatmul.mubr.bf16.gmra.mrb[0].mxu0 %v174
    %v279 = vpop.f32.mrb[0].mxu0
    %v280 = vadd.f32 0.0, %v279
    %v281 = vpop.f32.mrb[0].mxu0
    %v282 = vpop.f32.mrb[0].mxu0
    %v283 = vadd.f32 0.0, %v282
    %v284 = vpop.f32.mrb[0].mxu0
    %285 = vmatprep.mubr.bf16.mxu0 0
    %286 = vmatmul.mubr.bf16.gmra.mrb[0].mxu0 %v177
    %v287 = vpop.f32.mrb[0].mxu0
    %v288 = vadd.f32 0.0, %v287
    %v289 = vpop.f32.mrb[0].mxu0
    %v290 = vpop.f32.mrb[0].mxu0
    %v291 = vadd.f32 0.0, %v290
    %v292 = vpop.f32.mrb[0].mxu0
    %293 = vmatprep.mubr.bf16.mxu0 0
    %294 = vmatmul.mubr.bf16.gmra.mrb[0].mxu0 %v180
    %v295 = vpop.f32.mrb[0].mxu0
    %v296 = vadd.f32 0.0, %v295
    %v297 = vpop.f32.mrb[0].mxu0
    %v298 = vpop.f32.mrb[0].mxu0
    %v299 = vadd.f32 0.0, %v298
    %v300 = vpop.f32.mrb[0].mxu0
    %301 = vmatprep.mubr.bf16.mxu0 0
    %302 = vmatmul.mubr.bf16.gmra.mrb[0].mxu0 %v183
    %v303 = vpop.f32.mrb[0].mxu0
    %v304 = vadd.f32 0.0, %v303
    %v305 = vpop.f32.mrb[0].mxu0
    %v306 = vpop.f32.mrb[0].mxu0
    %v307 = vadd.f32 0.0, %v306
    %v308 = vpop.f32.mrb[0].mxu0
    %309 = vmatprep.mubr.bf16.mxu0 0
    %310 = vmatmul.mubr.bf16.gmra.mrb[0].mxu0 %v186
    %v311 = vpop.f32.mrb[0].mxu0
    %v312 = vadd.f32 0.0, %v311
    %v313 = vpop.f32.mrb[0].mxu0
    %v314 = vpop.f32.mrb[0].mxu0
    %v315 = vadd.f32 0.0, %v314
    %v316 = vpop.f32.mrb[0].mxu0
    %317 = vmatprep.mubr.bf16.mxu0 0
    %318 = vmatmul.mubr.bf16.gmra.mrb[0].mxu0 %v189
    %v319 = vpop.f32.mrb[0].mxu0
    %v320 = vadd.f32 0.0, %v319
    %v321 = vpop.f32.mrb[0].mxu0
    %v322 = vpop.f32.mrb[0].mxu0
    %v323 = vadd.f32 0.0, %v322
    %v324 = vpop.f32.mrb[0].mxu0
    %325 = vmatprep.mubr.bf16.mxu0 0
    %326 = vmatmul.mubr.bf16.gmra.mrb[0].mxu0 %v192
    %v327 = vpop.f32.mrb[0].mxu0
    %v328 = vadd.f32 0.0, %v327
    %v329 = vpop.f32.mrb[0].mxu0
    %v330 = vpop.f32.mrb[0].mxu0
    %v331 = vadd.f32 0.0, %v330
    %v332 = vpop.f32.mrb[0].mxu0
    %333 = vmatprep.mubr.bf16.mxu0 0
    %334 = vmatmul.mubr.bf16.gmra.mrb[0].mxu0 %v195
    %v335 = vpop.f32.mrb[0].mxu0
    %v336 = vadd.f32 0.0, %v335
    %v337 = vpop.f32.mrb[0].mxu0
    %v338 = vpop.f32.mrb[0].mxu0
    %v339 = vadd.f32 0.0, %v338
    %v340 = vpop.f32.mrb[0].mxu0
    %341 = vmatprep.mubr.bf16.mxu0 0
    %342 = vmatmul.mubr.bf16.gmra.mrb[0].mxu0 %v198
    %v343 = vpop.f32.mrb[0].mxu0
    %v344 = vadd.f32 0.0, %v343
    %v345 = vpop.f32.mrb[0].mxu0
    %v346 = vpop.f32.mrb[0].mxu0
    %v347 = vadd.f32 0.0, %v346
    %v348 = vpop.f32.mrb[0].mxu0
    %349 = vmatprep.mubr.bf16.mxu0 0
    %350 = vmatmul.mubr.bf16.gmra.mrb[0].mxu0 %v201
    %v351 = vpop.f32.mrb[0].mxu0
    %v352 = vadd.f32 0.0, %v351
    %v353 = vpop.f32.mrb[0].mxu0
    %v354 = vpop.f32.mrb[0].mxu0
    %v355 = vadd.f32 0.0, %v354
    %v356 = vpop.f32.mrb[0].mxu0
    %357 = vmatprep.mubr.bf16.mxu0 0
    %358 = vmatmul.mubr.bf16.gmra.mrb[0].mxu0 %v204
    %v359 = vpop.f32.mrb[0].mxu0
    %v360 = vadd.f32 0.0, %v359
    %v361 = vpop.f32.mrb[0].mxu0
    %v362 = vpop.f32.mrb[0].mxu0
    %v363 = vadd.f32 0.0, %v362
    %v364 = vpop.f32.mrb[0].mxu0
    %365 = vmatprep.mubr.bf16.mxu0 0
    %366 = vmatmul.mubr.bf16.gmra.mrb[0].mxu0 %v207
    %v367 = vpop.f32.mrb[0].mxu0
    %v368 = vadd.f32 0.0, %v367
    %v369 = vpop.f32.mrb[0].mxu0
    %v370 = vpop.f32.mrb[0].mxu0
    %v371 = vadd.f32 0.0, %v370
    %v372 = vpop.f32.mrb[0].mxu0
    %373 = vdwg.mxu0
    %v374 = vmax.f32 %v248, 0.0
    %v375 = vmax.f32 %v251, 0.0
    %v376 = vmax.f32 %v256, 0.0
    %v377 = vmax.f32 %v259, 0.0
    %v378 = vmax.f32 %v264, 0.0
    %v379 = vmax.f32 %v267, 0.0
    %v380 = vmax.f32 %v272, 0.0
    %v381 = vmax.f32 %v275, 0.0
    %v382 = vmax.f32 %v280, 0.0
    %v383 = vmax.f32 %v283, 0.0
    %v384 = vmax.f32 %v288, 0.0
    %v385 = vmax.f32 %v291, 0.0
    %v386 = vmax.f32 %v296, 0.0
    %v387 = vmax.f32 %v299, 0.0
    %v388 = vmax.f32 %v304, 0.0
    %v389 = vmax.f32 %v307, 0.0
    %v390 = vmax.f32 %v312, 0.0
    %v391 = vmax.f32 %v315, 0.0
    %v392 = vmax.f32 %v320, 0.0
    %v393 = vmax.f32 %v323, 0.0
    %v394 = vmax.f32 %v328, 0.0
    %v395 = vmax.f32 %v331, 0.0
    %v396 = vmax.f32 %v336, 0.0
    %v397 = vmax.f32 %v339, 0.0
    %v398 = vmax.f32 %v344, 0.0
    %v399 = vmax.f32 %v347, 0.0
    %v400 = vmax.f32 %v352, 0.0
    %v401 = vmax.f32 %v355, 0.0
    %v402 = vmax.f32 %v360, 0.0
    %v403 = vmax.f32 %v363, 0.0
    %v404 = vmax.f32 %v368, 0.0
    %v405 = vmax.f32 %v371, 0.0
    %406 = vst [vmem:[#allocation2] sm:$0xff] %v374
    %407 = vst [vmem:[#allocation2 + $0x8] sm:$0xff] %v375
    %408 = vst [vmem:[#allocation2 + $0x10] sm:$0xff] %v376
    %409 = vst [vmem:[#allocation2 + $0x18] sm:$0xff] %v377
    %410 = vst [vmem:[#allocation2 + $0x20] sm:$0xff] %v378
    %411 = vst [vmem:[#allocation2 + $0x28] sm:$0xff] %v379
    %412 = vst [vmem:[#allocation2 + $0x30] sm:$0xff] %v380
    %413 = vst [vmem:[#allocation2 + $0x38] sm:$0xff] %v381
    %414 = vst [vmem:[#allocation2 + $0x40] sm:$0xff] %v382
    %415 = vst [vmem:[#allocation2 + $0x48] sm:$0xff] %v383
    %416 = vst [vmem:[#allocation2 + $0x50] sm:$0xff] %v384
    %417 = vst [vmem:[#allocation2 + $0x58] sm:$0xff] %v385
    %418 = vst [vmem:[#allocation2 + $0x60] sm:$0xff] %v386
    %419 = vst [vmem:[#allocation2 + $0x68] sm:$0xff] %v387
    %420 = vst [vmem:[#allocation2 + $0x70] sm:$0xff] %v388
    %421 = vst [vmem:[#allocation2 + $0x78] sm:$0xff] %v389
    %422 = vst [vmem:[#allocation2 + $0x80] sm:$0xff] %v390
    %423 = vst [vmem:[#allocation2 + $0x88] sm:$0xff] %v391
    %424 = vst [vmem:[#allocation2 + $0x90] sm:$0xff] %v392
    %425 = vst [vmem:[#allocation2 + $0x98] sm:$0xff] %v393
    %426 = vst [vmem:[#allocation2 + $0xa0] sm:$0xff] %v394
    %427 = vst [vmem:[#allocation2 + $0xa8] sm:$0xff] %v395
    %428 = vst [vmem:[#allocation2 + $0xb0] sm:$0xff] %v396
    %429 = vst [vmem:[#allocation2 + $0xb8] sm:$0xff] %v397
    %430 = vst [vmem:[#allocation2 + $0xc0] sm:$0xff] %v398
    %431 = vst [vmem:[#allocation2 + $0xc8] sm:$0xff] %v399
    %432 = vst [vmem:[#allocation2 + $0xd0] sm:$0xff] %v400
    %433 = vst [vmem:[#allocation2 + $0xd8] sm:$0xff] %v401
    %434 = vst [vmem:[#allocation2 + $0xe0] sm:$0xff] %v402
    %435 = vst [vmem:[#allocation2 + $0xe8] sm:$0xff] %v403
    %436 = vst [vmem:[#allocation2 + $0xf0] sm:$0xff] %v404
    %437 = vst [vmem:[#allocation2 + $0xf8] sm:$0xff] %v405
    %438 = vst [vmem:[#allocation2 + $0x100] sm:$0xff] 0.0
    %439 = vst [vmem:[#allocation2 + $0x108] sm:$0xff] 0.0
    %440 = vst [vmem:[#allocation2 + $0x110] sm:$0xff] 0.0
    %v441 = vld [vmem:[#allocation2] sm:$0xff]
    %v442 = vld [vmem:[#allocation2 + $0x8] sm:$0xff]
    %v443 = vld [vmem:[#allocation2 + $0x10] sm:$0xff]
    %v444 = vld [vmem:[#allocation2 + $0x18] sm:$0xff]
    %v445 = vld [vmem:[#allocation2 + $0x20] sm:$0xff]
    %v446 = vld [vmem:[#allocation2 + $0x28] sm:$0xff]
    %v447 = vld [vmem:[#allocation2 + $0x30] sm:$0xff]
    %v448 = vld [vmem:[#allocation2 + $0x38] sm:$0xff]
    %v449 = vld [vmem:[#allocation2 + $0x40] sm:$0xff]
    %v450 = vld [vmem:[#allocation2 + $0x48] sm:$0xff]
    %v451 = vld [vmem:[#allocation2 + $0x50] sm:$0xff]
    %v452 = vld [vmem:[#allocation2 + $0x58] sm:$0xff]
    %v453 = vld [vmem:[#allocation2 + $0x60] sm:$0xff]
    %v454 = vld [vmem:[#allocation2 + $0x68] sm:$0xff]
    %v455 = vld [vmem:[#allocation2 + $0x70] sm:$0xff]
    %v456 = vld [vmem:[#allocation2 + $0x78] sm:$0xff]
    %v457 = vld [vmem:[#allocation2 + $0x80] sm:$0xff]
    %v458 = vld [vmem:[#allocation2 + $0x88] sm:$0xff]
    %v459 = vld [vmem:[#allocation2 + $0x90] sm:$0xff]
    %v460 = vld [vmem:[#allocation2 + $0x98] sm:$0xff]
    %v461 = vld [vmem:[#allocation2 + $0xa0] sm:$0xff]
    %v462 = vld [vmem:[#allocation2 + $0xa8] sm:$0xff]
    %v463 = vld [vmem:[#allocation2 + $0xb0] sm:$0xff]
    %v464 = vld [vmem:[#allocation2 + $0xb8] sm:$0xff]
    %v465 = vld [vmem:[#allocation2 + $0xc0] sm:$0xff]
    %v466 = vld [vmem:[#allocation2 + $0xc8] sm:$0xff]
    %v467 = vld [vmem:[#allocation2 + $0xd0] sm:$0xff]
    %v468 = vld [vmem:[#allocation2 + $0xd8] sm:$0xff]
    %v469 = vld [vmem:[#allocation2 + $0xe0] sm:$0xff]
    %v470 = vld [vmem:[#allocation2 + $0xe8] sm:$0xff]
    %v471 = vld [vmem:[#allocation2 + $0xf0] sm:$0xff]
    %v472 = vld [vmem:[#allocation2 + $0xf8] sm:$0xff]
    %v473 = vpack.c.bf16 %v442, %v441
    %v474 = vpack.c.bf16 %v444, %v443
    %v475 = vpack.c.bf16 %v446, %v445
    %v476 = vpack.c.bf16 %v448, %v447
    %v477 = vpack.c.bf16 %v450, %v449
    %v478 = vpack.c.bf16 %v452, %v451
    %v479 = vpack.c.bf16 %v454, %v453
    %v480 = vpack.c.bf16 %v456, %v455
    %v481 = vpack.c.bf16 %v458, %v457
    %v482 = vpack.c.bf16 %v460, %v459
    %v483 = vpack.c.bf16 %v462, %v461
    %v484 = vpack.c.bf16 %v464, %v463
    %v485 = vpack.c.bf16 %v466, %v465
    %v486 = vpack.c.bf16 %v468, %v467
    %v487 = vpack.c.bf16 %v470, %v469
    %v488 = vpack.c.bf16 %v472, %v471
    %v489 = vld [vmem:[%s2] sm:$0xf]
    %v490 = vld [vmem:[%s2 + $0x4] sm:$0xf]
    %v491 = vld [vmem:[%s2 + $0x8] sm:$0xf]
    %v492 = vld [vmem:[%s2 + $0xc] sm:$0xf]
    %v493 = vld [vmem:[%s2 + $0x10] sm:$0xf]
    %v494 = vld [vmem:[%s2 + $0x14] sm:$0xf]
    %v495 = vld [vmem:[%s2 + $0x18] sm:$0xf]
    %v496 = vld [vmem:[%s2 + $0x1c] sm:$0xf]
    %v497 = vld [vmem:[%s2 + $0x20] sm:$0xf]
    %v498 = vld [vmem:[%s2 + $0x24] sm:$0xf]
    %v499 = vld [vmem:[%s2 + $0x28] sm:$0xf]
    %v500 = vld [vmem:[%s2 + $0x2c] sm:$0xf]
    %v501 = vld [vmem:[%s2 + $0x30] sm:$0xf]
    %v502 = vld [vmem:[%s2 + $0x34] sm:$0xf]
    %v503 = vld [vmem:[%s2 + $0x38] sm:$0xf]
    %v504 = vld [vmem:[%s2 + $0x3c] sm:$0xf]
    %v505 = vld [vmem:[#allocation2 + $0x1] sm:$0xff]
    %v506 = vld [vmem:[#allocation2 + $0x9] sm:$0xff]
    %v507 = vld [vmem:[#allocation2 + $0x11] sm:$0xff]
    %v508 = vld [vmem:[#allocation2 + $0x19] sm:$0xff]
    %v509 = vld [vmem:[#allocation2 + $0x21] sm:$0xff]
    %v510 = vld [vmem:[#allocation2 + $0x29] sm:$0xff]
    %v511 = vld [vmem:[#allocation2 + $0x31] sm:$0xff]
    %v512 = vld [vmem:[#allocation2 + $0x39] sm:$0xff]
    %v513 = vld [vmem:[#allocation2 + $0x41] sm:$0xff]
    %v514 = vld [vmem:[#allocation2 + $0x49] sm:$0xff]
    %v515 = vld [vmem:[#allocation2 + $0x51] sm:$0xff]
    %v516 = vld [vmem:[#allocation2 + $0x59] sm:$0xff]
    %v517 = vld [vmem:[#allocation2 + $0x61] sm:$0xff]
    %v518 = vld [vmem:[#allocation2 + $0x69] sm:$0xff]
    %v519 = vld [vmem:[#allocation2 + $0x71] sm:$0xff]
    %v520 = vld [vmem:[#allocation2 + $0x79] sm:$0xff]
    %v521 = vld [vmem:[#allocation2 + $0x81] sm:$0xff]
    %v522 = vld [vmem:[#allocation2 + $0x89] sm:$0xff]
    %v523 = vld [vmem:[#allocation2 + $0x91] sm:$0xff]
    %v524 = vld [vmem:[#allocation2 + $0x99] sm:$0xff]
    %v525 = vld [vmem:[#allocation2 + $0xa1] sm:$0xff]
    %v526 = vld [vmem:[#allocation2 + $0xa9] sm:$0xff]
    %v527 = vld [vmem:[#allocation2 + $0xb1] sm:$0xff]
    %v528 = vld [vmem:[#allocation2 + $0xb9] sm:$0xff]
    %v529 = vld [vmem:[#allocation2 + $0xc1] sm:$0xff]
    %v530 = vld [vmem:[#allocation2 + $0xc9] sm:$0xff]
    %v531 = vld [vmem:[#allocation2 + $0xd1] sm:$0xff]
    %v532 = vld [vmem:[#allocation2 + $0xd9] sm:$0xff]
    %v533 = vld [vmem:[#allocation2 + $0xe1] sm:$0xff]
    %v534 = vld [vmem:[#allocation2 + $0xe9] sm:$0xff]
    %v535 = vld [vmem:[#allocation2 + $0xf1] sm:$0xff]
    %v536 = vld [vmem:[#allocation2 + $0xf9] sm:$0xff]
    %v537 = vpack.c.bf16 %v506, %v505
    %v538 = vpack.c.bf16 %v508, %v507
    %v539 = vpack.c.bf16 %v510, %v509
    %v540 = vpack.c.bf16 %v512, %v511
    %v541 = vpack.c.bf16 %v514, %v513
    %v542 = vpack.c.bf16 %v516, %v515
    %v543 = vpack.c.bf16 %v518, %v517
    %v544 = vpack.c.bf16 %v520, %v519
    %v545 = vpack.c.bf16 %v522, %v521
    %v546 = vpack.c.bf16 %v524, %v523
    %v547 = vpack.c.bf16 %v526, %v525
    %v548 = vpack.c.bf16 %v528, %v527
    %v549 = vpack.c.bf16 %v530, %v529
    %v550 = vpack.c.bf16 %v532, %v531
    %v551 = vpack.c.bf16 %v534, %v533
    %v552 = vpack.c.bf16 %v536, %v535
    %s553 = scalar_lea.vmem %s2, 64
    %v554 = vld [vmem:[%s553] sm:$0xf]
    %v555 = vld [vmem:[%s553 + $0x4] sm:$0xf]
    %v556 = vld [vmem:[%s553 + $0x8] sm:$0xf]
    %v557 = vld [vmem:[%s553 + $0xc] sm:$0xf]
    %v558 = vld [vmem:[%s553 + $0x10] sm:$0xf]
    %v559 = vld [vmem:[%s553 + $0x14] sm:$0xf]
    %v560 = vld [vmem:[%s553 + $0x18] sm:$0xf]
    %v561 = vld [vmem:[%s553 + $0x1c] sm:$0xf]
    %v562 = vld [vmem:[%s553 + $0x20] sm:$0xf]
    %v563 = vld [vmem:[%s553 + $0x24] sm:$0xf]
    %v564 = vld [vmem:[%s553 + $0x28] sm:$0xf]
    %v565 = vld [vmem:[%s553 + $0x2c] sm:$0xf]
    %v566 = vld [vmem:[%s553 + $0x30] sm:$0xf]
    %v567 = vld [vmem:[%s553 + $0x34] sm:$0xf]
    %v568 = vld [vmem:[%s553 + $0x38] sm:$0xf]
    %v569 = vld [vmem:[%s553 + $0x3c] sm:$0xf]
    %v586 = vunpack.c.l.b16 %v554
    %v587 = vunpack.c.l.b16 %v555
    %v588 = vunpack.c.l.b16 %v556
    %v589 = vunpack.c.l.b16 %v557
    %v590 = vunpack.c.l.b16 %v558
    %v591 = vunpack.c.l.b16 %v559
    %v592 = vunpack.c.l.b16 %v560
    %v593 = vunpack.c.l.b16 %v561
    %v594 = vunpack.c.l.b16 %v562
    %v595 = vunpack.c.l.b16 %v563
    %v596 = vunpack.c.l.b16 %v564
    %v597 = vunpack.c.l.b16 %v565
    %v598 = vunpack.c.l.b16 %v566
    %v599 = vunpack.c.l.b16 %v567
    %v600 = vunpack.c.l.b16 %v568
    %v601 = vunpack.c.l.b16 %v569
    %v602 = vpack.c.b16 %v587, %v586
    %v603 = vpack.c.b16 %v589, %v588
    %v604 = vpack.c.b16 %v591, %v590
    %v605 = vpack.c.b16 %v593, %v592
    %v606 = vpack.c.b16 %v595, %v594
    %v607 = vpack.c.b16 %v597, %v596
    %v608 = vpack.c.b16 %v599, %v598
    %v609 = vpack.c.b16 %v601, %v600
    %618 = vmatprep.subr.bf16.mxu0 0
    %619 = vmatpush1.bf16.msra.mxu0 %v602
    %620 = vmatprep.subr.bf16.mxu0 0
    %621 = vmatpush1.bf16.msra.mxu0 %v603
    %622 = vmatprep.subr.bf16.mxu0 0
    %623 = vmatpush1.bf16.msra.mxu0 %v604
    %624 = vmatprep.subr.bf16.mxu0 0
    %625 = vmatpush1.bf16.msra.mxu0 %v605
    %626 = vmatprep.subr.bf16.mxu0 0
    %627 = vmatpush1.bf16.msra.mxu0 %v606
    %628 = vmatprep.subr.bf16.mxu0 0
    %629 = vmatpush1.bf16.msra.mxu0 %v607
    %630 = vmatprep.subr.bf16.mxu0 0
    %631 = vmatpush1.bf16.msra.mxu0 %v608
    %632 = vmatprep.subr.bf16.mxu0 0
    %633 = vmatpush1.bf16.msra.mxu0 %v609
    %634 = vmatprep.subr.bf16.mxu0 0
    %635 = vmatpush1.bf16.msra.mxu0 0
    %636 = vmatprep.subr.bf16.mxu0 0
    %637 = vmatpush1.bf16.msra.mxu0 0
    %638 = vmatprep.subr.bf16.mxu0 0
    %639 = vmatpush1.bf16.msra.mxu0 0
    %640 = vmatprep.subr.bf16.mxu0 0
    %641 = vmatpush1.bf16.msra.mxu0 0
    %642 = vmatprep.subr.bf16.mxu0 0
    %643 = vmatpush1.bf16.msra.mxu0 0
    %644 = vmatprep.subr.bf16.mxu0 0
    %645 = vmatpush1.bf16.msra.mxu0 0
    %646 = vmatprep.subr.bf16.mxu0 0
    %647 = vmatpush1.bf16.msra.mxu0 0
    %648 = vmatprep.subr.bf16.mxu0 0
    %649 = vmatpush1.bf16.msra.mxu0 0
    %650 = vmatprep.mubr.bf16.mxu0 0
    %651 = vmatmul.mubr.bf16.gmra.mrb[0].mxu0 %v537
    %v652 = vpop.f32.mrb[0].mxu0
    %v653 = vadd.f32 0.0, %v652
    %v654 = vpop.f32.mrb[0].mxu0
    %v655 = vpop.f32.mrb[0].mxu0
    %v656 = vadd.f32 0.0, %v655
    %v657 = vpop.f32.mrb[0].mxu0
    %658 = vmatprep.mubr.bf16.mxu0 0
    %659 = vmatmul.mubr.bf16.gmra.mrb[0].mxu0 %v538
    %v660 = vpop.f32.mrb[0].mxu0
    %v661 = vadd.f32 0.0, %v660
    %v662 = vpop.f32.mrb[0].mxu0
    %v663 = vpop.f32.mrb[0].mxu0
    %v664 = vadd.f32 0.0, %v663
    %v665 = vpop.f32.mrb[0].mxu0
    %666 = vmatprep.mubr.bf16.mxu0 0
    %667 = vmatmul.mubr.bf16.gmra.mrb[0].mxu0 %v539
    %v668 = vpop.f32.mrb[0].mxu0
    %v669 = vadd.f32 0.0, %v668
    %v670 = vpop.f32.mrb[0].mxu0
    %v671 = vpop.f32.mrb[0].mxu0
    %v672 = vadd.f32 0.0, %v671
    %v673 = vpop.f32.mrb[0].mxu0
    %674 = vmatprep.mubr.bf16.mxu0 0
    %675 = vmatmul.mubr.bf16.gmra.mrb[0].mxu0 %v540
    %v676 = vpop.f32.mrb[0].mxu0
    %v677 = vadd.f32 0.0, %v676
    %v678 = vpop.f32.mrb[0].mxu0
    %v679 = vpop.f32.mrb[0].mxu0
    %v680 = vadd.f32 0.0, %v679
    %v681 = vpop.f32.mrb[0].mxu0
    %682 = vmatprep.mubr.bf16.mxu0 0
    %683 = vmatmul.mubr.bf16.gmra.mrb[0].mxu0 %v541
    %v684 = vpop.f32.mrb[0].mxu0
    %v685 = vadd.f32 0.0, %v684
    %v686 = vpop.f32.mrb[0].mxu0
    %v687 = vpop.f32.mrb[0].mxu0
    %v688 = vadd.f32 0.0, %v687
    %v689 = vpop.f32.mrb[0].mxu0
    %690 = vmatprep.mubr.bf16.mxu0 0
    %691 = vmatmul.mubr.bf16.gmra.mrb[0].mxu0 %v542
    %v692 = vpop.f32.mrb[0].mxu0
    %v693 = vadd.f32 0.0, %v692
    %v694 = vpop.f32.mrb[0].mxu0
    %v695 = vpop.f32.mrb[0].mxu0
    %v696 = vadd.f32 0.0, %v695
    %v697 = vpop.f32.mrb[0].mxu0
    %698 = vmatprep.mubr.bf16.mxu0 0
    %699 = vmatmul.mubr.bf16.gmra.mrb[0].mxu0 %v543
    %v700 = vpop.f32.mrb[0].mxu0
    %v701 = vadd.f32 0.0, %v700
    %v702 = vpop.f32.mrb[0].mxu0
    %v703 = vpop.f32.mrb[0].mxu0
    %v704 = vadd.f32 0.0, %v703
    %v705 = vpop.f32.mrb[0].mxu0
    %706 = vmatprep.mubr.bf16.mxu0 0
    %707 = vmatmul.mubr.bf16.gmra.mrb[0].mxu0 %v544
    %v708 = vpop.f32.mrb[0].mxu0
    %v709 = vadd.f32 0.0, %v708
    %v710 = vpop.f32.mrb[0].mxu0
    %v711 = vpop.f32.mrb[0].mxu0
    %v712 = vadd.f32 0.0, %v711
    %v713 = vpop.f32.mrb[0].mxu0
    %714 = vmatprep.mubr.bf16.mxu0 0
    %715 = vmatmul.mubr.bf16.gmra.mrb[0].mxu0 %v545
    %v716 = vpop.f32.mrb[0].mxu0
    %v717 = vadd.f32 0.0, %v716
    %v718 = vpop.f32.mrb[0].mxu0
    %v719 = vpop.f32.mrb[0].mxu0
    %v720 = vadd.f32 0.0, %v719
    %v721 = vpop.f32.mrb[0].mxu0
    %722 = vmatprep.mubr.bf16.mxu0 0
    %723 = vmatmul.mubr.bf16.gmra.mrb[0].mxu0 %v546
    %v724 = vpop.f32.mrb[0].mxu0
    %v725 = vadd.f32 0.0, %v724
    %v726 = vpop.f32.mrb[0].mxu0
    %v727 = vpop.f32.mrb[0].mxu0
    %v728 = vadd.f32 0.0, %v727
    %v729 = vpop.f32.mrb[0].mxu0
    %730 = vmatprep.mubr.bf16.mxu0 0
    %731 = vmatmul.mubr.bf16.gmra.mrb[0].mxu0 %v547
    %v732 = vpop.f32.mrb[0].mxu0
    %v733 = vadd.f32 0.0, %v732
    %v734 = vpop.f32.mrb[0].mxu0
    %v735 = vpop.f32.mrb[0].mxu0
    %v736 = vadd.f32 0.0, %v735
    %v737 = vpop.f32.mrb[0].mxu0
    %738 = vmatprep.mubr.bf16.mxu0 0
    %739 = vmatmul.mubr.bf16.gmra.mrb[0].mxu0 %v548
    %v740 = vpop.f32.mrb[0].mxu0
    %v741 = vadd.f32 0.0, %v740
    %v742 = vpop.f32.mrb[0].mxu0
    %v743 = vpop.f32.mrb[0].mxu0
    %v744 = vadd.f32 0.0, %v743
    %v745 = vpop.f32.mrb[0].mxu0
    %746 = vmatprep.mubr.bf16.mxu0 0
    %747 = vmatmul.mubr.bf16.gmra.mrb[0].mxu0 %v549
    %v748 = vpop.f32.mrb[0].mxu0
    %v749 = vadd.f32 0.0, %v748
    %v750 = vpop.f32.mrb[0].mxu0
    %v751 = vpop.f32.mrb[0].mxu0
    %v752 = vadd.f32 0.0, %v751
    %v753 = vpop.f32.mrb[0].mxu0
    %754 = vmatprep.mubr.bf16.mxu0 0
    %755 = vmatmul.mubr.bf16.gmra.mrb[0].mxu0 %v550
    %v756 = vpop.f32.mrb[0].mxu0
    %v757 = vadd.f32 0.0, %v756
    %v758 = vpop.f32.mrb[0].mxu0
    %v759 = vpop.f32.mrb[0].mxu0
    %v760 = vadd.f32 0.0, %v759
    %v761 = vpop.f32.mrb[0].mxu0
    %762 = vmatprep.mubr.bf16.mxu0 0
    %763 = vmatmul.mubr.bf16.gmra.mrb[0].mxu0 %v551
    %v764 = vpop.f32.mrb[0].mxu0
    %v765 = vadd.f32 0.0, %v764
    %v766 = vpop.f32.mrb[0].mxu0
    %v767 = vpop.f32.mrb[0].mxu0
    %v768 = vadd.f32 0.0, %v767
    %v769 = vpop.f32.mrb[0].mxu0
    %770 = vmatprep.mubr.bf16.mxu0 0
    %771 = vmatmul.mubr.bf16.gmra.mrb[0].mxu0 %v552
    %v772 = vpop.f32.mrb[0].mxu0
    %v773 = vadd.f32 0.0, %v772
    %v774 = vpop.f32.mrb[0].mxu0
    %v775 = vpop.f32.mrb[0].mxu0
    %v776 = vadd.f32 0.0, %v775
    %v777 = vpop.f32.mrb[0].mxu0
    %778 = vdwg.mxu0
    %v795 = vunpack.c.l.b16 %v489
    %v796 = vunpack.c.l.b16 %v490
    %v797 = vunpack.c.l.b16 %v491
    %v798 = vunpack.c.l.b16 %v492
    %v799 = vunpack.c.l.b16 %v493
    %v800 = vunpack.c.l.b16 %v494
    %v801 = vunpack.c.l.b16 %v495
    %v802 = vunpack.c.l.b16 %v496
    %v803 = vunpack.c.l.b16 %v497
    %v804 = vunpack.c.l.b16 %v498
    %v805 = vunpack.c.l.b16 %v499
    %v806 = vunpack.c.l.b16 %v500
    %v807 = vunpack.c.l.b16 %v501
    %v808 = vunpack.c.l.b16 %v502
    %v809 = vunpack.c.l.b16 %v503
    %v810 = vunpack.c.l.b16 %v504
    %v811 = vpack.c.b16 %v796, %v795
    %v812 = vpack.c.b16 %v798, %v797
    %v813 = vpack.c.b16 %v800, %v799
    %v814 = vpack.c.b16 %v802, %v801
    %v815 = vpack.c.b16 %v804, %v803
    %v816 = vpack.c.b16 %v806, %v805
    %v817 = vpack.c.b16 %v808, %v807
    %v818 = vpack.c.b16 %v810, %v809
    %827 = vmatprep.subr.bf16.mxu0 0
    %828 = vmatpush1.bf16.msra.mxu0 %v811
    %829 = vmatprep.subr.bf16.mxu0 0
    %830 = vmatpush1.bf16.msra.mxu0 %v812
    %831 = vmatprep.subr.bf16.mxu0 0
    %832 = vmatpush1.bf16.msra.mxu0 %v813
    %833 = vmatprep.subr.bf16.mxu0 0
    %834 = vmatpush1.bf16.msra.mxu0 %v814
    %835 = vmatprep.subr.bf16.mxu0 0
    %836 = vmatpush1.bf16.msra.mxu0 %v815
    %837 = vmatprep.subr.bf16.mxu0 0
    %838 = vmatpush1.bf16.msra.mxu0 %v816
    %839 = vmatprep.subr.bf16.mxu0 0
    %840 = vmatpush1.bf16.msra.mxu0 %v817
    %841 = vmatprep.subr.bf16.mxu0 0
    %842 = vmatpush1.bf16.msra.mxu0 %v818
    %843 = vmatprep.subr.bf16.mxu0 0
    %844 = vmatpush1.bf16.msra.mxu0 0
    %845 = vmatprep.subr.bf16.mxu0 0
    %846 = vmatpush1.bf16.msra.mxu0 0
    %847 = vmatprep.subr.bf16.mxu0 0
    %848 = vmatpush1.bf16.msra.mxu0 0
    %849 = vmatprep.subr.bf16.mxu0 0
    %850 = vmatpush1.bf16.msra.mxu0 0
    %851 = vmatprep.subr.bf16.mxu0 0
    %852 = vmatpush1.bf16.msra.mxu0 0
    %853 = vmatprep.subr.bf16.mxu0 0
    %854 = vmatpush1.bf16.msra.mxu0 0
    %855 = vmatprep.subr.bf16.mxu0 0
    %856 = vmatpush1.bf16.msra.mxu0 0
    %857 = vmatprep.subr.bf16.mxu0 0
    %858 = vmatpush1.bf16.msra.mxu0 0
    %859 = vmatprep.mubr.bf16.mxu0 0
    %860 = vmatmul.mubr.bf16.gmra.mrb[0].mxu0 %v473
    %v861 = vpop.f32.mrb[0].mxu0
    %v862 = vadd.f32 %v653, %v861
    %v863 = vpop.f32.mrb[0].mxu0
    %v864 = vpop.f32.mrb[0].mxu0
    %v865 = vadd.f32 %v656, %v864
    %v866 = vpop.f32.mrb[0].mxu0
    %867 = vmatprep.mubr.bf16.mxu0 0
    %868 = vmatmul.mubr.bf16.gmra.mrb[0].mxu0 %v474
    %v869 = vpop.f32.mrb[0].mxu0
    %v870 = vadd.f32 %v661, %v869
    %v871 = vpop.f32.mrb[0].mxu0
    %v872 = vpop.f32.mrb[0].mxu0
    %v873 = vadd.f32 %v664, %v872
    %v874 = vpop.f32.mrb[0].mxu0
    %875 = vmatprep.mubr.bf16.mxu0 0
    %876 = vmatmul.mubr.bf16.gmra.mrb[0].mxu0 %v475
    %v877 = vpop.f32.mrb[0].mxu0
    %v878 = vadd.f32 %v669, %v877
    %v879 = vpop.f32.mrb[0].mxu0
    %v880 = vpop.f32.mrb[0].mxu0
    %v881 = vadd.f32 %v672, %v880
    %v882 = vpop.f32.mrb[0].mxu0
    %883 = vmatprep.mubr.bf16.mxu0 0
    %884 = vmatmul.mubr.bf16.gmra.mrb[0].mxu0 %v476
    %v885 = vpop.f32.mrb[0].mxu0
    %v886 = vadd.f32 %v677, %v885
    %v887 = vpop.f32.mrb[0].mxu0
    %v888 = vpop.f32.mrb[0].mxu0
    %v889 = vadd.f32 %v680, %v888
    %v890 = vpop.f32.mrb[0].mxu0
    %891 = vmatprep.mubr.bf16.mxu0 0
    %892 = vmatmul.mubr.bf16.gmra.mrb[0].mxu0 %v477
    %v893 = vpop.f32.mrb[0].mxu0
    %v894 = vadd.f32 %v685, %v893
    %v895 = vpop.f32.mrb[0].mxu0
    %v896 = vpop.f32.mrb[0].mxu0
    %v897 = vadd.f32 %v688, %v896
    %v898 = vpop.f32.mrb[0].mxu0
    %899 = vmatprep.mubr.bf16.mxu0 0
    %900 = vmatmul.mubr.bf16.gmra.mrb[0].mxu0 %v478
    %v901 = vpop.f32.mrb[0].mxu0
    %v902 = vadd.f32 %v693, %v901
    %v903 = vpop.f32.mrb[0].mxu0
    %v904 = vpop.f32.mrb[0].mxu0
    %v905 = vadd.f32 %v696, %v904
    %v906 = vpop.f32.mrb[0].mxu0
    %907 = vmatprep.mubr.bf16.mxu0 0
    %908 = vmatmul.mubr.bf16.gmra.mrb[0].mxu0 %v479
    %v909 = vpop.f32.mrb[0].mxu0
    %v910 = vadd.f32 %v701, %v909
    %v911 = vpop.f32.mrb[0].mxu0
    %v912 = vpop.f32.mrb[0].mxu0
    %v913 = vadd.f32 %v704, %v912
    %v914 = vpop.f32.mrb[0].mxu0
    %915 = vmatprep.mubr.bf16.mxu0 0
    %916 = vmatmul.mubr.bf16.gmra.mrb[0].mxu0 %v480
    %v917 = vpop.f32.mrb[0].mxu0
    %v918 = vadd.f32 %v709, %v917
    %v919 = vpop.f32.mrb[0].mxu0
    %v920 = vpop.f32.mrb[0].mxu0
    %v921 = vadd.f32 %v712, %v920
    %v922 = vpop.f32.mrb[0].mxu0
    %923 = vmatprep.mubr.bf16.mxu0 0
    %924 = vmatmul.mubr.bf16.gmra.mrb[0].mxu0 %v481
    %v925 = vpop.f32.mrb[0].mxu0
    %v926 = vadd.f32 %v717, %v925
    %v927 = vpop.f32.mrb[0].mxu0
    %v928 = vpop.f32.mrb[0].mxu0
    %v929 = vadd.f32 %v720, %v928
    %v930 = vpop.f32.mrb[0].mxu0
    %931 = vmatprep.mubr.bf16.mxu0 0
    %932 = vmatmul.mubr.bf16.gmra.mrb[0].mxu0 %v482
    %v933 = vpop.f32.mrb[0].mxu0
    %v934 = vadd.f32 %v725, %v933
    %v935 = vpop.f32.mrb[0].mxu0
    %v936 = vpop.f32.mrb[0].mxu0
    %v937 = vadd.f32 %v728, %v936
    %v938 = vpop.f32.mrb[0].mxu0
    %939 = vmatprep.mubr.bf16.mxu0 0
    %940 = vmatmul.mubr.bf16.gmra.mrb[0].mxu0 %v483
    %v941 = vpop.f32.mrb[0].mxu0
    %v942 = vadd.f32 %v733, %v941
    %v943 = vpop.f32.mrb[0].mxu0
    %v944 = vpop.f32.mrb[0].mxu0
    %v945 = vadd.f32 %v736, %v944
    %v946 = vpop.f32.mrb[0].mxu0
    %947 = vmatprep.mubr.bf16.mxu0 0
    %948 = vmatmul.mubr.bf16.gmra.mrb[0].mxu0 %v484
    %v949 = vpop.f32.mrb[0].mxu0
    %v950 = vadd.f32 %v741, %v949
    %v951 = vpop.f32.mrb[0].mxu0
    %v952 = vpop.f32.mrb[0].mxu0
    %v953 = vadd.f32 %v744, %v952
    %v954 = vpop.f32.mrb[0].mxu0
    %955 = vmatprep.mubr.bf16.mxu0 0
    %956 = vmatmul.mubr.bf16.gmra.mrb[0].mxu0 %v485
    %v957 = vpop.f32.mrb[0].mxu0
    %v958 = vadd.f32 %v749, %v957
    %v959 = vpop.f32.mrb[0].mxu0
    %v960 = vpop.f32.mrb[0].mxu0
    %v961 = vadd.f32 %v752, %v960
    %v962 = vpop.f32.mrb[0].mxu0
    %963 = vmatprep.mubr.bf16.mxu0 0
    %964 = vmatmul.mubr.bf16.gmra.mrb[0].mxu0 %v486
    %v965 = vpop.f32.mrb[0].mxu0
    %v966 = vadd.f32 %v757, %v965
    %v967 = vpop.f32.mrb[0].mxu0
    %v968 = vpop.f32.mrb[0].mxu0
    %v969 = vadd.f32 %v760, %v968
    %v970 = vpop.f32.mrb[0].mxu0
    %971 = vmatprep.mubr.bf16.mxu0 0
    %972 = vmatmul.mubr.bf16.gmra.mrb[0].mxu0 %v487
    %v973 = vpop.f32.mrb[0].mxu0
    %v974 = vadd.f32 %v765, %v973
    %v975 = vpop.f32.mrb[0].mxu0
    %v976 = vpop.f32.mrb[0].mxu0
    %v977 = vadd.f32 %v768, %v976
    %v978 = vpop.f32.mrb[0].mxu0
    %979 = vmatprep.mubr.bf16.mxu0 0
    %980 = vmatmul.mubr.bf16.gmra.mrb[0].mxu0 %v488
    %v981 = vpop.f32.mrb[0].mxu0
    %v982 = vadd.f32 %v773, %v981
    %v983 = vpop.f32.mrb[0].mxu0
    %v984 = vpop.f32.mrb[0].mxu0
    %v985 = vadd.f32 %v776, %v984
    %v986 = vpop.f32.mrb[0].mxu0
    %987 = vdwg.mxu0
    %v988 = vld [vmem:[#allocation2 + $0x2] sm:$0xff]
    %v989 = vld [vmem:[#allocation2 + $0xa] sm:$0xff]
    %v990 = vld [vmem:[#allocation2 + $0x12] sm:$0xff]
    %v991 = vld [vmem:[#allocation2 + $0x1a] sm:$0xff]
    %v992 = vld [vmem:[#allocation2 + $0x22] sm:$0xff]
    %v993 = vld [vmem:[#allocation2 + $0x2a] sm:$0xff]
    %v994 = vld [vmem:[#allocation2 + $0x32] sm:$0xff]
    %v995 = vld [vmem:[#allocation2 + $0x3a] sm:$0xff]
    %v996 = vld [vmem:[#allocation2 + $0x42] sm:$0xff]
    %v997 = vld [vmem:[#allocation2 + $0x4a] sm:$0xff]
    %v998 = vld [vmem:[#allocation2 + $0x52] sm:$0xff]
    %v999 = vld [vmem:[#allocation2 + $0x5a] sm:$0xff]
    %v1000 = vld [vmem:[#allocation2 + $0x62] sm:$0xff]
    %v1001 = vld [vmem:[#allocation2 + $0x6a] sm:$0xff]
    %v1002 = vld [vmem:[#allocation2 + $0x72] sm:$0xff]
    %v1003 = vld [vmem:[#allocation2 + $0x7a] sm:$0xff]
    %v1004 = vld [vmem:[#allocation2 + $0x82] sm:$0xff]
    %v1005 = vld [vmem:[#allocation2 + $0x8a] sm:$0xff]
    %v1006 = vld [vmem:[#allocation2 + $0x92] sm:$0xff]
    %v1007 = vld [vmem:[#allocation2 + $0x9a] sm:$0xff]
    %v1008 = vld [vmem:[#allocation2 + $0xa2] sm:$0xff]
    %v1009 = vld [vmem:[#allocation2 + $0xaa] sm:$0xff]
    %v1010 = vld [vmem:[#allocation2 + $0xb2] sm:$0xff]
    %v1011 = vld [vmem:[#allocation2 + $0xba] sm:$0xff]
    %v1012 = vld [vmem:[#allocation2 + $0xc2] sm:$0xff]
    %v1013 = vld [vmem:[#allocation2 + $0xca] sm:$0xff]
    %v1014 = vld [vmem:[#allocation2 + $0xd2] sm:$0xff]
    %v1015 = vld [vmem:[#allocation2 + $0xda] sm:$0xff]
    %v1016 = vld [vmem:[#allocation2 + $0xe2] sm:$0xff]
    %v1017 = vld [vmem:[#allocation2 + $0xea] sm:$0xff]
    %v1018 = vld [vmem:[#allocation2 + $0xf2] sm:$0xff]
    %v1019 = vld [vmem:[#allocation2 + $0xfa] sm:$0xff]
    %v1020 = vpack.c.bf16 %v989, %v988
    %v1021 = vpack.c.bf16 %v991, %v990
    %v1022 = vpack.c.bf16 %v993, %v992
    %v1023 = vpack.c.bf16 %v995, %v994
    %v1024 = vpack.c.bf16 %v997, %v996
    %v1025 = vpack.c.bf16 %v999, %v998
    %v1026 = vpack.c.bf16 %v1001, %v1000
    %v1027 = vpack.c.bf16 %v1003, %v1002
    %v1028 = vpack.c.bf16 %v1005, %v1004
    %v1029 = vpack.c.bf16 %v1007, %v1006
    %v1030 = vpack.c.bf16 %v1009, %v1008
    %v1031 = vpack.c.bf16 %v1011, %v1010
    %v1032 = vpack.c.bf16 %v1013, %v1012
    %v1033 = vpack.c.bf16 %v1015, %v1014
    %v1034 = vpack.c.bf16 %v1017, %v1016
    %v1035 = vpack.c.bf16 %v1019, %v1018
    %s1036 = scalar_lea.vmem %s2, 128
    %v1037 = vld [vmem:[%s1036] sm:$0xf]
    %v1038 = vld [vmem:[%s1036 + $0x4] sm:$0xf]
    %v1039 = vld [vmem:[%s1036 + $0x8] sm:$0xf]
    %v1040 = vld [vmem:[%s1036 + $0xc] sm:$0xf]
    %v1041 = vld [vmem:[%s1036 + $0x10] sm:$0xf]
    %v1042 = vld [vmem:[%s1036 + $0x14] sm:$0xf]
    %v1043 = vld [vmem:[%s1036 + $0x18] sm:$0xf]
    %v1044 = vld [vmem:[%s1036 + $0x1c] sm:$0xf]
    %v1045 = vld [vmem:[%s1036 + $0x20] sm:$0xf]
    %v1046 = vld [vmem:[%s1036 + $0x24] sm:$0xf]
    %v1047 = vld [vmem:[%s1036 + $0x28] sm:$0xf]
    %v1048 = vld [vmem:[%s1036 + $0x2c] sm:$0xf]
    %v1049 = vld [vmem:[%s1036 + $0x30] sm:$0xf]
    %v1050 = vld [vmem:[%s1036 + $0x34] sm:$0xf]
    %v1051 = vld [vmem:[%s1036 + $0x38] sm:$0xf]
    %v1052 = vld [vmem:[%s1036 + $0x3c] sm:$0xf]
    %v1069 = vunpack.c.l.b16 %v1037
    %v1070 = vunpack.c.l.b16 %v1038
    %v1071 = vunpack.c.l.b16 %v1039
    %v1072 = vunpack.c.l.b16 %v1040
    %v1073 = vunpack.c.l.b16 %v1041
    %v1074 = vunpack.c.l.b16 %v1042
    %v1075 = vunpack.c.l.b16 %v1043
    %v1076 = vunpack.c.l.b16 %v1044
    %v1077 = vunpack.c.l.b16 %v1045
    %v1078 = vunpack.c.l.b16 %v1046
    %v1079 = vunpack.c.l.b16 %v1047
    %v1080 = vunpack.c.l.b16 %v1048
    %v1081 = vunpack.c.l.b16 %v1049
    %v1082 = vunpack.c.l.b16 %v1050
    %v1083 = vunpack.c.l.b16 %v1051
    %v1084 = vunpack.c.l.b16 %v1052
    %v1085 = vpack.c.b16 %v1070, %v1069
    %v1086 = vpack.c.b16 %v1072, %v1071
    %v1087 = vpack.c.b16 %v1074, %v1073
    %v1088 = vpack.c.b16 %v1076, %v1075
    %v1089 = vpack.c.b16 %v1078, %v1077
    %v1090 = vpack.c.b16 %v1080, %v1079
    %v1091 = vpack.c.b16 %v1082, %v1081
    %v1092 = vpack.c.b16 %v1084, %v1083
    %1101 = vmatprep.subr.bf16.mxu0 0
    %1102 = vmatpush1.bf16.msra.mxu0 %v1085
    %1103 = vmatprep.subr.bf16.mxu0 0
    %1104 = vmatpush1.bf16.msra.mxu0 %v1086
    %1105 = vmatprep.subr.bf16.mxu0 0
    %1106 = vmatpush1.bf16.msra.mxu0 %v1087
    %1107 = vmatprep.subr.bf16.mxu0 0
    %1108 = vmatpush1.bf16.msra.mxu0 %v1088
    %1109 = vmatprep.subr.bf16.mxu0 0
    %1110 = vmatpush1.bf16.msra.mxu0 %v1089
    %1111 = vmatprep.subr.bf16.mxu0 0
    %1112 = vmatpush1.bf16.msra.mxu0 %v1090
    %1113 = vmatprep.subr.bf16.mxu0 0
    %1114 = vmatpush1.bf16.msra.mxu0 %v1091
    %1115 = vmatprep.subr.bf16.mxu0 0
    %1116 = vmatpush1.bf16.msra.mxu0 %v1092
    %1117 = vmatprep.subr.bf16.mxu0 0
    %1118 = vmatpush1.bf16.msra.mxu0 0
    %1119 = vmatprep.subr.bf16.mxu0 0
    %1120 = vmatpush1.bf16.msra.mxu0 0
    %1121 = vmatprep.subr.bf16.mxu0 0
    %1122 = vmatpush1.bf16.msra.mxu0 0
    %1123 = vmatprep.subr.bf16.mxu0 0
    %1124 = vmatpush1.bf16.msra.mxu0 0
    %1125 = vmatprep.subr.bf16.mxu0 0
    %1126 = vmatpush1.bf16.msra.mxu0 0
    %1127 = vmatprep.subr.bf16.mxu0 0
    %1128 = vmatpush1.bf16.msra.mxu0 0
    %1129 = vmatprep.subr.bf16.mxu0 0
    %1130 = vmatpush1.bf16.msra.mxu0 0
    %1131 = vmatprep.subr.bf16.mxu0 0
    %1132 = vmatpush1.bf16.msra.mxu0 0
    %1133 = vmatprep.mubr.bf16.mxu0 0
    %1134 = vmatmul.mubr.bf16.gmra.mrb[0].mxu0 %v1020
    %v1135 = vpop.f32.mrb[0].mxu0
    %v1136 = vadd.f32 0.0, %v1135
    %v1137 = vpop.f32.mrb[0].mxu0
    %v1138 = vpop.f32.mrb[0].mxu0
    %v1139 = vadd.f32 0.0, %v1138
    %v1140 = vpop.f32.mrb[0].mxu0
    %1141 = vmatprep.mubr.bf16.mxu0 0
    %1142 = vmatmul.mubr.bf16.gmra.mrb[0].mxu0 %v1021
    %v1143 = vpop.f32.mrb[0].mxu0
    %v1144 = vadd.f32 0.0, %v1143
    %v1145 = vpop.f32.mrb[0].mxu0
    %v1146 = vpop.f32.mrb[0].mxu0
    %v1147 = vadd.f32 0.0, %v1146
    %v1148 = vpop.f32.mrb[0].mxu0
    %1149 = vmatprep.mubr.bf16.mxu0 0
    %1150 = vmatmul.mubr.bf16.gmra.mrb[0].mxu0 %v1022
    %v1151 = vpop.f32.mrb[0].mxu0
    %v1152 = vadd.f32 0.0, %v1151
    %v1153 = vpop.f32.mrb[0].mxu0
    %v1154 = vpop.f32.mrb[0].mxu0
    %v1155 = vadd.f32 0.0, %v1154
    %v1156 = vpop.f32.mrb[0].mxu0
    %1157 = vmatprep.mubr.bf16.mxu0 0
    %1158 = vmatmul.mubr.bf16.gmra.mrb[0].mxu0 %v1023
    %v1159 = vpop.f32.mrb[0].mxu0
    %v1160 = vadd.f32 0.0, %v1159
    %v1161 = vpop.f32.mrb[0].mxu0
    %v1162 = vpop.f32.mrb[0].mxu0
    %v1163 = vadd.f32 0.0, %v1162
    %v1164 = vpop.f32.mrb[0].mxu0
    %1165 = vmatprep.mubr.bf16.mxu0 0
    %1166 = vmatmul.mubr.bf16.gmra.mrb[0].mxu0 %v1024
    %v1167 = vpop.f32.mrb[0].mxu0
    %v1168 = vadd.f32 0.0, %v1167
    %v1169 = vpop.f32.mrb[0].mxu0
    %v1170 = vpop.f32.mrb[0].mxu0
    %v1171 = vadd.f32 0.0, %v1170
    %v1172 = vpop.f32.mrb[0].mxu0
    %1173 = vmatprep.mubr.bf16.mxu0 0
    %1174 = vmatmul.mubr.bf16.gmra.mrb[0].mxu0 %v1025
    %v1175 = vpop.f32.mrb[0].mxu0
    %v1176 = vadd.f32 0.0, %v1175
    %v1177 = vpop.f32.mrb[0].mxu0
    %v1178 = vpop.f32.mrb[0].mxu0
    %v1179 = vadd.f32 0.0, %v1178
    %v1180 = vpop.f32.mrb[0].mxu0
    %1181 = vmatprep.mubr.bf16.mxu0 0
    %1182 = vmatmul.mubr.bf16.gmra.mrb[0].mxu0 %v1026
    %v1183 = vpop.f32.mrb[0].mxu0
    %v1184 = vadd.f32 0.0, %v1183
    %v1185 = vpop.f32.mrb[0].mxu0
    %v1186 = vpop.f32.mrb[0].mxu0
    %v1187 = vadd.f32 0.0, %v1186
    %v1188 = vpop.f32.mrb[0].mxu0
    %1189 = vmatprep.mubr.bf16.mxu0 0
    %1190 = vmatmul.mubr.bf16.gmra.mrb[0].mxu0 %v1027
    %v1191 = vpop.f32.mrb[0].mxu0
    %v1192 = vadd.f32 0.0, %v1191
    %v1193 = vpop.f32.mrb[0].mxu0
    %v1194 = vpop.f32.mrb[0].mxu0
    %v1195 = vadd.f32 0.0, %v1194
    %v1196 = vpop.f32.mrb[0].mxu0
    %1197 = vmatprep.mubr.bf16.mxu0 0
    %1198 = vmatmul.mubr.bf16.gmra.mrb[0].mxu0 %v1028
    %v1199 = vpop.f32.mrb[0].mxu0
    %v1200 = vadd.f32 0.0, %v1199
    %v1201 = vpop.f32.mrb[0].mxu0
    %v1202 = vpop.f32.mrb[0].mxu0
    %v1203 = vadd.f32 0.0, %v1202
    %v1204 = vpop.f32.mrb[0].mxu0
    %1205 = vmatprep.mubr.bf16.mxu0 0
    %1206 = vmatmul.mubr.bf16.gmra.mrb[0].mxu0 %v1029
    %v1207 = vpop.f32.mrb[0].mxu0
    %v1208 = vadd.f32 0.0, %v1207
    %v1209 = vpop.f32.mrb[0].mxu0
    %v1210 = vpop.f32.mrb[0].mxu0
    %v1211 = vadd.f32 0.0, %v1210
    %v1212 = vpop.f32.mrb[0].mxu0
    %1213 = vmatprep.mubr.bf16.mxu0 0
    %1214 = vmatmul.mubr.bf16.gmra.mrb[0].mxu0 %v1030
    %v1215 = vpop.f32.mrb[0].mxu0
    %v1216 = vadd.f32 0.0, %v1215
    %v1217 = vpop.f32.mrb[0].mxu0
    %v1218 = vpop.f32.mrb[0].mxu0
    %v1219 = vadd.f32 0.0, %v1218
    %v1220 = vpop.f32.mrb[0].mxu0
    %1221 = vmatprep.mubr.bf16.mxu0 0
    %1222 = vmatmul.mubr.bf16.gmra.mrb[0].mxu0 %v1031
    %v1223 = vpop.f32.mrb[0].mxu0
    %v1224 = vadd.f32 0.0, %v1223
    %v1225 = vpop.f32.mrb[0].mxu0
    %v1226 = vpop.f32.mrb[0].mxu0
    %v1227 = vadd.f32 0.0, %v1226
    %v1228 = vpop.f32.mrb[0].mxu0
    %1229 = vmatprep.mubr.bf16.mxu0 0
    %1230 = vmatmul.mubr.bf16.gmra.mrb[0].mxu0 %v1032
    %v1231 = vpop.f32.mrb[0].mxu0
    %v1232 = vadd.f32 0.0, %v1231
    %v1233 = vpop.f32.mrb[0].mxu0
    %v1234 = vpop.f32.mrb[0].mxu0
    %v1235 = vadd.f32 0.0, %v1234
    %v1236 = vpop.f32.mrb[0].mxu0
    %1237 = vmatprep.mubr.bf16.mxu0 0
    %1238 = vmatmul.mubr.bf16.gmra.mrb[0].mxu0 %v1033
    %v1239 = vpop.f32.mrb[0].mxu0
    %v1240 = vadd.f32 0.0, %v1239
    %v1241 = vpop.f32.mrb[0].mxu0
    %v1242 = vpop.f32.mrb[0].mxu0
    %v1243 = vadd.f32 0.0, %v1242
    %v1244 = vpop.f32.mrb[0].mxu0
    %1245 = vmatprep.mubr.bf16.mxu0 0
    %1246 = vmatmul.mubr.bf16.gmra.mrb[0].mxu0 %v1034
    %v1247 = vpop.f32.mrb[0].mxu0
    %v1248 = vadd.f32 0.0, %v1247
    %v1249 = vpop.f32.mrb[0].mxu0
    %v1250 = vpop.f32.mrb[0].mxu0
    %v1251 = vadd.f32 0.0, %v1250
    %v1252 = vpop.f32.mrb[0].mxu0
    %1253 = vmatprep.mubr.bf16.mxu0 0
    %1254 = vmatmul.mubr.bf16.gmra.mrb[0].mxu0 %v1035
    %v1255 = vpop.f32.mrb[0].mxu0
    %v1256 = vadd.f32 0.0, %v1255
    %v1257 = vpop.f32.mrb[0].mxu0
    %v1258 = vpop.f32.mrb[0].mxu0
    %v1259 = vadd.f32 0.0, %v1258
    %v1260 = vpop.f32.mrb[0].mxu0
    %1261 = vdwg.mxu0
    %v1262 = vadd.f32 %v862, %v1136
    %v1263 = vadd.f32 %v865, %v1139
    %v1264 = vadd.f32 %v870, %v1144
    %v1265 = vadd.f32 %v873, %v1147
    %v1266 = vadd.f32 %v878, %v1152
    %v1267 = vadd.f32 %v881, %v1155
    %v1268 = vadd.f32 %v886, %v1160
    %v1269 = vadd.f32 %v889, %v1163
    %v1270 = vadd.f32 %v894, %v1168
    %v1271 = vadd.f32 %v897, %v1171
    %v1272 = vadd.f32 %v902, %v1176
    %v1273 = vadd.f32 %v905, %v1179
    %v1274 = vadd.f32 %v910, %v1184
    %v1275 = vadd.f32 %v913, %v1187
    %v1276 = vadd.f32 %v918, %v1192
    %v1277 = vadd.f32 %v921, %v1195
    %v1278 = vadd.f32 %v926, %v1200
    %v1279 = vadd.f32 %v929, %v1203
    %v1280 = vadd.f32 %v934, %v1208
    %v1281 = vadd.f32 %v937, %v1211
    %v1282 = vadd.f32 %v942, %v1216
    %v1283 = vadd.f32 %v945, %v1219
    %v1284 = vadd.f32 %v950, %v1224
    %v1285 = vadd.f32 %v953, %v1227
    %v1286 = vadd.f32 %v958, %v1232
    %v1287 = vadd.f32 %v961, %v1235
    %v1288 = vadd.f32 %v966, %v1240
    %v1289 = vadd.f32 %v969, %v1243
    %v1290 = vadd.f32 %v974, %v1248
    %v1291 = vadd.f32 %v977, %v1251
    %v1292 = vadd.f32 %v982, %v1256
    %v1293 = vadd.f32 %v985, %v1259
    %v1294 = vld [vmem:[#allocation2 + $0xa] sm:$0xff]
    %v1295 = vld [vmem:[#allocation2 + $0x12] sm:$0xff]
    %v1296 = vld [vmem:[#allocation2 + $0x1a] sm:$0xff]
    %v1297 = vld [vmem:[#allocation2 + $0x22] sm:$0xff]
    %v1298 = vld [vmem:[#allocation2 + $0x2a] sm:$0xff]
    %v1299 = vld [vmem:[#allocation2 + $0x32] sm:$0xff]
    %v1300 = vld [vmem:[#allocation2 + $0x3a] sm:$0xff]
    %v1301 = vld [vmem:[#allocation2 + $0x42] sm:$0xff]
    %v1302 = vld [vmem:[#allocation2 + $0x4a] sm:$0xff]
    %v1303 = vld [vmem:[#allocation2 + $0x52] sm:$0xff]
    %v1304 = vld [vmem:[#allocation2 + $0x5a] sm:$0xff]
    %v1305 = vld [vmem:[#allocation2 + $0x62] sm:$0xff]
    %v1306 = vld [vmem:[#allocation2 + $0x6a] sm:$0xff]
    %v1307 = vld [vmem:[#allocation2 + $0x72] sm:$0xff]
    %v1308 = vld [vmem:[#allocation2 + $0x7a] sm:$0xff]
    %v1309 = vld [vmem:[#allocation2 + $0x82] sm:$0xff]
    %v1310 = vld [vmem:[#allocation2 + $0x8a] sm:$0xff]
    %v1311 = vld [vmem:[#allocation2 + $0x92] sm:$0xff]
    %v1312 = vld [vmem:[#allocation2 + $0x9a] sm:$0xff]
    %v1313 = vld [vmem:[#allocation2 + $0xa2] sm:$0xff]
    %v1314 = vld [vmem:[#allocation2 + $0xaa] sm:$0xff]
    %v1315 = vld [vmem:[#allocation2 + $0xb2] sm:$0xff]
    %v1316 = vld [vmem:[#allocation2 + $0xba] sm:$0xff]
    %v1317 = vld [vmem:[#allocation2 + $0xc2] sm:$0xff]
    %v1318 = vld [vmem:[#allocation2 + $0xca] sm:$0xff]
    %v1319 = vld [vmem:[#allocation2 + $0xd2] sm:$0xff]
    %v1320 = vld [vmem:[#allocation2 + $0xda] sm:$0xff]
    %v1321 = vld [vmem:[#allocation2 + $0xe2] sm:$0xff]
    %v1322 = vld [vmem:[#allocation2 + $0xea] sm:$0xff]
    %v1323 = vld [vmem:[#allocation2 + $0xf2] sm:$0xff]
    %v1324 = vld [vmem:[#allocation2 + $0xfa] sm:$0xff]
    %v1325 = vld [vmem:[#allocation2 + $0x102] sm:$0xff]
    %v1326 = vpack.c.bf16 %v1295, %v1294
    %v1327 = vpack.c.bf16 %v1297, %v1296
    %v1328 = vpack.c.bf16 %v1299, %v1298
    %v1329 = vpack.c.bf16 %v1301, %v1300
    %v1330 = vpack.c.bf16 %v1303, %v1302
    %v1331 = vpack.c.bf16 %v1305, %v1304
    %v1332 = vpack.c.bf16 %v1307, %v1306
    %v1333 = vpack.c.bf16 %v1309, %v1308
    %v1334 = vpack.c.bf16 %v1311, %v1310
    %v1335 = vpack.c.bf16 %v1313, %v1312
    %v1336 = vpack.c.bf16 %v1315, %v1314
    %v1337 = vpack.c.bf16 %v1317, %v1316
    %v1338 = vpack.c.bf16 %v1319, %v1318
    %v1339 = vpack.c.bf16 %v1321, %v1320
    %v1340 = vpack.c.bf16 %v1323, %v1322
    %v1341 = vpack.c.bf16 %v1325, %v1324
    %s1342 = scalar_lea.vmem %s2, 192
    %v1343 = vld [vmem:[%s1342] sm:$0xf]
    %v1344 = vld [vmem:[%s1342 + $0x4] sm:$0xf]
    %v1345 = vld [vmem:[%s1342 + $0x8] sm:$0xf]
    %v1346 = vld [vmem:[%s1342 + $0xc] sm:$0xf]
    %v1347 = vld [vmem:[%s1342 + $0x10] sm:$0xf]
    %v1348 = vld [vmem:[%s1342 + $0x14] sm:$0xf]
    %v1349 = vld [vmem:[%s1342 + $0x18] sm:$0xf]
    %v1350 = vld [vmem:[%s1342 + $0x1c] sm:$0xf]
    %v1351 = vld [vmem:[%s1342 + $0x20] sm:$0xf]
    %v1352 = vld [vmem:[%s1342 + $0x24] sm:$0xf]
    %v1353 = vld [vmem:[%s1342 + $0x28] sm:$0xf]
    %v1354 = vld [vmem:[%s1342 + $0x2c] sm:$0xf]
    %v1355 = vld [vmem:[%s1342 + $0x30] sm:$0xf]
    %v1356 = vld [vmem:[%s1342 + $0x34] sm:$0xf]
    %v1357 = vld [vmem:[%s1342 + $0x38] sm:$0xf]
    %v1358 = vld [vmem:[%s1342 + $0x3c] sm:$0xf]
    %v1375 = vunpack.c.l.b16 %v1343
    %v1376 = vunpack.c.l.b16 %v1344
    %v1377 = vunpack.c.l.b16 %v1345
    %v1378 = vunpack.c.l.b16 %v1346
    %v1379 = vunpack.c.l.b16 %v1347
    %v1380 = vunpack.c.l.b16 %v1348
    %v1381 = vunpack.c.l.b16 %v1349
    %v1382 = vunpack.c.l.b16 %v1350
    %v1383 = vunpack.c.l.b16 %v1351
    %v1384 = vunpack.c.l.b16 %v1352
    %v1385 = vunpack.c.l.b16 %v1353
    %v1386 = vunpack.c.l.b16 %v1354
    %v1387 = vunpack.c.l.b16 %v1355
    %v1388 = vunpack.c.l.b16 %v1356
    %v1389 = vunpack.c.l.b16 %v1357
    %v1390 = vunpack.c.l.b16 %v1358
    %v1391 = vpack.c.b16 %v1376, %v1375
    %v1392 = vpack.c.b16 %v1378, %v1377
    %v1393 = vpack.c.b16 %v1380, %v1379
    %v1394 = vpack.c.b16 %v1382, %v1381
    %v1395 = vpack.c.b16 %v1384, %v1383
    %v1396 = vpack.c.b16 %v1386, %v1385
    %v1397 = vpack.c.b16 %v1388, %v1387
    %v1398 = vpack.c.b16 %v1390, %v1389
    %1407 = vmatprep.subr.bf16.mxu0 0
    %1408 = vmatpush1.bf16.msra.mxu0 %v1391
    %1409 = vmatprep.subr.bf16.mxu0 0
    %1410 = vmatpush1.bf16.msra.mxu0 %v1392
    %1411 = vmatprep.subr.bf16.mxu0 0
    %1412 = vmatpush1.bf16.msra.mxu0 %v1393
    %1413 = vmatprep.subr.bf16.mxu0 0
    %1414 = vmatpush1.bf16.msra.mxu0 %v1394
    %1415 = vmatprep.subr.bf16.mxu0 0
    %1416 = vmatpush1.bf16.msra.mxu0 %v1395
    %1417 = vmatprep.subr.bf16.mxu0 0
    %1418 = vmatpush1.bf16.msra.mxu0 %v1396
    %1419 = vmatprep.subr.bf16.mxu0 0
    %1420 = vmatpush1.bf16.msra.mxu0 %v1397
    %1421 = vmatprep.subr.bf16.mxu0 0
    %1422 = vmatpush1.bf16.msra.mxu0 %v1398
    %1423 = vmatprep.subr.bf16.mxu0 0
    %1424 = vmatpush1.bf16.msra.mxu0 0
    %1425 = vmatprep.subr.bf16.mxu0 0
    %1426 = vmatpush1.bf16.msra.mxu0 0
    %1427 = vmatprep.subr.bf16.mxu0 0
    %1428 = vmatpush1.bf16.msra.mxu0 0
    %1429 = vmatprep.subr.bf16.mxu0 0
    %1430 = vmatpush1.bf16.msra.mxu0 0
    %1431 = vmatprep.subr.bf16.mxu0 0
    %1432 = vmatpush1.bf16.msra.mxu0 0
    %1433 = vmatprep.subr.bf16.mxu0 0
    %1434 = vmatpush1.bf16.msra.mxu0 0
    %1435 = vmatprep.subr.bf16.mxu0 0
    %1436 = vmatpush1.bf16.msra.mxu0 0
    %1437 = vmatprep.subr.bf16.mxu0 0
    %1438 = vmatpush1.bf16.msra.mxu0 0
    %1439 = vmatprep.mubr.bf16.mxu0 0
    %1440 = vmatmul.mubr.bf16.gmra.mrb[0].mxu0 %v1326
    %v1441 = vpop.f32.mrb[0].mxu0
    %v1442 = vadd.f32 0.0, %v1441
    %v1443 = vpop.f32.mrb[0].mxu0
    %v1444 = vpop.f32.mrb[0].mxu0
    %v1445 = vadd.f32 0.0, %v1444
    %v1446 = vpop.f32.mrb[0].mxu0
    %1447 = vmatprep.mubr.bf16.mxu0 0
    %1448 = vmatmul.mubr.bf16.gmra.mrb[0].mxu0 %v1327
    %v1449 = vpop.f32.mrb[0].mxu0
    %v1450 = vadd.f32 0.0, %v1449
    %v1451 = vpop.f32.mrb[0].mxu0
    %v1452 = vpop.f32.mrb[0].mxu0
    %v1453 = vadd.f32 0.0, %v1452
    %v1454 = vpop.f32.mrb[0].mxu0
    %1455 = vmatprep.mubr.bf16.mxu0 0
    %1456 = vmatmul.mubr.bf16.gmra.mrb[0].mxu0 %v1328
    %v1457 = vpop.f32.mrb[0].mxu0
    %v1458 = vadd.f32 0.0, %v1457
    %v1459 = vpop.f32.mrb[0].mxu0
    %v1460 = vpop.f32.mrb[0].mxu0
    %v1461 = vadd.f32 0.0, %v1460
    %v1462 = vpop.f32.mrb[0].mxu0
    %1463 = vmatprep.mubr.bf16.mxu0 0
    %1464 = vmatmul.mubr.bf16.gmra.mrb[0].mxu0 %v1329
    %v1465 = vpop.f32.mrb[0].mxu0
    %v1466 = vadd.f32 0.0, %v1465
    %v1467 = vpop.f32.mrb[0].mxu0
    %v1468 = vpop.f32.mrb[0].mxu0
    %v1469 = vadd.f32 0.0, %v1468
    %v1470 = vpop.f32.mrb[0].mxu0
    %1471 = vmatprep.mubr.bf16.mxu0 0
    %1472 = vmatmul.mubr.bf16.gmra.mrb[0].mxu0 %v1330
    %v1473 = vpop.f32.mrb[0].mxu0
    %v1474 = vadd.f32 0.0, %v1473
    %v1475 = vpop.f32.mrb[0].mxu0
    %v1476 = vpop.f32.mrb[0].mxu0
    %v1477 = vadd.f32 0.0, %v1476
    %v1478 = vpop.f32.mrb[0].mxu0
    %1479 = vmatprep.mubr.bf16.mxu0 0
    %1480 = vmatmul.mubr.bf16.gmra.mrb[0].mxu0 %v1331
    %v1481 = vpop.f32.mrb[0].mxu0
    %v1482 = vadd.f32 0.0, %v1481
    %v1483 = vpop.f32.mrb[0].mxu0
    %v1484 = vpop.f32.mrb[0].mxu0
    %v1485 = vadd.f32 0.0, %v1484
    %v1486 = vpop.f32.mrb[0].mxu0
    %1487 = vmatprep.mubr.bf16.mxu0 0
    %1488 = vmatmul.mubr.bf16.gmra.mrb[0].mxu0 %v1332
    %v1489 = vpop.f32.mrb[0].mxu0
    %v1490 = vadd.f32 0.0, %v1489
    %v1491 = vpop.f32.mrb[0].mxu0
    %v1492 = vpop.f32.mrb[0].mxu0
    %v1493 = vadd.f32 0.0, %v1492
    %v1494 = vpop.f32.mrb[0].mxu0
    %1495 = vmatprep.mubr.bf16.mxu0 0
    %1496 = vmatmul.mubr.bf16.gmra.mrb[0].mxu0 %v1333
    %v1497 = vpop.f32.mrb[0].mxu0
    %v1498 = vadd.f32 0.0, %v1497
    %v1499 = vpop.f32.mrb[0].mxu0
    %v1500 = vpop.f32.mrb[0].mxu0
    %v1501 = vadd.f32 0.0, %v1500
    %v1502 = vpop.f32.mrb[0].mxu0
    %1503 = vmatprep.mubr.bf16.mxu0 0
    %1504 = vmatmul.mubr.bf16.gmra.mrb[0].mxu0 %v1334
    %v1505 = vpop.f32.mrb[0].mxu0
    %v1506 = vadd.f32 0.0, %v1505
    %v1507 = vpop.f32.mrb[0].mxu0
    %v1508 = vpop.f32.mrb[0].mxu0
    %v1509 = vadd.f32 0.0, %v1508
    %v1510 = vpop.f32.mrb[0].mxu0
    %1511 = vmatprep.mubr.bf16.mxu0 0
    %1512 = vmatmul.mubr.bf16.gmra.mrb[0].mxu0 %v1335
    %v1513 = vpop.f32.mrb[0].mxu0
    %v1514 = vadd.f32 0.0, %v1513
    %v1515 = vpop.f32.mrb[0].mxu0
    %v1516 = vpop.f32.mrb[0].mxu0
    %v1517 = vadd.f32 0.0, %v1516
    %v1518 = vpop.f32.mrb[0].mxu0
    %1519 = vmatprep.mubr.bf16.mxu0 0
    %1520 = vmatmul.mubr.bf16.gmra.mrb[0].mxu0 %v1336
    %v1521 = vpop.f32.mrb[0].mxu0
    %v1522 = vadd.f32 0.0, %v1521
    %v1523 = vpop.f32.mrb[0].mxu0
    %v1524 = vpop.f32.mrb[0].mxu0
    %v1525 = vadd.f32 0.0, %v1524
    %v1526 = vpop.f32.mrb[0].mxu0
    %1527 = vmatprep.mubr.bf16.mxu0 0
    %1528 = vmatmul.mubr.bf16.gmra.mrb[0].mxu0 %v1337
    %v1529 = vpop.f32.mrb[0].mxu0
    %v1530 = vadd.f32 0.0, %v1529
    %v1531 = vpop.f32.mrb[0].mxu0
    %v1532 = vpop.f32.mrb[0].mxu0
    %v1533 = vadd.f32 0.0, %v1532
    %v1534 = vpop.f32.mrb[0].mxu0
    %1535 = vmatprep.mubr.bf16.mxu0 0
    %1536 = vmatmul.mubr.bf16.gmra.mrb[0].mxu0 %v1338
    %v1537 = vpop.f32.mrb[0].mxu0
    %v1538 = vadd.f32 0.0, %v1537
    %v1539 = vpop.f32.mrb[0].mxu0
    %v1540 = vpop.f32.mrb[0].mxu0
    %v1541 = vadd.f32 0.0, %v1540
    %v1542 = vpop.f32.mrb[0].mxu0
    %1543 = vmatprep.mubr.bf16.mxu0 0
    %1544 = vmatmul.mubr.bf16.gmra.mrb[0].mxu0 %v1339
    %v1545 = vpop.f32.mrb[0].mxu0
    %v1546 = vadd.f32 0.0, %v1545
    %v1547 = vpop.f32.mrb[0].mxu0
    %v1548 = vpop.f32.mrb[0].mxu0
    %v1549 = vadd.f32 0.0, %v1548
    %v1550 = vpop.f32.mrb[0].mxu0
    %1551 = vmatprep.mubr.bf16.mxu0 0
    %1552 = vmatmul.mubr.bf16.gmra.mrb[0].mxu0 %v1340
    %v1553 = vpop.f32.mrb[0].mxu0
    %v1554 = vadd.f32 0.0, %v1553
    %v1555 = vpop.f32.mrb[0].mxu0
    %v1556 = vpop.f32.mrb[0].mxu0
    %v1557 = vadd.f32 0.0, %v1556
    %v1558 = vpop.f32.mrb[0].mxu0
    %1559 = vmatprep.mubr.bf16.mxu0 0
    %1560 = vmatmul.mubr.bf16.gmra.mrb[0].mxu0 %v1341
    %v1561 = vpop.f32.mrb[0].mxu0
    %v1562 = vadd.f32 0.0, %v1561
    %v1563 = vpop.f32.mrb[0].mxu0
    %v1564 = vpop.f32.mrb[0].mxu0
    %v1565 = vadd.f32 0.0, %v1564
    %v1566 = vpop.f32.mrb[0].mxu0
    %1567 = vdwg.mxu0
    %v1568 = vadd.f32 %v1262, %v1442
    %v1569 = vadd.f32 %v1263, %v1445
    %v1570 = vadd.f32 %v1264, %v1450
    %v1571 = vadd.f32 %v1265, %v1453
    %v1572 = vadd.f32 %v1266, %v1458
    %v1573 = vadd.f32 %v1267, %v1461
    %v1574 = vadd.f32 %v1268, %v1466
    %v1575 = vadd.f32 %v1269, %v1469
    %v1576 = vadd.f32 %v1270, %v1474
    %v1577 = vadd.f32 %v1271, %v1477
    %v1578 = vadd.f32 %v1272, %v1482
    %v1579 = vadd.f32 %v1273, %v1485
    %v1580 = vadd.f32 %v1274, %v1490
    %v1581 = vadd.f32 %v1275, %v1493
    %v1582 = vadd.f32 %v1276, %v1498
    %v1583 = vadd.f32 %v1277, %v1501
    %v1584 = vadd.f32 %v1278, %v1506
    %v1585 = vadd.f32 %v1279, %v1509
    %v1586 = vadd.f32 %v1280, %v1514
    %v1587 = vadd.f32 %v1281, %v1517
    %v1588 = vadd.f32 %v1282, %v1522
    %v1589 = vadd.f32 %v1283, %v1525
    %v1590 = vadd.f32 %v1284, %v1530
    %v1591 = vadd.f32 %v1285, %v1533
    %v1592 = vadd.f32 %v1286, %v1538
    %v1593 = vadd.f32 %v1287, %v1541
    %v1594 = vadd.f32 %v1288, %v1546
    %v1595 = vadd.f32 %v1289, %v1549
    %v1596 = vadd.f32 %v1290, %v1554
    %v1597 = vadd.f32 %v1291, %v1557
    %v1598 = vadd.f32 %v1292, %v1562
    %v1599 = vadd.f32 %v1293, %v1565
    %v1600 = vld [vmem:[#allocation2 + $0xb] sm:$0xff]
    %v1601 = vld [vmem:[#allocation2 + $0x13] sm:$0xff]
    %v1602 = vld [vmem:[#allocation2 + $0x1b] sm:$0xff]
    %v1603 = vld [vmem:[#allocation2 + $0x23] sm:$0xff]
    %v1604 = vld [vmem:[#allocation2 + $0x2b] sm:$0xff]
    %v1605 = vld [vmem:[#allocation2 + $0x33] sm:$0xff]
    %v1606 = vld [vmem:[#allocation2 + $0x3b] sm:$0xff]
    %v1607 = vld [vmem:[#allocation2 + $0x43] sm:$0xff]
    %v1608 = vld [vmem:[#allocation2 + $0x4b] sm:$0xff]
    %v1609 = vld [vmem:[#allocation2 + $0x53] sm:$0xff]
    %v1610 = vld [vmem:[#allocation2 + $0x5b] sm:$0xff]
    %v1611 = vld [vmem:[#allocation2 + $0x63] sm:$0xff]
    %v1612 = vld [vmem:[#allocation2 + $0x6b] sm:$0xff]
    %v1613 = vld [vmem:[#allocation2 + $0x73] sm:$0xff]
    %v1614 = vld [vmem:[#allocation2 + $0x7b] sm:$0xff]
    %v1615 = vld [vmem:[#allocation2 + $0x83] sm:$0xff]
    %v1616 = vld [vmem:[#allocation2 + $0x8b] sm:$0xff]
    %v1617 = vld [vmem:[#allocation2 + $0x93] sm:$0xff]
    %v1618 = vld [vmem:[#allocation2 + $0x9b] sm:$0xff]
    %v1619 = vld [vmem:[#allocation2 + $0xa3] sm:$0xff]
    %v1620 = vld [vmem:[#allocation2 + $0xab] sm:$0xff]
    %v1621 = vld [vmem:[#allocation2 + $0xb3] sm:$0xff]
    %v1622 = vld [vmem:[#allocation2 + $0xbb] sm:$0xff]
    %v1623 = vld [vmem:[#allocation2 + $0xc3] sm:$0xff]
    %v1624 = vld [vmem:[#allocation2 + $0xcb] sm:$0xff]
    %v1625 = vld [vmem:[#allocation2 + $0xd3] sm:$0xff]
    %v1626 = vld [vmem:[#allocation2 + $0xdb] sm:$0xff]
    %v1627 = vld [vmem:[#allocation2 + $0xe3] sm:$0xff]
    %v1628 = vld [vmem:[#allocation2 + $0xeb] sm:$0xff]
    %v1629 = vld [vmem:[#allocation2 + $0xf3] sm:$0xff]
    %v1630 = vld [vmem:[#allocation2 + $0xfb] sm:$0xff]
    %v1631 = vld [vmem:[#allocation2 + $0x103] sm:$0xff]
    %v1632 = vpack.c.bf16 %v1601, %v1600
    %v1633 = vpack.c.bf16 %v1603, %v1602
    %v1634 = vpack.c.bf16 %v1605, %v1604
    %v1635 = vpack.c.bf16 %v1607, %v1606
    %v1636 = vpack.c.bf16 %v1609, %v1608
    %v1637 = vpack.c.bf16 %v1611, %v1610
    %v1638 = vpack.c.bf16 %v1613, %v1612
    %v1639 = vpack.c.bf16 %v1615, %v1614
    %v1640 = vpack.c.bf16 %v1617, %v1616
    %v1641 = vpack.c.bf16 %v1619, %v1618
    %v1642 = vpack.c.bf16 %v1621, %v1620
    %v1643 = vpack.c.bf16 %v1623, %v1622
    %v1644 = vpack.c.bf16 %v1625, %v1624
    %v1645 = vpack.c.bf16 %v1627, %v1626
    %v1646 = vpack.c.bf16 %v1629, %v1628
    %v1647 = vpack.c.bf16 %v1631, %v1630
    %s1648 = scalar_lea.vmem %s2, 256
    %v1649 = vld [vmem:[%s1648] sm:$0xf]
    %v1650 = vld [vmem:[%s1648 + $0x4] sm:$0xf]
    %v1651 = vld [vmem:[%s1648 + $0x8] sm:$0xf]
    %v1652 = vld [vmem:[%s1648 + $0xc] sm:$0xf]
    %v1653 = vld [vmem:[%s1648 + $0x10] sm:$0xf]
    %v1654 = vld [vmem:[%s1648 + $0x14] sm:$0xf]
    %v1655 = vld [vmem:[%s1648 + $0x18] sm:$0xf]
    %v1656 = vld [vmem:[%s1648 + $0x1c] sm:$0xf]
    %v1657 = vld [vmem:[%s1648 + $0x20] sm:$0xf]
    %v1658 = vld [vmem:[%s1648 + $0x24] sm:$0xf]
    %v1659 = vld [vmem:[%s1648 + $0x28] sm:$0xf]
    %v1660 = vld [vmem:[%s1648 + $0x2c] sm:$0xf]
    %v1661 = vld [vmem:[%s1648 + $0x30] sm:$0xf]
    %v1662 = vld [vmem:[%s1648 + $0x34] sm:$0xf]
    %v1663 = vld [vmem:[%s1648 + $0x38] sm:$0xf]
    %v1664 = vld [vmem:[%s1648 + $0x3c] sm:$0xf]
    %v1681 = vunpack.c.l.b16 %v1649
    %v1682 = vunpack.c.l.b16 %v1650
    %v1683 = vunpack.c.l.b16 %v1651
    %v1684 = vunpack.c.l.b16 %v1652
    %v1685 = vunpack.c.l.b16 %v1653
    %v1686 = vunpack.c.l.b16 %v1654
    %v1687 = vunpack.c.l.b16 %v1655
    %v1688 = vunpack.c.l.b16 %v1656
    %v1689 = vunpack.c.l.b16 %v1657
    %v1690 = vunpack.c.l.b16 %v1658
    %v1691 = vunpack.c.l.b16 %v1659
    %v1692 = vunpack.c.l.b16 %v1660
    %v1693 = vunpack.c.l.b16 %v1661
    %v1694 = vunpack.c.l.b16 %v1662
    %v1695 = vunpack.c.l.b16 %v1663
    %v1696 = vunpack.c.l.b16 %v1664
    %v1697 = vpack.c.b16 %v1682, %v1681
    %v1698 = vpack.c.b16 %v1684, %v1683
    %v1699 = vpack.c.b16 %v1686, %v1685
    %v1700 = vpack.c.b16 %v1688, %v1687
    %v1701 = vpack.c.b16 %v1690, %v1689
    %v1702 = vpack.c.b16 %v1692, %v1691
    %v1703 = vpack.c.b16 %v1694, %v1693
    %v1704 = vpack.c.b16 %v1696, %v1695
    %1713 = vmatprep.subr.bf16.mxu0 0
    %1714 = vmatpush1.bf16.msra.mxu0 %v1697
    %1715 = vmatprep.subr.bf16.mxu0 0
    %1716 = vmatpush1.bf16.msra.mxu0 %v1698
    %1717 = vmatprep.subr.bf16.mxu0 0
    %1718 = vmatpush1.bf16.msra.mxu0 %v1699
    %1719 = vmatprep.subr.bf16.mxu0 0
    %1720 = vmatpush1.bf16.msra.mxu0 %v1700
    %1721 = vmatprep.subr.bf16.mxu0 0
    %1722 = vmatpush1.bf16.msra.mxu0 %v1701
    %1723 = vmatprep.subr.bf16.mxu0 0
    %1724 = vmatpush1.bf16.msra.mxu0 %v1702
    %1725 = vmatprep.subr.bf16.mxu0 0
    %1726 = vmatpush1.bf16.msra.mxu0 %v1703
    %1727 = vmatprep.subr.bf16.mxu0 0
    %1728 = vmatpush1.bf16.msra.mxu0 %v1704
    %1729 = vmatprep.subr.bf16.mxu0 0
    %1730 = vmatpush1.bf16.msra.mxu0 0
    %1731 = vmatprep.subr.bf16.mxu0 0
    %1732 = vmatpush1.bf16.msra.mxu0 0
    %1733 = vmatprep.subr.bf16.mxu0 0
    %1734 = vmatpush1.bf16.msra.mxu0 0
    %1735 = vmatprep.subr.bf16.mxu0 0
    %1736 = vmatpush1.bf16.msra.mxu0 0
    %1737 = vmatprep.subr.bf16.mxu0 0
    %1738 = vmatpush1.bf16.msra.mxu0 0
    %1739 = vmatprep.subr.bf16.mxu0 0
    %1740 = vmatpush1.bf16.msra.mxu0 0
    %1741 = vmatprep.subr.bf16.mxu0 0
    %1742 = vmatpush1.bf16.msra.mxu0 0
    %1743 = vmatprep.subr.bf16.mxu0 0
    %1744 = vmatpush1.bf16.msra.mxu0 0
    %1745 = vmatprep.mubr.bf16.mxu0 0
    %1746 = vmatmul.mubr.bf16.gmra.mrb[0].mxu0 %v1632
    %v1747 = vpop.f32.mrb[0].mxu0
    %v1748 = vadd.f32 0.0, %v1747
    %v1749 = vpop.f32.mrb[0].mxu0
    %v1750 = vpop.f32.mrb[0].mxu0
    %v1751 = vadd.f32 0.0, %v1750
    %v1752 = vpop.f32.mrb[0].mxu0
    %1753 = vmatprep.mubr.bf16.mxu0 0
    %1754 = vmatmul.mubr.bf16.gmra.mrb[0].mxu0 %v1633
    %v1755 = vpop.f32.mrb[0].mxu0
    %v1756 = vadd.f32 0.0, %v1755
    %v1757 = vpop.f32.mrb[0].mxu0
    %v1758 = vpop.f32.mrb[0].mxu0
    %v1759 = vadd.f32 0.0, %v1758
    %v1760 = vpop.f32.mrb[0].mxu0
    %1761 = vmatprep.mubr.bf16.mxu0 0
    %1762 = vmatmul.mubr.bf16.gmra.mrb[0].mxu0 %v1634
    %v1763 = vpop.f32.mrb[0].mxu0
    %v1764 = vadd.f32 0.0, %v1763
    %v1765 = vpop.f32.mrb[0].mxu0
    %v1766 = vpop.f32.mrb[0].mxu0
    %v1767 = vadd.f32 0.0, %v1766
    %v1768 = vpop.f32.mrb[0].mxu0
    %1769 = vmatprep.mubr.bf16.mxu0 0
    %1770 = vmatmul.mubr.bf16.gmra.mrb[0].mxu0 %v1635
    %v1771 = vpop.f32.mrb[0].mxu0
    %v1772 = vadd.f32 0.0, %v1771
    %v1773 = vpop.f32.mrb[0].mxu0
    %v1774 = vpop.f32.mrb[0].mxu0
    %v1775 = vadd.f32 0.0, %v1774
    %v1776 = vpop.f32.mrb[0].mxu0
    %1777 = vmatprep.mubr.bf16.mxu0 0
    %1778 = vmatmul.mubr.bf16.gmra.mrb[0].mxu0 %v1636
    %v1779 = vpop.f32.mrb[0].mxu0
    %v1780 = vadd.f32 0.0, %v1779
    %v1781 = vpop.f32.mrb[0].mxu0
    %v1782 = vpop.f32.mrb[0].mxu0
    %v1783 = vadd.f32 0.0, %v1782
    %v1784 = vpop.f32.mrb[0].mxu0
    %1785 = vmatprep.mubr.bf16.mxu0 0
    %1786 = vmatmul.mubr.bf16.gmra.mrb[0].mxu0 %v1637
    %v1787 = vpop.f32.mrb[0].mxu0
    %v1788 = vadd.f32 0.0, %v1787
    %v1789 = vpop.f32.mrb[0].mxu0
    %v1790 = vpop.f32.mrb[0].mxu0
    %v1791 = vadd.f32 0.0, %v1790
    %v1792 = vpop.f32.mrb[0].mxu0
    %1793 = vmatprep.mubr.bf16.mxu0 0
    %1794 = vmatmul.mubr.bf16.gmra.mrb[0].mxu0 %v1638
    %v1795 = vpop.f32.mrb[0].mxu0
    %v1796 = vadd.f32 0.0, %v1795
    %v1797 = vpop.f32.mrb[0].mxu0
    %v1798 = vpop.f32.mrb[0].mxu0
    %v1799 = vadd.f32 0.0, %v1798
    %v1800 = vpop.f32.mrb[0].mxu0
    %1801 = vmatprep.mubr.bf16.mxu0 0
    %1802 = vmatmul.mubr.bf16.gmra.mrb[0].mxu0 %v1639
    %v1803 = vpop.f32.mrb[0].mxu0
    %v1804 = vadd.f32 0.0, %v1803
    %v1805 = vpop.f32.mrb[0].mxu0
    %v1806 = vpop.f32.mrb[0].mxu0
    %v1807 = vadd.f32 0.0, %v1806
    %v1808 = vpop.f32.mrb[0].mxu0
    %1809 = vmatprep.mubr.bf16.mxu0 0
    %1810 = vmatmul.mubr.bf16.gmra.mrb[0].mxu0 %v1640
    %v1811 = vpop.f32.mrb[0].mxu0
    %v1812 = vadd.f32 0.0, %v1811
    %v1813 = vpop.f32.mrb[0].mxu0
    %v1814 = vpop.f32.mrb[0].mxu0
    %v1815 = vadd.f32 0.0, %v1814
    %v1816 = vpop.f32.mrb[0].mxu0
    %1817 = vmatprep.mubr.bf16.mxu0 0
    %1818 = vmatmul.mubr.bf16.gmra.mrb[0].mxu0 %v1641
    %v1819 = vpop.f32.mrb[0].mxu0
    %v1820 = vadd.f32 0.0, %v1819
    %v1821 = vpop.f32.mrb[0].mxu0
    %v1822 = vpop.f32.mrb[0].mxu0
    %v1823 = vadd.f32 0.0, %v1822
    %v1824 = vpop.f32.mrb[0].mxu0
    %1825 = vmatprep.mubr.bf16.mxu0 0
    %1826 = vmatmul.mubr.bf16.gmra.mrb[0].mxu0 %v1642
    %v1827 = vpop.f32.mrb[0].mxu0
    %v1828 = vadd.f32 0.0, %v1827
    %v1829 = vpop.f32.mrb[0].mxu0
    %v1830 = vpop.f32.mrb[0].mxu0
    %v1831 = vadd.f32 0.0, %v1830
    %v1832 = vpop.f32.mrb[0].mxu0
    %1833 = vmatprep.mubr.bf16.mxu0 0
    %1834 = vmatmul.mubr.bf16.gmra.mrb[0].mxu0 %v1643
    %v1835 = vpop.f32.mrb[0].mxu0
    %v1836 = vadd.f32 0.0, %v1835
    %v1837 = vpop.f32.mrb[0].mxu0
    %v1838 = vpop.f32.mrb[0].mxu0
    %v1839 = vadd.f32 0.0, %v1838
    %v1840 = vpop.f32.mrb[0].mxu0
    %1841 = vmatprep.mubr.bf16.mxu0 0
    %1842 = vmatmul.mubr.bf16.gmra.mrb[0].mxu0 %v1644
    %v1843 = vpop.f32.mrb[0].mxu0
    %v1844 = vadd.f32 0.0, %v1843
    %v1845 = vpop.f32.mrb[0].mxu0
    %v1846 = vpop.f32.mrb[0].mxu0
    %v1847 = vadd.f32 0.0, %v1846
    %v1848 = vpop.f32.mrb[0].mxu0
    %1849 = vmatprep.mubr.bf16.mxu0 0
    %1850 = vmatmul.mubr.bf16.gmra.mrb[0].mxu0 %v1645
    %v1851 = vpop.f32.mrb[0].mxu0
    %v1852 = vadd.f32 0.0, %v1851
    %v1853 = vpop.f32.mrb[0].mxu0
    %v1854 = vpop.f32.mrb[0].mxu0
    %v1855 = vadd.f32 0.0, %v1854
    %v1856 = vpop.f32.mrb[0].mxu0
    %1857 = vmatprep.mubr.bf16.mxu0 0
    %1858 = vmatmul.mubr.bf16.gmra.mrb[0].mxu0 %v1646
    %v1859 = vpop.f32.mrb[0].mxu0
    %v1860 = vadd.f32 0.0, %v1859
    %v1861 = vpop.f32.mrb[0].mxu0
    %v1862 = vpop.f32.mrb[0].mxu0
    %v1863 = vadd.f32 0.0, %v1862
    %v1864 = vpop.f32.mrb[0].mxu0
    %1865 = vmatprep.mubr.bf16.mxu0 0
    %1866 = vmatmul.mubr.bf16.gmra.mrb[0].mxu0 %v1647
    %v1867 = vpop.f32.mrb[0].mxu0
    %v1868 = vadd.f32 0.0, %v1867
    %v1869 = vpop.f32.mrb[0].mxu0
    %v1870 = vpop.f32.mrb[0].mxu0
    %v1871 = vadd.f32 0.0, %v1870
    %v1872 = vpop.f32.mrb[0].mxu0
    %1873 = vdwg.mxu0
    %v1874 = vadd.f32 %v1568, %v1748
    %v1875 = vadd.f32 %v1569, %v1751
    %v1876 = vadd.f32 %v1570, %v1756
    %v1877 = vadd.f32 %v1571, %v1759
    %v1878 = vadd.f32 %v1572, %v1764
    %v1879 = vadd.f32 %v1573, %v1767
    %v1880 = vadd.f32 %v1574, %v1772
    %v1881 = vadd.f32 %v1575, %v1775
    %v1882 = vadd.f32 %v1576, %v1780
    %v1883 = vadd.f32 %v1577, %v1783
    %v1884 = vadd.f32 %v1578, %v1788
    %v1885 = vadd.f32 %v1579, %v1791
    %v1886 = vadd.f32 %v1580, %v1796
    %v1887 = vadd.f32 %v1581, %v1799
    %v1888 = vadd.f32 %v1582, %v1804
    %v1889 = vadd.f32 %v1583, %v1807
    %v1890 = vadd.f32 %v1584, %v1812
    %v1891 = vadd.f32 %v1585, %v1815
    %v1892 = vadd.f32 %v1586, %v1820
    %v1893 = vadd.f32 %v1587, %v1823
    %v1894 = vadd.f32 %v1588, %v1828
    %v1895 = vadd.f32 %v1589, %v1831
    %v1896 = vadd.f32 %v1590, %v1836
    %v1897 = vadd.f32 %v1591, %v1839
    %v1898 = vadd.f32 %v1592, %v1844
    %v1899 = vadd.f32 %v1593, %v1847
    %v1900 = vadd.f32 %v1594, %v1852
    %v1901 = vadd.f32 %v1595, %v1855
    %v1902 = vadd.f32 %v1596, %v1860
    %v1903 = vadd.f32 %v1597, %v1863
    %v1904 = vadd.f32 %v1598, %v1868
    %v1905 = vadd.f32 %v1599, %v1871
    %v1906 = vld [vmem:[#allocation2 + $0xc] sm:$0xff]
    %v1907 = vld [vmem:[#allocation2 + $0x14] sm:$0xff]
    %v1908 = vld [vmem:[#allocation2 + $0x1c] sm:$0xff]
    %v1909 = vld [vmem:[#allocation2 + $0x24] sm:$0xff]
    %v1910 = vld [vmem:[#allocation2 + $0x2c] sm:$0xff]
    %v1911 = vld [vmem:[#allocation2 + $0x34] sm:$0xff]
    %v1912 = vld [vmem:[#allocation2 + $0x3c] sm:$0xff]
    %v1913 = vld [vmem:[#allocation2 + $0x44] sm:$0xff]
    %v1914 = vld [vmem:[#allocation2 + $0x4c] sm:$0xff]
    %v1915 = vld [vmem:[#allocation2 + $0x54] sm:$0xff]
    %v1916 = vld [vmem:[#allocation2 + $0x5c] sm:$0xff]
    %v1917 = vld [vmem:[#allocation2 + $0x64] sm:$0xff]
    %v1918 = vld [vmem:[#allocation2 + $0x6c] sm:$0xff]
    %v1919 = vld [vmem:[#allocation2 + $0x74] sm:$0xff]
    %v1920 = vld [vmem:[#allocation2 + $0x7c] sm:$0xff]
    %v1921 = vld [vmem:[#allocation2 + $0x84] sm:$0xff]
    %v1922 = vld [vmem:[#allocation2 + $0x8c] sm:$0xff]
    %v1923 = vld [vmem:[#allocation2 + $0x94] sm:$0xff]
    %v1924 = vld [vmem:[#allocation2 + $0x9c] sm:$0xff]
    %v1925 = vld [vmem:[#allocation2 + $0xa4] sm:$0xff]
    %v1926 = vld [vmem:[#allocation2 + $0xac] sm:$0xff]
    %v1927 = vld [vmem:[#allocation2 + $0xb4] sm:$0xff]
    %v1928 = vld [vmem:[#allocation2 + $0xbc] sm:$0xff]
    %v1929 = vld [vmem:[#allocation2 + $0xc4] sm:$0xff]
    %v1930 = vld [vmem:[#allocation2 + $0xcc] sm:$0xff]
    %v1931 = vld [vmem:[#allocation2 + $0xd4] sm:$0xff]
    %v1932 = vld [vmem:[#allocation2 + $0xdc] sm:$0xff]
    %v1933 = vld [vmem:[#allocation2 + $0xe4] sm:$0xff]
    %v1934 = vld [vmem:[#allocation2 + $0xec] sm:$0xff]
    %v1935 = vld [vmem:[#allocation2 + $0xf4] sm:$0xff]
    %v1936 = vld [vmem:[#allocation2 + $0xfc] sm:$0xff]
    %v1937 = vld [vmem:[#allocation2 + $0x104] sm:$0xff]
    %v1938 = vpack.c.bf16 %v1907, %v1906
    %v1939 = vpack.c.bf16 %v1909, %v1908
    %v1940 = vpack.c.bf16 %v1911, %v1910
    %v1941 = vpack.c.bf16 %v1913, %v1912
    %v1942 = vpack.c.bf16 %v1915, %v1914
    %v1943 = vpack.c.bf16 %v1917, %v1916
    %v1944 = vpack.c.bf16 %v1919, %v1918
    %v1945 = vpack.c.bf16 %v1921, %v1920
    %v1946 = vpack.c.bf16 %v1923, %v1922
    %v1947 = vpack.c.bf16 %v1925, %v1924
    %v1948 = vpack.c.bf16 %v1927, %v1926
    %v1949 = vpack.c.bf16 %v1929, %v1928
    %v1950 = vpack.c.bf16 %v1931, %v1930
    %v1951 = vpack.c.bf16 %v1933, %v1932
    %v1952 = vpack.c.bf16 %v1935, %v1934
    %v1953 = vpack.c.bf16 %v1937, %v1936
    %s1954 = scalar_lea.vmem %s2, 320
    %v1955 = vld [vmem:[%s1954] sm:$0xf]
    %v1956 = vld [vmem:[%s1954 + $0x4] sm:$0xf]
    %v1957 = vld [vmem:[%s1954 + $0x8] sm:$0xf]
    %v1958 = vld [vmem:[%s1954 + $0xc] sm:$0xf]
    %v1959 = vld [vmem:[%s1954 + $0x10] sm:$0xf]
    %v1960 = vld [vmem:[%s1954 + $0x14] sm:$0xf]
    %v1961 = vld [vmem:[%s1954 + $0x18] sm:$0xf]
    %v1962 = vld [vmem:[%s1954 + $0x1c] sm:$0xf]
    %v1963 = vld [vmem:[%s1954 + $0x20] sm:$0xf]
    %v1964 = vld [vmem:[%s1954 + $0x24] sm:$0xf]
    %v1965 = vld [vmem:[%s1954 + $0x28] sm:$0xf]
    %v1966 = vld [vmem:[%s1954 + $0x2c] sm:$0xf]
    %v1967 = vld [vmem:[%s1954 + $0x30] sm:$0xf]
    %v1968 = vld [vmem:[%s1954 + $0x34] sm:$0xf]
    %v1969 = vld [vmem:[%s1954 + $0x38] sm:$0xf]
    %v1970 = vld [vmem:[%s1954 + $0x3c] sm:$0xf]
    %v1987 = vunpack.c.l.b16 %v1955
    %v1988 = vunpack.c.l.b16 %v1956
    %v1989 = vunpack.c.l.b16 %v1957
    %v1990 = vunpack.c.l.b16 %v1958
    %v1991 = vunpack.c.l.b16 %v1959
    %v1992 = vunpack.c.l.b16 %v1960
    %v1993 = vunpack.c.l.b16 %v1961
    %v1994 = vunpack.c.l.b16 %v1962
    %v1995 = vunpack.c.l.b16 %v1963
    %v1996 = vunpack.c.l.b16 %v1964
    %v1997 = vunpack.c.l.b16 %v1965
    %v1998 = vunpack.c.l.b16 %v1966
    %v1999 = vunpack.c.l.b16 %v1967
    %v2000 = vunpack.c.l.b16 %v1968
    %v2001 = vunpack.c.l.b16 %v1969
    %v2002 = vunpack.c.l.b16 %v1970
    %v2003 = vpack.c.b16 %v1988, %v1987
    %v2004 = vpack.c.b16 %v1990, %v1989
    %v2005 = vpack.c.b16 %v1992, %v1991
    %v2006 = vpack.c.b16 %v1994, %v1993
    %v2007 = vpack.c.b16 %v1996, %v1995
    %v2008 = vpack.c.b16 %v1998, %v1997
    %v2009 = vpack.c.b16 %v2000, %v1999
    %v2010 = vpack.c.b16 %v2002, %v2001
    %2019 = vmatprep.subr.bf16.mxu0 0
    %2020 = vmatpush1.bf16.msra.mxu0 %v2003
    %2021 = vmatprep.subr.bf16.mxu0 0
    %2022 = vmatpush1.bf16.msra.mxu0 %v2004
    %2023 = vmatprep.subr.bf16.mxu0 0
    %2024 = vmatpush1.bf16.msra.mxu0 %v2005
    %2025 = vmatprep.subr.bf16.mxu0 0
    %2026 = vmatpush1.bf16.msra.mxu0 %v2006
    %2027 = vmatprep.subr.bf16.mxu0 0
    %2028 = vmatpush1.bf16.msra.mxu0 %v2007
    %2029 = vmatprep.subr.bf16.mxu0 0
    %2030 = vmatpush1.bf16.msra.mxu0 %v2008
    %2031 = vmatprep.subr.bf16.mxu0 0
    %2032 = vmatpush1.bf16.msra.mxu0 %v2009
    %2033 = vmatprep.subr.bf16.mxu0 0
    %2034 = vmatpush1.bf16.msra.mxu0 %v2010
    %2035 = vmatprep.subr.bf16.mxu0 0
    %2036 = vmatpush1.bf16.msra.mxu0 0
    %2037 = vmatprep.subr.bf16.mxu0 0
    %2038 = vmatpush1.bf16.msra.mxu0 0
    %2039 = vmatprep.subr.bf16.mxu0 0
    %2040 = vmatpush1.bf16.msra.mxu0 0
    %2041 = vmatprep.subr.bf16.mxu0 0
    %2042 = vmatpush1.bf16.msra.mxu0 0
    %2043 = vmatprep.subr.bf16.mxu0 0
    %2044 = vmatpush1.bf16.msra.mxu0 0
    %2045 = vmatprep.subr.bf16.mxu0 0
    %2046 = vmatpush1.bf16.msra.mxu0 0
    %2047 = vmatprep.subr.bf16.mxu0 0
    %2048 = vmatpush1.bf16.msra.mxu0 0
    %2049 = vmatprep.subr.bf16.mxu0 0
    %2050 = vmatpush1.bf16.msra.mxu0 0
    %2051 = vmatprep.mubr.bf16.mxu0 0
    %2052 = vmatmul.mubr.bf16.gmra.mrb[0].mxu0 %v1938
    %v2053 = vpop.f32.mrb[0].mxu0
    %v2054 = vadd.f32 0.0, %v2053
    %v2055 = vpop.f32.mrb[0].mxu0
    %v2056 = vpop.f32.mrb[0].mxu0
    %v2057 = vadd.f32 0.0, %v2056
    %v2058 = vpop.f32.mrb[0].mxu0
    %2059 = vmatprep.mubr.bf16.mxu0 0
    %2060 = vmatmul.mubr.bf16.gmra.mrb[0].mxu0 %v1939
    %v2061 = vpop.f32.mrb[0].mxu0
    %v2062 = vadd.f32 0.0, %v2061
    %v2063 = vpop.f32.mrb[0].mxu0
    %v2064 = vpop.f32.mrb[0].mxu0
    %v2065 = vadd.f32 0.0, %v2064
    %v2066 = vpop.f32.mrb[0].mxu0
    %2067 = vmatprep.mubr.bf16.mxu0 0
    %2068 = vmatmul.mubr.bf16.gmra.mrb[0].mxu0 %v1940
    %v2069 = vpop.f32.mrb[0].mxu0
    %v2070 = vadd.f32 0.0, %v2069
    %v2071 = vpop.f32.mrb[0].mxu0
    %v2072 = vpop.f32.mrb[0].mxu0
    %v2073 = vadd.f32 0.0, %v2072
    %v2074 = vpop.f32.mrb[0].mxu0
    %2075 = vmatprep.mubr.bf16.mxu0 0
    %2076 = vmatmul.mubr.bf16.gmra.mrb[0].mxu0 %v1941
    %v2077 = vpop.f32.mrb[0].mxu0
    %v2078 = vadd.f32 0.0, %v2077
    %v2079 = vpop.f32.mrb[0].mxu0
    %v2080 = vpop.f32.mrb[0].mxu0
    %v2081 = vadd.f32 0.0, %v2080
    %v2082 = vpop.f32.mrb[0].mxu0
    %2083 = vmatprep.mubr.bf16.mxu0 0
    %2084 = vmatmul.mubr.bf16.gmra.mrb[0].mxu0 %v1942
    %v2085 = vpop.f32.mrb[0].mxu0
    %v2086 = vadd.f32 0.0, %v2085
    %v2087 = vpop.f32.mrb[0].mxu0
    %v2088 = vpop.f32.mrb[0].mxu0
    %v2089 = vadd.f32 0.0, %v2088
    %v2090 = vpop.f32.mrb[0].mxu0
    %2091 = vmatprep.mubr.bf16.mxu0 0
    %2092 = vmatmul.mubr.bf16.gmra.mrb[0].mxu0 %v1943
    %v2093 = vpop.f32.mrb[0].mxu0
    %v2094 = vadd.f32 0.0, %v2093
    %v2095 = vpop.f32.mrb[0].mxu0
    %v2096 = vpop.f32.mrb[0].mxu0
    %v2097 = vadd.f32 0.0, %v2096
    %v2098 = vpop.f32.mrb[0].mxu0
    %2099 = vmatprep.mubr.bf16.mxu0 0
    %2100 = vmatmul.mubr.bf16.gmra.mrb[0].mxu0 %v1944
    %v2101 = vpop.f32.mrb[0].mxu0
    %v2102 = vadd.f32 0.0, %v2101
    %v2103 = vpop.f32.mrb[0].mxu0
    %v2104 = vpop.f32.mrb[0].mxu0
    %v2105 = vadd.f32 0.0, %v2104
    %v2106 = vpop.f32.mrb[0].mxu0
    %2107 = vmatprep.mubr.bf16.mxu0 0
    %2108 = vmatmul.mubr.bf16.gmra.mrb[0].mxu0 %v1945
    %v2109 = vpop.f32.mrb[0].mxu0
    %v2110 = vadd.f32 0.0, %v2109
    %v2111 = vpop.f32.mrb[0].mxu0
    %v2112 = vpop.f32.mrb[0].mxu0
    %v2113 = vadd.f32 0.0, %v2112
    %v2114 = vpop.f32.mrb[0].mxu0
    %2115 = vmatprep.mubr.bf16.mxu0 0
    %2116 = vmatmul.mubr.bf16.gmra.mrb[0].mxu0 %v1946
    %v2117 = vpop.f32.mrb[0].mxu0
    %v2118 = vadd.f32 0.0, %v2117
    %v2119 = vpop.f32.mrb[0].mxu0
    %v2120 = vpop.f32.mrb[0].mxu0
    %v2121 = vadd.f32 0.0, %v2120
    %v2122 = vpop.f32.mrb[0].mxu0
    %2123 = vmatprep.mubr.bf16.mxu0 0
    %2124 = vmatmul.mubr.bf16.gmra.mrb[0].mxu0 %v1947
    %v2125 = vpop.f32.mrb[0].mxu0
    %v2126 = vadd.f32 0.0, %v2125
    %v2127 = vpop.f32.mrb[0].mxu0
    %v2128 = vpop.f32.mrb[0].mxu0
    %v2129 = vadd.f32 0.0, %v2128
    %v2130 = vpop.f32.mrb[0].mxu0
    %2131 = vmatprep.mubr.bf16.mxu0 0
    %2132 = vmatmul.mubr.bf16.gmra.mrb[0].mxu0 %v1948
    %v2133 = vpop.f32.mrb[0].mxu0
    %v2134 = vadd.f32 0.0, %v2133
    %v2135 = vpop.f32.mrb[0].mxu0
    %v2136 = vpop.f32.mrb[0].mxu0
    %v2137 = vadd.f32 0.0, %v2136
    %v2138 = vpop.f32.mrb[0].mxu0
    %2139 = vmatprep.mubr.bf16.mxu0 0
    %2140 = vmatmul.mubr.bf16.gmra.mrb[0].mxu0 %v1949
    %v2141 = vpop.f32.mrb[0].mxu0
    %v2142 = vadd.f32 0.0, %v2141
    %v2143 = vpop.f32.mrb[0].mxu0
    %v2144 = vpop.f32.mrb[0].mxu0
    %v2145 = vadd.f32 0.0, %v2144
    %v2146 = vpop.f32.mrb[0].mxu0
    %2147 = vmatprep.mubr.bf16.mxu0 0
    %2148 = vmatmul.mubr.bf16.gmra.mrb[0].mxu0 %v1950
    %v2149 = vpop.f32.mrb[0].mxu0
    %v2150 = vadd.f32 0.0, %v2149
    %v2151 = vpop.f32.mrb[0].mxu0
    %v2152 = vpop.f32.mrb[0].mxu0
    %v2153 = vadd.f32 0.0, %v2152
    %v2154 = vpop.f32.mrb[0].mxu0
    %2155 = vmatprep.mubr.bf16.mxu0 0
    %2156 = vmatmul.mubr.bf16.gmra.mrb[0].mxu0 %v1951
    %v2157 = vpop.f32.mrb[0].mxu0
    %v2158 = vadd.f32 0.0, %v2157
    %v2159 = vpop.f32.mrb[0].mxu0
    %v2160 = vpop.f32.mrb[0].mxu0
    %v2161 = vadd.f32 0.0, %v2160
    %v2162 = vpop.f32.mrb[0].mxu0
    %2163 = vmatprep.mubr.bf16.mxu0 0
    %2164 = vmatmul.mubr.bf16.gmra.mrb[0].mxu0 %v1952
    %v2165 = vpop.f32.mrb[0].mxu0
    %v2166 = vadd.f32 0.0, %v2165
    %v2167 = vpop.f32.mrb[0].mxu0
    %v2168 = vpop.f32.mrb[0].mxu0
    %v2169 = vadd.f32 0.0, %v2168
    %v2170 = vpop.f32.mrb[0].mxu0
    %2171 = vmatprep.mubr.bf16.mxu0 0
    %2172 = vmatmul.mubr.bf16.gmra.mrb[0].mxu0 %v1953
    %v2173 = vpop.f32.mrb[0].mxu0
    %v2174 = vadd.f32 0.0, %v2173
    %v2175 = vpop.f32.mrb[0].mxu0
    %v2176 = vpop.f32.mrb[0].mxu0
    %v2177 = vadd.f32 0.0, %v2176
    %v2178 = vpop.f32.mrb[0].mxu0
    %2179 = vdwg.mxu0
    %v2180 = vadd.f32 %v1874, %v2054
    %v2181 = vadd.f32 %v1875, %v2057
    %v2182 = vadd.f32 %v1876, %v2062
    %v2183 = vadd.f32 %v1877, %v2065
    %v2184 = vadd.f32 %v1878, %v2070
    %v2185 = vadd.f32 %v1879, %v2073
    %v2186 = vadd.f32 %v1880, %v2078
    %v2187 = vadd.f32 %v1881, %v2081
    %v2188 = vadd.f32 %v1882, %v2086
    %v2189 = vadd.f32 %v1883, %v2089
    %v2190 = vadd.f32 %v1884, %v2094
    %v2191 = vadd.f32 %v1885, %v2097
    %v2192 = vadd.f32 %v1886, %v2102
    %v2193 = vadd.f32 %v1887, %v2105
    %v2194 = vadd.f32 %v1888, %v2110
    %v2195 = vadd.f32 %v1889, %v2113
    %v2196 = vadd.f32 %v1890, %v2118
    %v2197 = vadd.f32 %v1891, %v2121
    %v2198 = vadd.f32 %v1892, %v2126
    %v2199 = vadd.f32 %v1893, %v2129
    %v2200 = vadd.f32 %v1894, %v2134
    %v2201 = vadd.f32 %v1895, %v2137
    %v2202 = vadd.f32 %v1896, %v2142
    %v2203 = vadd.f32 %v1897, %v2145
    %v2204 = vadd.f32 %v1898, %v2150
    %v2205 = vadd.f32 %v1899, %v2153
    %v2206 = vadd.f32 %v1900, %v2158
    %v2207 = vadd.f32 %v1901, %v2161
    %v2208 = vadd.f32 %v1902, %v2166
    %v2209 = vadd.f32 %v1903, %v2169
    %v2210 = vadd.f32 %v1904, %v2174
    %v2211 = vadd.f32 %v1905, %v2177
    %v2212 = vld [vmem:[#allocation2 + $0x14] sm:$0xff]
    %v2213 = vld [vmem:[#allocation2 + $0x1c] sm:$0xff]
    %v2214 = vld [vmem:[#allocation2 + $0x24] sm:$0xff]
    %v2215 = vld [vmem:[#allocation2 + $0x2c] sm:$0xff]
    %v2216 = vld [vmem:[#allocation2 + $0x34] sm:$0xff]
    %v2217 = vld [vmem:[#allocation2 + $0x3c] sm:$0xff]
    %v2218 = vld [vmem:[#allocation2 + $0x44] sm:$0xff]
    %v2219 = vld [vmem:[#allocation2 + $0x4c] sm:$0xff]
    %v2220 = vld [vmem:[#allocation2 + $0x54] sm:$0xff]
    %v2221 = vld [vmem:[#allocation2 + $0x5c] sm:$0xff]
    %v2222 = vld [vmem:[#allocation2 + $0x64] sm:$0xff]
    %v2223 = vld [vmem:[#allocation2 + $0x6c] sm:$0xff]
    %v2224 = vld [vmem:[#allocation2 + $0x74] sm:$0xff]
    %v2225 = vld [vmem:[#allocation2 + $0x7c] sm:$0xff]
    %v2226 = vld [vmem:[#allocation2 + $0x84] sm:$0xff]
    %v2227 = vld [vmem:[#allocation2 + $0x8c] sm:$0xff]
    %v2228 = vld [vmem:[#allocation2 + $0x94] sm:$0xff]
    %v2229 = vld [vmem:[#allocation2 + $0x9c] sm:$0xff]
    %v2230 = vld [vmem:[#allocation2 + $0xa4] sm:$0xff]
    %v2231 = vld [vmem:[#allocation2 + $0xac] sm:$0xff]
    %v2232 = vld [vmem:[#allocation2 + $0xb4] sm:$0xff]
    %v2233 = vld [vmem:[#allocation2 + $0xbc] sm:$0xff]
    %v2234 = vld [vmem:[#allocation2 + $0xc4] sm:$0xff]
    %v2235 = vld [vmem:[#allocation2 + $0xcc] sm:$0xff]
    %v2236 = vld [vmem:[#allocation2 + $0xd4] sm:$0xff]
    %v2237 = vld [vmem:[#allocation2 + $0xdc] sm:$0xff]
    %v2238 = vld [vmem:[#allocation2 + $0xe4] sm:$0xff]
    %v2239 = vld [vmem:[#allocation2 + $0xec] sm:$0xff]
    %v2240 = vld [vmem:[#allocation2 + $0xf4] sm:$0xff]
    %v2241 = vld [vmem:[#allocation2 + $0xfc] sm:$0xff]
    %v2242 = vld [vmem:[#allocation2 + $0x104] sm:$0xff]
    %v2243 = vld [vmem:[#allocation2 + $0x10c] sm:$0xff]
    %v2244 = vpack.c.bf16 %v2213, %v2212
    %v2245 = vpack.c.bf16 %v2215, %v2214
    %v2246 = vpack.c.bf16 %v2217, %v2216
    %v2247 = vpack.c.bf16 %v2219, %v2218
    %v2248 = vpack.c.bf16 %v2221, %v2220
    %v2249 = vpack.c.bf16 %v2223, %v2222
    %v2250 = vpack.c.bf16 %v2225, %v2224
    %v2251 = vpack.c.bf16 %v2227, %v2226
    %v2252 = vpack.c.bf16 %v2229, %v2228
    %v2253 = vpack.c.bf16 %v2231, %v2230
    %v2254 = vpack.c.bf16 %v2233, %v2232
    %v2255 = vpack.c.bf16 %v2235, %v2234
    %v2256 = vpack.c.bf16 %v2237, %v2236
    %v2257 = vpack.c.bf16 %v2239, %v2238
    %v2258 = vpack.c.bf16 %v2241, %v2240
    %v2259 = vpack.c.bf16 %v2243, %v2242
    %s2260 = scalar_lea.vmem %s2, 384
    %v2261 = vld [vmem:[%s2260] sm:$0xf]
    %v2262 = vld [vmem:[%s2260 + $0x4] sm:$0xf]
    %v2263 = vld [vmem:[%s2260 + $0x8] sm:$0xf]
    %v2264 = vld [vmem:[%s2260 + $0xc] sm:$0xf]
    %v2265 = vld [vmem:[%s2260 + $0x10] sm:$0xf]
    %v2266 = vld [vmem:[%s2260 + $0x14] sm:$0xf]
    %v2267 = vld [vmem:[%s2260 + $0x18] sm:$0xf]
    %v2268 = vld [vmem:[%s2260 + $0x1c] sm:$0xf]
    %v2269 = vld [vmem:[%s2260 + $0x20] sm:$0xf]
    %v2270 = vld [vmem:[%s2260 + $0x24] sm:$0xf]
    %v2271 = vld [vmem:[%s2260 + $0x28] sm:$0xf]
    %v2272 = vld [vmem:[%s2260 + $0x2c] sm:$0xf]
    %v2273 = vld [vmem:[%s2260 + $0x30] sm:$0xf]
    %v2274 = vld [vmem:[%s2260 + $0x34] sm:$0xf]
    %v2275 = vld [vmem:[%s2260 + $0x38] sm:$0xf]
    %v2276 = vld [vmem:[%s2260 + $0x3c] sm:$0xf]
    %v2293 = vunpack.c.l.b16 %v2261
    %v2294 = vunpack.c.l.b16 %v2262
    %v2295 = vunpack.c.l.b16 %v2263
    %v2296 = vunpack.c.l.b16 %v2264
    %v2297 = vunpack.c.l.b16 %v2265
    %v2298 = vunpack.c.l.b16 %v2266
    %v2299 = vunpack.c.l.b16 %v2267
    %v2300 = vunpack.c.l.b16 %v2268
    %v2301 = vunpack.c.l.b16 %v2269
    %v2302 = vunpack.c.l.b16 %v2270
    %v2303 = vunpack.c.l.b16 %v2271
    %v2304 = vunpack.c.l.b16 %v2272
    %v2305 = vunpack.c.l.b16 %v2273
    %v2306 = vunpack.c.l.b16 %v2274
    %v2307 = vunpack.c.l.b16 %v2275
    %v2308 = vunpack.c.l.b16 %v2276
    %v2309 = vpack.c.b16 %v2294, %v2293
    %v2310 = vpack.c.b16 %v2296, %v2295
    %v2311 = vpack.c.b16 %v2298, %v2297
    %v2312 = vpack.c.b16 %v2300, %v2299
    %v2313 = vpack.c.b16 %v2302, %v2301
    %v2314 = vpack.c.b16 %v2304, %v2303
    %v2315 = vpack.c.b16 %v2306, %v2305
    %v2316 = vpack.c.b16 %v2308, %v2307
    %2325 = vmatprep.subr.bf16.mxu0 0
    %2326 = vmatpush1.bf16.msra.mxu0 %v2309
    %2327 = vmatprep.subr.bf16.mxu0 0
    %2328 = vmatpush1.bf16.msra.mxu0 %v2310
    %2329 = vmatprep.subr.bf16.mxu0 0
    %2330 = vmatpush1.bf16.msra.mxu0 %v2311
    %2331 = vmatprep.subr.bf16.mxu0 0
    %2332 = vmatpush1.bf16.msra.mxu0 %v2312
    %2333 = vmatprep.subr.bf16.mxu0 0
    %2334 = vmatpush1.bf16.msra.mxu0 %v2313
    %2335 = vmatprep.subr.bf16.mxu0 0
    %2336 = vmatpush1.bf16.msra.mxu0 %v2314
    %2337 = vmatprep.subr.bf16.mxu0 0
    %2338 = vmatpush1.bf16.msra.mxu0 %v2315
    %2339 = vmatprep.subr.bf16.mxu0 0
    %2340 = vmatpush1.bf16.msra.mxu0 %v2316
    %2341 = vmatprep.subr.bf16.mxu0 0
    %2342 = vmatpush1.bf16.msra.mxu0 0
    %2343 = vmatprep.subr.bf16.mxu0 0
    %2344 = vmatpush1.bf16.msra.mxu0 0
    %2345 = vmatprep.subr.bf16.mxu0 0
    %2346 = vmatpush1.bf16.msra.mxu0 0
    %2347 = vmatprep.subr.bf16.mxu0 0
    %2348 = vmatpush1.bf16.msra.mxu0 0
    %2349 = vmatprep.subr.bf16.mxu0 0
    %2350 = vmatpush1.bf16.msra.mxu0 0
    %2351 = vmatprep.subr.bf16.mxu0 0
    %2352 = vmatpush1.bf16.msra.mxu0 0
    %2353 = vmatprep.subr.bf16.mxu0 0
    %2354 = vmatpush1.bf16.msra.mxu0 0
    %2355 = vmatprep.subr.bf16.mxu0 0
    %2356 = vmatpush1.bf16.msra.mxu0 0
    %2357 = vmatprep.mubr.bf16.mxu0 0
    %2358 = vmatmul.mubr.bf16.gmra.mrb[0].mxu0 %v2244
    %v2359 = vpop.f32.mrb[0].mxu0
    %v2360 = vadd.f32 0.0, %v2359
    %v2361 = vpop.f32.mrb[0].mxu0
    %v2362 = vpop.f32.mrb[0].mxu0
    %v2363 = vadd.f32 0.0, %v2362
    %v2364 = vpop.f32.mrb[0].mxu0
    %2365 = vmatprep.mubr.bf16.mxu0 0
    %2366 = vmatmul.mubr.bf16.gmra.mrb[0].mxu0 %v2245
    %v2367 = vpop.f32.mrb[0].mxu0
    %v2368 = vadd.f32 0.0, %v2367
    %v2369 = vpop.f32.mrb[0].mxu0
    %v2370 = vpop.f32.mrb[0].mxu0
    %v2371 = vadd.f32 0.0, %v2370
    %v2372 = vpop.f32.mrb[0].mxu0
    %2373 = vmatprep.mubr.bf16.mxu0 0
    %2374 = vmatmul.mubr.bf16.gmra.mrb[0].mxu0 %v2246
    %v2375 = vpop.f32.mrb[0].mxu0
    %v2376 = vadd.f32 0.0, %v2375
    %v2377 = vpop.f32.mrb[0].mxu0
    %v2378 = vpop.f32.mrb[0].mxu0
    %v2379 = vadd.f32 0.0, %v2378
    %v2380 = vpop.f32.mrb[0].mxu0
    %2381 = vmatprep.mubr.bf16.mxu0 0
    %2382 = vmatmul.mubr.bf16.gmra.mrb[0].mxu0 %v2247
    %v2383 = vpop.f32.mrb[0].mxu0
    %v2384 = vadd.f32 0.0, %v2383
    %v2385 = vpop.f32.mrb[0].mxu0
    %v2386 = vpop.f32.mrb[0].mxu0
    %v2387 = vadd.f32 0.0, %v2386
    %v2388 = vpop.f32.mrb[0].mxu0
    %2389 = vmatprep.mubr.bf16.mxu0 0
    %2390 = vmatmul.mubr.bf16.gmra.mrb[0].mxu0 %v2248
    %v2391 = vpop.f32.mrb[0].mxu0
    %v2392 = vadd.f32 0.0, %v2391
    %v2393 = vpop.f32.mrb[0].mxu0
    %v2394 = vpop.f32.mrb[0].mxu0
    %v2395 = vadd.f32 0.0, %v2394
    %v2396 = vpop.f32.mrb[0].mxu0
    %2397 = vmatprep.mubr.bf16.mxu0 0
    %2398 = vmatmul.mubr.bf16.gmra.mrb[0].mxu0 %v2249
    %v2399 = vpop.f32.mrb[0].mxu0
    %v2400 = vadd.f32 0.0, %v2399
    %v2401 = vpop.f32.mrb[0].mxu0
    %v2402 = vpop.f32.mrb[0].mxu0
    %v2403 = vadd.f32 0.0, %v2402
    %v2404 = vpop.f32.mrb[0].mxu0
    %2405 = vmatprep.mubr.bf16.mxu0 0
    %2406 = vmatmul.mubr.bf16.gmra.mrb[0].mxu0 %v2250
    %v2407 = vpop.f32.mrb[0].mxu0
    %v2408 = vadd.f32 0.0, %v2407
    %v2409 = vpop.f32.mrb[0].mxu0
    %v2410 = vpop.f32.mrb[0].mxu0
    %v2411 = vadd.f32 0.0, %v2410
    %v2412 = vpop.f32.mrb[0].mxu0
    %2413 = vmatprep.mubr.bf16.mxu0 0
    %2414 = vmatmul.mubr.bf16.gmra.mrb[0].mxu0 %v2251
    %v2415 = vpop.f32.mrb[0].mxu0
    %v2416 = vadd.f32 0.0, %v2415
    %v2417 = vpop.f32.mrb[0].mxu0
    %v2418 = vpop.f32.mrb[0].mxu0
    %v2419 = vadd.f32 0.0, %v2418
    %v2420 = vpop.f32.mrb[0].mxu0
    %2421 = vmatprep.mubr.bf16.mxu0 0
    %2422 = vmatmul.mubr.bf16.gmra.mrb[0].mxu0 %v2252
    %v2423 = vpop.f32.mrb[0].mxu0
    %v2424 = vadd.f32 0.0, %v2423
    %v2425 = vpop.f32.mrb[0].mxu0
    %v2426 = vpop.f32.mrb[0].mxu0
    %v2427 = vadd.f32 0.0, %v2426
    %v2428 = vpop.f32.mrb[0].mxu0
    %2429 = vmatprep.mubr.bf16.mxu0 0
    %2430 = vmatmul.mubr.bf16.gmra.mrb[0].mxu0 %v2253
    %v2431 = vpop.f32.mrb[0].mxu0
    %v2432 = vadd.f32 0.0, %v2431
    %v2433 = vpop.f32.mrb[0].mxu0
    %v2434 = vpop.f32.mrb[0].mxu0
    %v2435 = vadd.f32 0.0, %v2434
    %v2436 = vpop.f32.mrb[0].mxu0
    %2437 = vmatprep.mubr.bf16.mxu0 0
    %2438 = vmatmul.mubr.bf16.gmra.mrb[0].mxu0 %v2254
    %v2439 = vpop.f32.mrb[0].mxu0
    %v2440 = vadd.f32 0.0, %v2439
    %v2441 = vpop.f32.mrb[0].mxu0
    %v2442 = vpop.f32.mrb[0].mxu0
    %v2443 = vadd.f32 0.0, %v2442
    %v2444 = vpop.f32.mrb[0].mxu0
    %2445 = vmatprep.mubr.bf16.mxu0 0
    %2446 = vmatmul.mubr.bf16.gmra.mrb[0].mxu0 %v2255
    %v2447 = vpop.f32.mrb[0].mxu0
    %v2448 = vadd.f32 0.0, %v2447
    %v2449 = vpop.f32.mrb[0].mxu0
    %v2450 = vpop.f32.mrb[0].mxu0
    %v2451 = vadd.f32 0.0, %v2450
    %v2452 = vpop.f32.mrb[0].mxu0
    %2453 = vmatprep.mubr.bf16.mxu0 0
    %2454 = vmatmul.mubr.bf16.gmra.mrb[0].mxu0 %v2256
    %v2455 = vpop.f32.mrb[0].mxu0
    %v2456 = vadd.f32 0.0, %v2455
    %v2457 = vpop.f32.mrb[0].mxu0
    %v2458 = vpop.f32.mrb[0].mxu0
    %v2459 = vadd.f32 0.0, %v2458
    %v2460 = vpop.f32.mrb[0].mxu0
    %2461 = vmatprep.mubr.bf16.mxu0 0
    %2462 = vmatmul.mubr.bf16.gmra.mrb[0].mxu0 %v2257
    %v2463 = vpop.f32.mrb[0].mxu0
    %v2464 = vadd.f32 0.0, %v2463
    %v2465 = vpop.f32.mrb[0].mxu0
    %v2466 = vpop.f32.mrb[0].mxu0
    %v2467 = vadd.f32 0.0, %v2466
    %v2468 = vpop.f32.mrb[0].mxu0
    %2469 = vmatprep.mubr.bf16.mxu0 0
    %2470 = vmatmul.mubr.bf16.gmra.mrb[0].mxu0 %v2258
    %v2471 = vpop.f32.mrb[0].mxu0
    %v2472 = vadd.f32 0.0, %v2471
    %v2473 = vpop.f32.mrb[0].mxu0
    %v2474 = vpop.f32.mrb[0].mxu0
    %v2475 = vadd.f32 0.0, %v2474
    %v2476 = vpop.f32.mrb[0].mxu0
    %2477 = vmatprep.mubr.bf16.mxu0 0
    %2478 = vmatmul.mubr.bf16.gmra.mrb[0].mxu0 %v2259
    %v2479 = vpop.f32.mrb[0].mxu0
    %v2480 = vadd.f32 0.0, %v2479
    %v2481 = vpop.f32.mrb[0].mxu0
    %v2482 = vpop.f32.mrb[0].mxu0
    %v2483 = vadd.f32 0.0, %v2482
    %v2484 = vpop.f32.mrb[0].mxu0
    %2485 = vdwg.mxu0
    %v2486 = vadd.f32 %v2180, %v2360
    %v2487 = vadd.f32 %v2181, %v2363
    %v2488 = vadd.f32 %v2182, %v2368
    %v2489 = vadd.f32 %v2183, %v2371
    %v2490 = vadd.f32 %v2184, %v2376
    %v2491 = vadd.f32 %v2185, %v2379
    %v2492 = vadd.f32 %v2186, %v2384
    %v2493 = vadd.f32 %v2187, %v2387
    %v2494 = vadd.f32 %v2188, %v2392
    %v2495 = vadd.f32 %v2189, %v2395
    %v2496 = vadd.f32 %v2190, %v2400
    %v2497 = vadd.f32 %v2191, %v2403
    %v2498 = vadd.f32 %v2192, %v2408
    %v2499 = vadd.f32 %v2193, %v2411
    %v2500 = vadd.f32 %v2194, %v2416
    %v2501 = vadd.f32 %v2195, %v2419
    %v2502 = vadd.f32 %v2196, %v2424
    %v2503 = vadd.f32 %v2197, %v2427
    %v2504 = vadd.f32 %v2198, %v2432
    %v2505 = vadd.f32 %v2199, %v2435
    %v2506 = vadd.f32 %v2200, %v2440
    %v2507 = vadd.f32 %v2201, %v2443
    %v2508 = vadd.f32 %v2202, %v2448
    %v2509 = vadd.f32 %v2203, %v2451
    %v2510 = vadd.f32 %v2204, %v2456
    %v2511 = vadd.f32 %v2205, %v2459
    %v2512 = vadd.f32 %v2206, %v2464
    %v2513 = vadd.f32 %v2207, %v2467
    %v2514 = vadd.f32 %v2208, %v2472
    %v2515 = vadd.f32 %v2209, %v2475
    %v2516 = vadd.f32 %v2210, %v2480
    %v2517 = vadd.f32 %v2211, %v2483
    %v2518 = vld [vmem:[#allocation2 + $0x15] sm:$0xff]
    %v2519 = vld [vmem:[#allocation2 + $0x1d] sm:$0xff]
    %v2520 = vld [vmem:[#allocation2 + $0x25] sm:$0xff]
    %v2521 = vld [vmem:[#allocation2 + $0x2d] sm:$0xff]
    %v2522 = vld [vmem:[#allocation2 + $0x35] sm:$0xff]
    %v2523 = vld [vmem:[#allocation2 + $0x3d] sm:$0xff]
    %v2524 = vld [vmem:[#allocation2 + $0x45] sm:$0xff]
    %v2525 = vld [vmem:[#allocation2 + $0x4d] sm:$0xff]
    %v2526 = vld [vmem:[#allocation2 + $0x55] sm:$0xff]
    %v2527 = vld [vmem:[#allocation2 + $0x5d] sm:$0xff]
    %v2528 = vld [vmem:[#allocation2 + $0x65] sm:$0xff]
    %v2529 = vld [vmem:[#allocation2 + $0x6d] sm:$0xff]
    %v2530 = vld [vmem:[#allocation2 + $0x75] sm:$0xff]
    %v2531 = vld [vmem:[#allocation2 + $0x7d] sm:$0xff]
    %v2532 = vld [vmem:[#allocation2 + $0x85] sm:$0xff]
    %v2533 = vld [vmem:[#allocation2 + $0x8d] sm:$0xff]
    %v2534 = vld [vmem:[#allocation2 + $0x95] sm:$0xff]
    %v2535 = vld [vmem:[#allocation2 + $0x9d] sm:$0xff]
    %v2536 = vld [vmem:[#allocation2 + $0xa5] sm:$0xff]
    %v2537 = vld [vmem:[#allocation2 + $0xad] sm:$0xff]
    %v2538 = vld [vmem:[#allocation2 + $0xb5] sm:$0xff]
    %v2539 = vld [vmem:[#allocation2 + $0xbd] sm:$0xff]
    %v2540 = vld [vmem:[#allocation2 + $0xc5] sm:$0xff]
    %v2541 = vld [vmem:[#allocation2 + $0xcd] sm:$0xff]
    %v2542 = vld [vmem:[#allocation2 + $0xd5] sm:$0xff]
    %v2543 = vld [vmem:[#allocation2 + $0xdd] sm:$0xff]
    %v2544 = vld [vmem:[#allocation2 + $0xe5] sm:$0xff]
    %v2545 = vld [vmem:[#allocation2 + $0xed] sm:$0xff]
    %v2546 = vld [vmem:[#allocation2 + $0xf5] sm:$0xff]
    %v2547 = vld [vmem:[#allocation2 + $0xfd] sm:$0xff]
    %v2548 = vld [vmem:[#allocation2 + $0x105] sm:$0xff]
    %v2549 = vld [vmem:[#allocation2 + $0x10d] sm:$0xff]
    %v2550 = vpack.c.bf16 %v2519, %v2518
    %v2551 = vpack.c.bf16 %v2521, %v2520
    %v2552 = vpack.c.bf16 %v2523, %v2522
    %v2553 = vpack.c.bf16 %v2525, %v2524
    %v2554 = vpack.c.bf16 %v2527, %v2526
    %v2555 = vpack.c.bf16 %v2529, %v2528
    %v2556 = vpack.c.bf16 %v2531, %v2530
    %v2557 = vpack.c.bf16 %v2533, %v2532
    %v2558 = vpack.c.bf16 %v2535, %v2534
    %v2559 = vpack.c.bf16 %v2537, %v2536
    %v2560 = vpack.c.bf16 %v2539, %v2538
    %v2561 = vpack.c.bf16 %v2541, %v2540
    %v2562 = vpack.c.bf16 %v2543, %v2542
    %v2563 = vpack.c.bf16 %v2545, %v2544
    %v2564 = vpack.c.bf16 %v2547, %v2546
    %v2565 = vpack.c.bf16 %v2549, %v2548
    %s2566 = scalar_lea.vmem %s2, 448
    %v2567 = vld [vmem:[%s2566] sm:$0xf]
    %v2568 = vld [vmem:[%s2566 + $0x4] sm:$0xf]
    %v2569 = vld [vmem:[%s2566 + $0x8] sm:$0xf]
    %v2570 = vld [vmem:[%s2566 + $0xc] sm:$0xf]
    %v2571 = vld [vmem:[%s2566 + $0x10] sm:$0xf]
    %v2572 = vld [vmem:[%s2566 + $0x14] sm:$0xf]
    %v2573 = vld [vmem:[%s2566 + $0x18] sm:$0xf]
    %v2574 = vld [vmem:[%s2566 + $0x1c] sm:$0xf]
    %v2575 = vld [vmem:[%s2566 + $0x20] sm:$0xf]
    %v2576 = vld [vmem:[%s2566 + $0x24] sm:$0xf]
    %v2577 = vld [vmem:[%s2566 + $0x28] sm:$0xf]
    %v2578 = vld [vmem:[%s2566 + $0x2c] sm:$0xf]
    %v2579 = vld [vmem:[%s2566 + $0x30] sm:$0xf]
    %v2580 = vld [vmem:[%s2566 + $0x34] sm:$0xf]
    %v2581 = vld [vmem:[%s2566 + $0x38] sm:$0xf]
    %v2582 = vld [vmem:[%s2566 + $0x3c] sm:$0xf]
    %v2599 = vunpack.c.l.b16 %v2567
    %v2600 = vunpack.c.l.b16 %v2568
    %v2601 = vunpack.c.l.b16 %v2569
    %v2602 = vunpack.c.l.b16 %v2570
    %v2603 = vunpack.c.l.b16 %v2571
    %v2604 = vunpack.c.l.b16 %v2572
    %v2605 = vunpack.c.l.b16 %v2573
    %v2606 = vunpack.c.l.b16 %v2574
    %v2607 = vunpack.c.l.b16 %v2575
    %v2608 = vunpack.c.l.b16 %v2576
    %v2609 = vunpack.c.l.b16 %v2577
    %v2610 = vunpack.c.l.b16 %v2578
    %v2611 = vunpack.c.l.b16 %v2579
    %v2612 = vunpack.c.l.b16 %v2580
    %v2613 = vunpack.c.l.b16 %v2581
    %v2614 = vunpack.c.l.b16 %v2582
    %v2615 = vpack.c.b16 %v2600, %v2599
    %v2616 = vpack.c.b16 %v2602, %v2601
    %v2617 = vpack.c.b16 %v2604, %v2603
    %v2618 = vpack.c.b16 %v2606, %v2605
    %v2619 = vpack.c.b16 %v2608, %v2607
    %v2620 = vpack.c.b16 %v2610, %v2609
    %v2621 = vpack.c.b16 %v2612, %v2611
    %v2622 = vpack.c.b16 %v2614, %v2613
    %2631 = vmatprep.subr.bf16.mxu0 0
    %2632 = vmatpush1.bf16.msra.mxu0 %v2615
    %2633 = vmatprep.subr.bf16.mxu0 0
    %2634 = vmatpush1.bf16.msra.mxu0 %v2616
    %2635 = vmatprep.subr.bf16.mxu0 0
    %2636 = vmatpush1.bf16.msra.mxu0 %v2617
    %2637 = vmatprep.subr.bf16.mxu0 0
    %2638 = vmatpush1.bf16.msra.mxu0 %v2618
    %2639 = vmatprep.subr.bf16.mxu0 0
    %2640 = vmatpush1.bf16.msra.mxu0 %v2619
    %2641 = vmatprep.subr.bf16.mxu0 0
    %2642 = vmatpush1.bf16.msra.mxu0 %v2620
    %2643 = vmatprep.subr.bf16.mxu0 0
    %2644 = vmatpush1.bf16.msra.mxu0 %v2621
    %2645 = vmatprep.subr.bf16.mxu0 0
    %2646 = vmatpush1.bf16.msra.mxu0 %v2622
    %2647 = vmatprep.subr.bf16.mxu0 0
    %2648 = vmatpush1.bf16.msra.mxu0 0
    %2649 = vmatprep.subr.bf16.mxu0 0
    %2650 = vmatpush1.bf16.msra.mxu0 0
    %2651 = vmatprep.subr.bf16.mxu0 0
    %2652 = vmatpush1.bf16.msra.mxu0 0
    %2653 = vmatprep.subr.bf16.mxu0 0
    %2654 = vmatpush1.bf16.msra.mxu0 0
    %2655 = vmatprep.subr.bf16.mxu0 0
    %2656 = vmatpush1.bf16.msra.mxu0 0
    %2657 = vmatprep.subr.bf16.mxu0 0
    %2658 = vmatpush1.bf16.msra.mxu0 0
    %2659 = vmatprep.subr.bf16.mxu0 0
    %2660 = vmatpush1.bf16.msra.mxu0 0
    %2661 = vmatprep.subr.bf16.mxu0 0
    %2662 = vmatpush1.bf16.msra.mxu0 0
    %2663 = vmatprep.mubr.bf16.mxu0 0
    %2664 = vmatmul.mubr.bf16.gmra.mrb[0].mxu0 %v2550
    %v2665 = vpop.f32.mrb[0].mxu0
    %v2666 = vadd.f32 0.0, %v2665
    %v2667 = vpop.f32.mrb[0].mxu0
    %v2668 = vpop.f32.mrb[0].mxu0
    %v2669 = vadd.f32 0.0, %v2668
    %v2670 = vpop.f32.mrb[0].mxu0
    %2671 = vmatprep.mubr.bf16.mxu0 0
    %2672 = vmatmul.mubr.bf16.gmra.mrb[0].mxu0 %v2551
    %v2673 = vpop.f32.mrb[0].mxu0
    %v2674 = vadd.f32 0.0, %v2673
    %v2675 = vpop.f32.mrb[0].mxu0
    %v2676 = vpop.f32.mrb[0].mxu0
    %v2677 = vadd.f32 0.0, %v2676
    %v2678 = vpop.f32.mrb[0].mxu0
    %2679 = vmatprep.mubr.bf16.mxu0 0
    %2680 = vmatmul.mubr.bf16.gmra.mrb[0].mxu0 %v2552
    %v2681 = vpop.f32.mrb[0].mxu0
    %v2682 = vadd.f32 0.0, %v2681
    %v2683 = vpop.f32.mrb[0].mxu0
    %v2684 = vpop.f32.mrb[0].mxu0
    %v2685 = vadd.f32 0.0, %v2684
    %v2686 = vpop.f32.mrb[0].mxu0
    %2687 = vmatprep.mubr.bf16.mxu0 0
    %2688 = vmatmul.mubr.bf16.gmra.mrb[0].mxu0 %v2553
    %v2689 = vpop.f32.mrb[0].mxu0
    %v2690 = vadd.f32 0.0, %v2689
    %v2691 = vpop.f32.mrb[0].mxu0
    %v2692 = vpop.f32.mrb[0].mxu0
    %v2693 = vadd.f32 0.0, %v2692
    %v2694 = vpop.f32.mrb[0].mxu0
    %2695 = vmatprep.mubr.bf16.mxu0 0
    %2696 = vmatmul.mubr.bf16.gmra.mrb[0].mxu0 %v2554
    %v2697 = vpop.f32.mrb[0].mxu0
    %v2698 = vadd.f32 0.0, %v2697
    %v2699 = vpop.f32.mrb[0].mxu0
    %v2700 = vpop.f32.mrb[0].mxu0
    %v2701 = vadd.f32 0.0, %v2700
    %v2702 = vpop.f32.mrb[0].mxu0
    %2703 = vmatprep.mubr.bf16.mxu0 0
    %2704 = vmatmul.mubr.bf16.gmra.mrb[0].mxu0 %v2555
    %v2705 = vpop.f32.mrb[0].mxu0
    %v2706 = vadd.f32 0.0, %v2705
    %v2707 = vpop.f32.mrb[0].mxu0
    %v2708 = vpop.f32.mrb[0].mxu0
    %v2709 = vadd.f32 0.0, %v2708
    %v2710 = vpop.f32.mrb[0].mxu0
    %2711 = vmatprep.mubr.bf16.mxu0 0
    %2712 = vmatmul.mubr.bf16.gmra.mrb[0].mxu0 %v2556
    %v2713 = vpop.f32.mrb[0].mxu0
    %v2714 = vadd.f32 0.0, %v2713
    %v2715 = vpop.f32.mrb[0].mxu0
    %v2716 = vpop.f32.mrb[0].mxu0
    %v2717 = vadd.f32 0.0, %v2716
    %v2718 = vpop.f32.mrb[0].mxu0
    %2719 = vmatprep.mubr.bf16.mxu0 0
    %2720 = vmatmul.mubr.bf16.gmra.mrb[0].mxu0 %v2557
    %v2721 = vpop.f32.mrb[0].mxu0
    %v2722 = vadd.f32 0.0, %v2721
    %v2723 = vpop.f32.mrb[0].mxu0
    %v2724 = vpop.f32.mrb[0].mxu0
    %v2725 = vadd.f32 0.0, %v2724
    %v2726 = vpop.f32.mrb[0].mxu0
    %2727 = vmatprep.mubr.bf16.mxu0 0
    %2728 = vmatmul.mubr.bf16.gmra.mrb[0].mxu0 %v2558
    %v2729 = vpop.f32.mrb[0].mxu0
    %v2730 = vadd.f32 0.0, %v2729
    %v2731 = vpop.f32.mrb[0].mxu0
    %v2732 = vpop.f32.mrb[0].mxu0
    %v2733 = vadd.f32 0.0, %v2732
    %v2734 = vpop.f32.mrb[0].mxu0
    %2735 = vmatprep.mubr.bf16.mxu0 0
    %2736 = vmatmul.mubr.bf16.gmra.mrb[0].mxu0 %v2559
    %v2737 = vpop.f32.mrb[0].mxu0
    %v2738 = vadd.f32 0.0, %v2737
    %v2739 = vpop.f32.mrb[0].mxu0
    %v2740 = vpop.f32.mrb[0].mxu0
    %v2741 = vadd.f32 0.0, %v2740
    %v2742 = vpop.f32.mrb[0].mxu0
    %2743 = vmatprep.mubr.bf16.mxu0 0
    %2744 = vmatmul.mubr.bf16.gmra.mrb[0].mxu0 %v2560
    %v2745 = vpop.f32.mrb[0].mxu0
    %v2746 = vadd.f32 0.0, %v2745
    %v2747 = vpop.f32.mrb[0].mxu0
    %v2748 = vpop.f32.mrb[0].mxu0
    %v2749 = vadd.f32 0.0, %v2748
    %v2750 = vpop.f32.mrb[0].mxu0
    %2751 = vmatprep.mubr.bf16.mxu0 0
    %2752 = vmatmul.mubr.bf16.gmra.mrb[0].mxu0 %v2561
    %v2753 = vpop.f32.mrb[0].mxu0
    %v2754 = vadd.f32 0.0, %v2753
    %v2755 = vpop.f32.mrb[0].mxu0
    %v2756 = vpop.f32.mrb[0].mxu0
    %v2757 = vadd.f32 0.0, %v2756
    %v2758 = vpop.f32.mrb[0].mxu0
    %2759 = vmatprep.mubr.bf16.mxu0 0
    %2760 = vmatmul.mubr.bf16.gmra.mrb[0].mxu0 %v2562
    %v2761 = vpop.f32.mrb[0].mxu0
    %v2762 = vadd.f32 0.0, %v2761
    %v2763 = vpop.f32.mrb[0].mxu0
    %v2764 = vpop.f32.mrb[0].mxu0
    %v2765 = vadd.f32 0.0, %v2764
    %v2766 = vpop.f32.mrb[0].mxu0
    %2767 = vmatprep.mubr.bf16.mxu0 0
    %2768 = vmatmul.mubr.bf16.gmra.mrb[0].mxu0 %v2563
    %v2769 = vpop.f32.mrb[0].mxu0
    %v2770 = vadd.f32 0.0, %v2769
    %v2771 = vpop.f32.mrb[0].mxu0
    %v2772 = vpop.f32.mrb[0].mxu0
    %v2773 = vadd.f32 0.0, %v2772
    %v2774 = vpop.f32.mrb[0].mxu0
    %2775 = vmatprep.mubr.bf16.mxu0 0
    %2776 = vmatmul.mubr.bf16.gmra.mrb[0].mxu0 %v2564
    %v2777 = vpop.f32.mrb[0].mxu0
    %v2778 = vadd.f32 0.0, %v2777
    %v2779 = vpop.f32.mrb[0].mxu0
    %v2780 = vpop.f32.mrb[0].mxu0
    %v2781 = vadd.f32 0.0, %v2780
    %v2782 = vpop.f32.mrb[0].mxu0
    %2783 = vmatprep.mubr.bf16.mxu0 0
    %2784 = vmatmul.mubr.bf16.gmra.mrb[0].mxu0 %v2565
    %v2785 = vpop.f32.mrb[0].mxu0
    %v2786 = vadd.f32 0.0, %v2785
    %v2787 = vpop.f32.mrb[0].mxu0
    %v2788 = vpop.f32.mrb[0].mxu0
    %v2789 = vadd.f32 0.0, %v2788
    %v2790 = vpop.f32.mrb[0].mxu0
    %2791 = vdwg.mxu0
    %v2792 = vadd.f32 %v2486, %v2666
    %v2793 = vadd.f32 %v2487, %v2669
    %v2794 = vadd.f32 %v2488, %v2674
    %v2795 = vadd.f32 %v2489, %v2677
    %v2796 = vadd.f32 %v2490, %v2682
    %v2797 = vadd.f32 %v2491, %v2685
    %v2798 = vadd.f32 %v2492, %v2690
    %v2799 = vadd.f32 %v2493, %v2693
    %v2800 = vadd.f32 %v2494, %v2698
    %v2801 = vadd.f32 %v2495, %v2701
    %v2802 = vadd.f32 %v2496, %v2706
    %v2803 = vadd.f32 %v2497, %v2709
    %v2804 = vadd.f32 %v2498, %v2714
    %v2805 = vadd.f32 %v2499, %v2717
    %v2806 = vadd.f32 %v2500, %v2722
    %v2807 = vadd.f32 %v2501, %v2725
    %v2808 = vadd.f32 %v2502, %v2730
    %v2809 = vadd.f32 %v2503, %v2733
    %v2810 = vadd.f32 %v2504, %v2738
    %v2811 = vadd.f32 %v2505, %v2741
    %v2812 = vadd.f32 %v2506, %v2746
    %v2813 = vadd.f32 %v2507, %v2749
    %v2814 = vadd.f32 %v2508, %v2754
    %v2815 = vadd.f32 %v2509, %v2757
    %v2816 = vadd.f32 %v2510, %v2762
    %v2817 = vadd.f32 %v2511, %v2765
    %v2818 = vadd.f32 %v2512, %v2770
    %v2819 = vadd.f32 %v2513, %v2773
    %v2820 = vadd.f32 %v2514, %v2778
    %v2821 = vadd.f32 %v2515, %v2781
    %v2822 = vadd.f32 %v2516, %v2786
    %v2823 = vadd.f32 %v2517, %v2789
    %v2824 = vld [vmem:[#allocation2 + $0x16] sm:$0xff]
    %v2825 = vld [vmem:[#allocation2 + $0x1e] sm:$0xff]
    %v2826 = vld [vmem:[#allocation2 + $0x26] sm:$0xff]
    %v2827 = vld [vmem:[#allocation2 + $0x2e] sm:$0xff]
    %v2828 = vld [vmem:[#allocation2 + $0x36] sm:$0xff]
    %v2829 = vld [vmem:[#allocation2 + $0x3e] sm:$0xff]
    %v2830 = vld [vmem:[#allocation2 + $0x46] sm:$0xff]
    %v2831 = vld [vmem:[#allocation2 + $0x4e] sm:$0xff]
    %v2832 = vld [vmem:[#allocation2 + $0x56] sm:$0xff]
    %v2833 = vld [vmem:[#allocation2 + $0x5e] sm:$0xff]
    %v2834 = vld [vmem:[#allocation2 + $0x66] sm:$0xff]
    %v2835 = vld [vmem:[#allocation2 + $0x6e] sm:$0xff]
    %v2836 = vld [vmem:[#allocation2 + $0x76] sm:$0xff]
    %v2837 = vld [vmem:[#allocation2 + $0x7e] sm:$0xff]
    %v2838 = vld [vmem:[#allocation2 + $0x86] sm:$0xff]
    %v2839 = vld [vmem:[#allocation2 + $0x8e] sm:$0xff]
    %v2840 = vld [vmem:[#allocation2 + $0x96] sm:$0xff]
    %v2841 = vld [vmem:[#allocation2 + $0x9e] sm:$0xff]
    %v2842 = vld [vmem:[#allocation2 + $0xa6] sm:$0xff]
    %v2843 = vld [vmem:[#allocation2 + $0xae] sm:$0xff]
    %v2844 = vld [vmem:[#allocation2 + $0xb6] sm:$0xff]
    %v2845 = vld [vmem:[#allocation2 + $0xbe] sm:$0xff]
    %v2846 = vld [vmem:[#allocation2 + $0xc6] sm:$0xff]
    %v2847 = vld [vmem:[#allocation2 + $0xce] sm:$0xff]
    %v2848 = vld [vmem:[#allocation2 + $0xd6] sm:$0xff]
    %v2849 = vld [vmem:[#allocation2 + $0xde] sm:$0xff]
    %v2850 = vld [vmem:[#allocation2 + $0xe6] sm:$0xff]
    %v2851 = vld [vmem:[#allocation2 + $0xee] sm:$0xff]
    %v2852 = vld [vmem:[#allocation2 + $0xf6] sm:$0xff]
    %v2853 = vld [vmem:[#allocation2 + $0xfe] sm:$0xff]
    %v2854 = vld [vmem:[#allocation2 + $0x106] sm:$0xff]
    %v2855 = vld [vmem:[#allocation2 + $0x10e] sm:$0xff]
    %v2856 = vpack.c.bf16 %v2825, %v2824
    %v2857 = vpack.c.bf16 %v2827, %v2826
    %v2858 = vpack.c.bf16 %v2829, %v2828
    %v2859 = vpack.c.bf16 %v2831, %v2830
    %v2860 = vpack.c.bf16 %v2833, %v2832
    %v2861 = vpack.c.bf16 %v2835, %v2834
    %v2862 = vpack.c.bf16 %v2837, %v2836
    %v2863 = vpack.c.bf16 %v2839, %v2838
    %v2864 = vpack.c.bf16 %v2841, %v2840
    %v2865 = vpack.c.bf16 %v2843, %v2842
    %v2866 = vpack.c.bf16 %v2845, %v2844
    %v2867 = vpack.c.bf16 %v2847, %v2846
    %v2868 = vpack.c.bf16 %v2849, %v2848
    %v2869 = vpack.c.bf16 %v2851, %v2850
    %v2870 = vpack.c.bf16 %v2853, %v2852
    %v2871 = vpack.c.bf16 %v2855, %v2854
    %s2872 = scalar_lea.vmem %s2, 512
    %v2873 = vld [vmem:[%s2872] sm:$0xf]
    %v2874 = vld [vmem:[%s2872 + $0x4] sm:$0xf]
    %v2875 = vld [vmem:[%s2872 + $0x8] sm:$0xf]
    %v2876 = vld [vmem:[%s2872 + $0xc] sm:$0xf]
    %v2877 = vld [vmem:[%s2872 + $0x10] sm:$0xf]
    %v2878 = vld [vmem:[%s2872 + $0x14] sm:$0xf]
    %v2879 = vld [vmem:[%s2872 + $0x18] sm:$0xf]
    %v2880 = vld [vmem:[%s2872 + $0x1c] sm:$0xf]
    %v2881 = vld [vmem:[%s2872 + $0x20] sm:$0xf]
    %v2882 = vld [vmem:[%s2872 + $0x24] sm:$0xf]
    %v2883 = vld [vmem:[%s2872 + $0x28] sm:$0xf]
    %v2884 = vld [vmem:[%s2872 + $0x2c] sm:$0xf]
    %v2885 = vld [vmem:[%s2872 + $0x30] sm:$0xf]
    %v2886 = vld [vmem:[%s2872 + $0x34] sm:$0xf]
    %v2887 = vld [vmem:[%s2872 + $0x38] sm:$0xf]
    %v2888 = vld [vmem:[%s2872 + $0x3c] sm:$0xf]
    %v2905 = vunpack.c.l.b16 %v2873
    %v2906 = vunpack.c.l.b16 %v2874
    %v2907 = vunpack.c.l.b16 %v2875
    %v2908 = vunpack.c.l.b16 %v2876
    %v2909 = vunpack.c.l.b16 %v2877
    %v2910 = vunpack.c.l.b16 %v2878
    %v2911 = vunpack.c.l.b16 %v2879
    %v2912 = vunpack.c.l.b16 %v2880
    %v2913 = vunpack.c.l.b16 %v2881
    %v2914 = vunpack.c.l.b16 %v2882
    %v2915 = vunpack.c.l.b16 %v2883
    %v2916 = vunpack.c.l.b16 %v2884
    %v2917 = vunpack.c.l.b16 %v2885
    %v2918 = vunpack.c.l.b16 %v2886
    %v2919 = vunpack.c.l.b16 %v2887
    %v2920 = vunpack.c.l.b16 %v2888
    %v2921 = vpack.c.b16 %v2906, %v2905
    %v2922 = vpack.c.b16 %v2908, %v2907
    %v2923 = vpack.c.b16 %v2910, %v2909
    %v2924 = vpack.c.b16 %v2912, %v2911
    %v2925 = vpack.c.b16 %v2914, %v2913
    %v2926 = vpack.c.b16 %v2916, %v2915
    %v2927 = vpack.c.b16 %v2918, %v2917
    %v2928 = vpack.c.b16 %v2920, %v2919
    %2937 = vmatprep.subr.bf16.mxu0 0
    %2938 = vmatpush1.bf16.msra.mxu0 %v2921
    %2939 = vmatprep.subr.bf16.mxu0 0
    %2940 = vmatpush1.bf16.msra.mxu0 %v2922
    %2941 = vmatprep.subr.bf16.mxu0 0
    %2942 = vmatpush1.bf16.msra.mxu0 %v2923
    %2943 = vmatprep.subr.bf16.mxu0 0
    %2944 = vmatpush1.bf16.msra.mxu0 %v2924
    %2945 = vmatprep.subr.bf16.mxu0 0
    %2946 = vmatpush1.bf16.msra.mxu0 %v2925
    %2947 = vmatprep.subr.bf16.mxu0 0
    %2948 = vmatpush1.bf16.msra.mxu0 %v2926
    %2949 = vmatprep.subr.bf16.mxu0 0
    %2950 = vmatpush1.bf16.msra.mxu0 %v2927
    %2951 = vmatprep.subr.bf16.mxu0 0
    %2952 = vmatpush1.bf16.msra.mxu0 %v2928
    %2953 = vmatprep.subr.bf16.mxu0 0
    %2954 = vmatpush1.bf16.msra.mxu0 0
    %2955 = vmatprep.subr.bf16.mxu0 0
    %2956 = vmatpush1.bf16.msra.mxu0 0
    %2957 = vmatprep.subr.bf16.mxu0 0
    %2958 = vmatpush1.bf16.msra.mxu0 0
    %2959 = vmatprep.subr.bf16.mxu0 0
    %2960 = vmatpush1.bf16.msra.mxu0 0
    %2961 = vmatprep.subr.bf16.mxu0 0
    %2962 = vmatpush1.bf16.msra.mxu0 0
    %2963 = vmatprep.subr.bf16.mxu0 0
    %2964 = vmatpush1.bf16.msra.mxu0 0
    %2965 = vmatprep.subr.bf16.mxu0 0
    %2966 = vmatpush1.bf16.msra.mxu0 0
    %2967 = vmatprep.subr.bf16.mxu0 0
    %2968 = vmatpush1.bf16.msra.mxu0 0
    %2969 = vmatprep.mubr.bf16.mxu0 0
    %2970 = vmatmul.mubr.bf16.gmra.mrb[0].mxu0 %v2856
    %v2971 = vpop.f32.mrb[0].mxu0
    %v2972 = vadd.f32 0.0, %v2971
    %v2973 = vpop.f32.mrb[0].mxu0
    %v2974 = vpop.f32.mrb[0].mxu0
    %v2975 = vadd.f32 0.0, %v2974
    %v2976 = vpop.f32.mrb[0].mxu0
    %2977 = vmatprep.mubr.bf16.mxu0 0
    %2978 = vmatmul.mubr.bf16.gmra.mrb[0].mxu0 %v2857
    %v2979 = vpop.f32.mrb[0].mxu0
    %v2980 = vadd.f32 0.0, %v2979
    %v2981 = vpop.f32.mrb[0].mxu0
    %v2982 = vpop.f32.mrb[0].mxu0
    %v2983 = vadd.f32 0.0, %v2982
    %v2984 = vpop.f32.mrb[0].mxu0
    %2985 = vmatprep.mubr.bf16.mxu0 0
    %2986 = vmatmul.mubr.bf16.gmra.mrb[0].mxu0 %v2858
    %v2987 = vpop.f32.mrb[0].mxu0
    %v2988 = vadd.f32 0.0, %v2987
    %v2989 = vpop.f32.mrb[0].mxu0
    %v2990 = vpop.f32.mrb[0].mxu0
    %v2991 = vadd.f32 0.0, %v2990
    %v2992 = vpop.f32.mrb[0].mxu0
    %2993 = vmatprep.mubr.bf16.mxu0 0
    %2994 = vmatmul.mubr.bf16.gmra.mrb[0].mxu0 %v2859
    %v2995 = vpop.f32.mrb[0].mxu0
    %v2996 = vadd.f32 0.0, %v2995
    %v2997 = vpop.f32.mrb[0].mxu0
    %v2998 = vpop.f32.mrb[0].mxu0
    %v2999 = vadd.f32 0.0, %v2998
    %v3000 = vpop.f32.mrb[0].mxu0
    %3001 = vmatprep.mubr.bf16.mxu0 0
    %3002 = vmatmul.mubr.bf16.gmra.mrb[0].mxu0 %v2860
    %v3003 = vpop.f32.mrb[0].mxu0
    %v3004 = vadd.f32 0.0, %v3003
    %v3005 = vpop.f32.mrb[0].mxu0
    %v3006 = vpop.f32.mrb[0].mxu0
    %v3007 = vadd.f32 0.0, %v3006
    %v3008 = vpop.f32.mrb[0].mxu0
    %3009 = vmatprep.mubr.bf16.mxu0 0
    %3010 = vmatmul.mubr.bf16.gmra.mrb[0].mxu0 %v2861
    %v3011 = vpop.f32.mrb[0].mxu0
    %v3012 = vadd.f32 0.0, %v3011
    %v3013 = vpop.f32.mrb[0].mxu0
    %v3014 = vpop.f32.mrb[0].mxu0
    %v3015 = vadd.f32 0.0, %v3014
    %v3016 = vpop.f32.mrb[0].mxu0
    %3017 = vmatprep.mubr.bf16.mxu0 0
    %3018 = vmatmul.mubr.bf16.gmra.mrb[0].mxu0 %v2862
    %v3019 = vpop.f32.mrb[0].mxu0
    %v3020 = vadd.f32 0.0, %v3019
    %v3021 = vpop.f32.mrb[0].mxu0
    %v3022 = vpop.f32.mrb[0].mxu0
    %v3023 = vadd.f32 0.0, %v3022
    %v3024 = vpop.f32.mrb[0].mxu0
    %3025 = vmatprep.mubr.bf16.mxu0 0
    %3026 = vmatmul.mubr.bf16.gmra.mrb[0].mxu0 %v2863
    %v3027 = vpop.f32.mrb[0].mxu0
    %v3028 = vadd.f32 0.0, %v3027
    %v3029 = vpop.f32.mrb[0].mxu0
    %v3030 = vpop.f32.mrb[0].mxu0
    %v3031 = vadd.f32 0.0, %v3030
    %v3032 = vpop.f32.mrb[0].mxu0
    %3033 = vmatprep.mubr.bf16.mxu0 0
    %3034 = vmatmul.mubr.bf16.gmra.mrb[0].mxu0 %v2864
    %v3035 = vpop.f32.mrb[0].mxu0
    %v3036 = vadd.f32 0.0, %v3035
    %v3037 = vpop.f32.mrb[0].mxu0
    %v3038 = vpop.f32.mrb[0].mxu0
    %v3039 = vadd.f32 0.0, %v3038
    %v3040 = vpop.f32.mrb[0].mxu0
    %3041 = vmatprep.mubr.bf16.mxu0 0
    %3042 = vmatmul.mubr.bf16.gmra.mrb[0].mxu0 %v2865
    %v3043 = vpop.f32.mrb[0].mxu0
    %v3044 = vadd.f32 0.0, %v3043
    %v3045 = vpop.f32.mrb[0].mxu0
    %v3046 = vpop.f32.mrb[0].mxu0
    %v3047 = vadd.f32 0.0, %v3046
    %v3048 = vpop.f32.mrb[0].mxu0
    %3049 = vmatprep.mubr.bf16.mxu0 0
    %3050 = vmatmul.mubr.bf16.gmra.mrb[0].mxu0 %v2866
    %v3051 = vpop.f32.mrb[0].mxu0
    %v3052 = vadd.f32 0.0, %v3051
    %v3053 = vpop.f32.mrb[0].mxu0
    %v3054 = vpop.f32.mrb[0].mxu0
    %v3055 = vadd.f32 0.0, %v3054
    %v3056 = vpop.f32.mrb[0].mxu0
    %3057 = vmatprep.mubr.bf16.mxu0 0
    %3058 = vmatmul.mubr.bf16.gmra.mrb[0].mxu0 %v2867
    %v3059 = vpop.f32.mrb[0].mxu0
    %v3060 = vadd.f32 0.0, %v3059
    %v3061 = vpop.f32.mrb[0].mxu0
    %v3062 = vpop.f32.mrb[0].mxu0
    %v3063 = vadd.f32 0.0, %v3062
    %v3064 = vpop.f32.mrb[0].mxu0
    %3065 = vmatprep.mubr.bf16.mxu0 0
    %3066 = vmatmul.mubr.bf16.gmra.mrb[0].mxu0 %v2868
    %v3067 = vpop.f32.mrb[0].mxu0
    %v3068 = vadd.f32 0.0, %v3067
    %v3069 = vpop.f32.mrb[0].mxu0
    %v3070 = vpop.f32.mrb[0].mxu0
    %v3071 = vadd.f32 0.0, %v3070
    %v3072 = vpop.f32.mrb[0].mxu0
    %3073 = vmatprep.mubr.bf16.mxu0 0
    %3074 = vmatmul.mubr.bf16.gmra.mrb[0].mxu0 %v2869
    %v3075 = vpop.f32.mrb[0].mxu0
    %v3076 = vadd.f32 0.0, %v3075
    %v3077 = vpop.f32.mrb[0].mxu0
    %v3078 = vpop.f32.mrb[0].mxu0
    %v3079 = vadd.f32 0.0, %v3078
    %v3080 = vpop.f32.mrb[0].mxu0
    %3081 = vmatprep.mubr.bf16.mxu0 0
    %3082 = vmatmul.mubr.bf16.gmra.mrb[0].mxu0 %v2870
    %v3083 = vpop.f32.mrb[0].mxu0
    %v3084 = vadd.f32 0.0, %v3083
    %v3085 = vpop.f32.mrb[0].mxu0
    %v3086 = vpop.f32.mrb[0].mxu0
    %v3087 = vadd.f32 0.0, %v3086
    %v3088 = vpop.f32.mrb[0].mxu0
    %3089 = vmatprep.mubr.bf16.mxu0 0
    %3090 = vmatmul.mubr.bf16.gmra.mrb[0].mxu0 %v2871
    %v3091 = vpop.f32.mrb[0].mxu0
    %v3092 = vadd.f32 0.0, %v3091
    %v3093 = vpop.f32.mrb[0].mxu0
    %v3094 = vpop.f32.mrb[0].mxu0
    %v3095 = vadd.f32 0.0, %v3094
    %v3096 = vpop.f32.mrb[0].mxu0
    %3097 = vdwg.mxu0
    %v3098 = vadd.f32 %v2792, %v2972
    %v3099 = vadd.f32 %v2793, %v2975
    %v3100 = vadd.f32 %v2794, %v2980
    %v3101 = vadd.f32 %v2795, %v2983
    %v3102 = vadd.f32 %v2796, %v2988
    %v3103 = vadd.f32 %v2797, %v2991
    %v3104 = vadd.f32 %v2798, %v2996
    %v3105 = vadd.f32 %v2799, %v2999
    %v3106 = vadd.f32 %v2800, %v3004
    %v3107 = vadd.f32 %v2801, %v3007
    %v3108 = vadd.f32 %v2802, %v3012
    %v3109 = vadd.f32 %v2803, %v3015
    %v3110 = vadd.f32 %v2804, %v3020
    %v3111 = vadd.f32 %v2805, %v3023
    %v3112 = vadd.f32 %v2806, %v3028
    %v3113 = vadd.f32 %v2807, %v3031
    %v3114 = vadd.f32 %v2808, %v3036
    %v3115 = vadd.f32 %v2809, %v3039
    %v3116 = vadd.f32 %v2810, %v3044
    %v3117 = vadd.f32 %v2811, %v3047
    %v3118 = vadd.f32 %v2812, %v3052
    %v3119 = vadd.f32 %v2813, %v3055
    %v3120 = vadd.f32 %v2814, %v3060
    %v3121 = vadd.f32 %v2815, %v3063
    %v3122 = vadd.f32 %v2816, %v3068
    %v3123 = vadd.f32 %v2817, %v3071
    %v3124 = vadd.f32 %v2818, %v3076
    %v3125 = vadd.f32 %v2819, %v3079
    %v3126 = vadd.f32 %v2820, %v3084
    %v3127 = vadd.f32 %v2821, %v3087
    %v3128 = vadd.f32 %v2822, %v3092
    %v3129 = vadd.f32 %v2823, %v3095
    %v3130 = vld [vmem:[%s3] sm:$0x1]
    %v3132 = vlaneseq
    %v3133 = vshrl.u32 %v3132, 7
    %v3134 = vsub.s32 0, %v3133
    %v3135 = vrot.slane %v3130, %v3134
    %v3137 = vadd.f32 %v3098, %v3135
    %v3138 = vadd.f32 %v3099, %v3135
    %v3139 = vadd.f32 %v3100, %v3135
    %v3140 = vadd.f32 %v3101, %v3135
    %v3141 = vadd.f32 %v3102, %v3135
    %v3142 = vadd.f32 %v3103, %v3135
    %v3143 = vadd.f32 %v3104, %v3135
    %v3144 = vadd.f32 %v3105, %v3135
    %v3145 = vadd.f32 %v3106, %v3135
    %v3146 = vadd.f32 %v3107, %v3135
    %v3147 = vadd.f32 %v3108, %v3135
    %v3148 = vadd.f32 %v3109, %v3135
    %v3149 = vadd.f32 %v3110, %v3135
    %v3150 = vadd.f32 %v3111, %v3135
    %v3151 = vadd.f32 %v3112, %v3135
    %v3152 = vadd.f32 %v3113, %v3135
    %v3153 = vadd.f32 %v3114, %v3135
    %v3154 = vadd.f32 %v3115, %v3135
    %v3155 = vadd.f32 %v3116, %v3135
    %v3156 = vadd.f32 %v3117, %v3135
    %v3157 = vadd.f32 %v3118, %v3135
    %v3158 = vadd.f32 %v3119, %v3135
    %v3159 = vadd.f32 %v3120, %v3135
    %v3160 = vadd.f32 %v3121, %v3135
    %v3161 = vadd.f32 %v3122, %v3135
    %v3162 = vadd.f32 %v3123, %v3135
    %v3163 = vadd.f32 %v3124, %v3135
    %v3164 = vadd.f32 %v3125, %v3135
    %v3165 = vadd.f32 %v3126, %v3135
    %v3166 = vadd.f32 %v3127, %v3135
    %v3167 = vadd.f32 %v3128, %v3135
    %v3168 = vadd.f32 %v3129, %v3135
    %v3169 = vmax.f32 %v3137, 0.0
    %v3170 = vmax.f32 %v3138, 0.0
    %v3171 = vmax.f32 %v3139, 0.0
    %v3172 = vmax.f32 %v3140, 0.0
    %v3173 = vmax.f32 %v3141, 0.0
    %v3174 = vmax.f32 %v3142, 0.0
    %v3175 = vmax.f32 %v3143, 0.0
    %v3176 = vmax.f32 %v3144, 0.0
    %v3177 = vmax.f32 %v3145, 0.0
    %v3178 = vmax.f32 %v3146, 0.0
    %v3179 = vmax.f32 %v3147, 0.0
    %v3180 = vmax.f32 %v3148, 0.0
    %v3181 = vmax.f32 %v3149, 0.0
    %v3182 = vmax.f32 %v3150, 0.0
    %v3183 = vmax.f32 %v3151, 0.0
    %v3184 = vmax.f32 %v3152, 0.0
    %v3185 = vmax.f32 %v3153, 0.0
    %v3186 = vmax.f32 %v3154, 0.0
    %v3187 = vmax.f32 %v3155, 0.0
    %v3188 = vmax.f32 %v3156, 0.0
    %v3189 = vmax.f32 %v3157, 0.0
    %v3190 = vmax.f32 %v3158, 0.0
    %v3191 = vmax.f32 %v3159, 0.0
    %v3192 = vmax.f32 %v3160, 0.0
    %v3193 = vmax.f32 %v3161, 0.0
    %v3194 = vmax.f32 %v3162, 0.0
    %v3195 = vmax.f32 %v3163, 0.0
    %v3196 = vmax.f32 %v3164, 0.0
    %v3197 = vmax.f32 %v3165, 0.0
    %v3198 = vmax.f32 %v3166, 0.0
    %v3199 = vmax.f32 %v3167, 0.0
    %v3200 = vmax.f32 %v3168, 0.0
    %v3201 = vpack.c.bf16 %v3170, %v3169
    %v3202 = vpack.c.bf16 %v3172, %v3171
    %v3203 = vpack.c.bf16 %v3174, %v3173
    %v3204 = vpack.c.bf16 %v3176, %v3175
    %v3205 = vpack.c.bf16 %v3178, %v3177
    %v3206 = vpack.c.bf16 %v3180, %v3179
    %v3207 = vpack.c.bf16 %v3182, %v3181
    %v3208 = vpack.c.bf16 %v3184, %v3183
    %v3209 = vpack.c.bf16 %v3186, %v3185
    %v3210 = vpack.c.bf16 %v3188, %v3187
    %v3211 = vpack.c.bf16 %v3190, %v3189
    %v3212 = vpack.c.bf16 %v3192, %v3191
    %v3213 = vpack.c.bf16 %v3194, %v3193
    %v3214 = vpack.c.bf16 %v3196, %v3195
    %v3215 = vpack.c.bf16 %v3198, %v3197
    %v3216 = vpack.c.bf16 %v3200, %v3199
    %v3217 = vld [vmem:[%s4] sm:$0xf]
    %v3218 = vld [vmem:[%s4 + $0x4] sm:$0xf]
    %v3219 = vld [vmem:[%s4 + $0x8] sm:$0xf]
    %v3220 = vld [vmem:[%s4 + $0xc] sm:$0xf]
    %v3221 = vld [vmem:[%s4 + $0x10] sm:$0xf]
    %v3222 = vld [vmem:[%s4 + $0x14] sm:$0xf]
    %v3223 = vld [vmem:[%s4 + $0x18] sm:$0xf]
    %v3224 = vld [vmem:[%s4 + $0x1c] sm:$0xf]
    %v3225 = vld [vmem:[%s4 + $0x20] sm:$0xf]
    %v3226 = vld [vmem:[%s4 + $0x24] sm:$0xf]
    %v3227 = vld [vmem:[%s4 + $0x28] sm:$0xf]
    %v3228 = vld [vmem:[%s4 + $0x2c] sm:$0xf]
    %v3229 = vld [vmem:[%s4 + $0x30] sm:$0xf]
    %v3230 = vld [vmem:[%s4 + $0x34] sm:$0xf]
    %v3231 = vld [vmem:[%s4 + $0x38] sm:$0xf]
    %v3232 = vld [vmem:[%s4 + $0x3c] sm:$0xf]
    %v3233 = vld [vmem:[%s5] sm:$0x1]
    %v3235 = vlaneseq
    %v3236 = vshrl.u32 %v3235, 7
    %v3237 = vsub.s32 0, %v3236
    %v3238 = vrot.slane %v3233, %v3237
    %v3256 = vunpack.c.l.b16 %v3217
    %v3257 = vunpack.c.l.b16 %v3218
    %v3258 = vunpack.c.l.b16 %v3219
    %v3259 = vunpack.c.l.b16 %v3220
    %v3260 = vunpack.c.l.b16 %v3221
    %v3261 = vunpack.c.l.b16 %v3222
    %v3262 = vunpack.c.l.b16 %v3223
    %v3263 = vunpack.c.l.b16 %v3224
    %v3264 = vunpack.c.l.b16 %v3225
    %v3265 = vunpack.c.l.b16 %v3226
    %v3266 = vunpack.c.l.b16 %v3227
    %v3267 = vunpack.c.l.b16 %v3228
    %v3268 = vunpack.c.l.b16 %v3229
    %v3269 = vunpack.c.l.b16 %v3230
    %v3270 = vunpack.c.l.b16 %v3231
    %v3271 = vunpack.c.l.b16 %v3232
    %v3272 = vpack.c.b16 %v3257, %v3256
    %v3273 = vpack.c.b16 %v3259, %v3258
    %v3274 = vpack.c.b16 %v3261, %v3260
    %v3275 = vpack.c.b16 %v3263, %v3262
    %v3276 = vpack.c.b16 %v3265, %v3264
    %v3277 = vpack.c.b16 %v3267, %v3266
    %v3278 = vpack.c.b16 %v3269, %v3268
    %v3279 = vpack.c.b16 %v3271, %v3270
    %3288 = vmatprep.subr.bf16.mxu0 0
    %3289 = vmatpush1.bf16.msra.mxu0 %v3272
    %3290 = vmatprep.subr.bf16.mxu0 0
    %3291 = vmatpush1.bf16.msra.mxu0 %v3273
    %3292 = vmatprep.subr.bf16.mxu0 0
    %3293 = vmatpush1.bf16.msra.mxu0 %v3274
    %3294 = vmatprep.subr.bf16.mxu0 0
    %3295 = vmatpush1.bf16.msra.mxu0 %v3275
    %3296 = vmatprep.subr.bf16.mxu0 0
    %3297 = vmatpush1.bf16.msra.mxu0 %v3276
    %3298 = vmatprep.subr.bf16.mxu0 0
    %3299 = vmatpush1.bf16.msra.mxu0 %v3277
    %3300 = vmatprep.subr.bf16.mxu0 0
    %3301 = vmatpush1.bf16.msra.mxu0 %v3278
    %3302 = vmatprep.subr.bf16.mxu0 0
    %3303 = vmatpush1.bf16.msra.mxu0 %v3279
    %3304 = vmatprep.subr.bf16.mxu0 0
    %3305 = vmatpush1.bf16.msra.mxu0 0
    %3306 = vmatprep.subr.bf16.mxu0 0
    %3307 = vmatpush1.bf16.msra.mxu0 0
    %3308 = vmatprep.subr.bf16.mxu0 0
    %3309 = vmatpush1.bf16.msra.mxu0 0
    %3310 = vmatprep.subr.bf16.mxu0 0
    %3311 = vmatpush1.bf16.msra.mxu0 0
    %3312 = vmatprep.subr.bf16.mxu0 0
    %3313 = vmatpush1.bf16.msra.mxu0 0
    %3314 = vmatprep.subr.bf16.mxu0 0
    %3315 = vmatpush1.bf16.msra.mxu0 0
    %3316 = vmatprep.subr.bf16.mxu0 0
    %3317 = vmatpush1.bf16.msra.mxu0 0
    %3318 = vmatprep.subr.bf16.mxu0 0
    %3319 = vmatpush1.bf16.msra.mxu0 0
    %3320 = vmatprep.mubr.bf16.mxu0 0
    %3321 = vmatmul.mubr.bf16.gmra.mrb[0].mxu0 %v3201
    %v3322 = vpop.f32.mrb[0].mxu0
    %v3323 = vadd.f32 %v3238, %v3322
    %v3324 = vpop.f32.mrb[0].mxu0
    %v3325 = vpop.f32.mrb[0].mxu0
    %v3326 = vadd.f32 %v3238, %v3325
    %v3327 = vpop.f32.mrb[0].mxu0
    %3328 = vmatprep.mubr.bf16.mxu0 0
    %3329 = vmatmul.mubr.bf16.gmra.mrb[0].mxu0 %v3202
    %v3330 = vpop.f32.mrb[0].mxu0
    %v3331 = vadd.f32 %v3238, %v3330
    %v3332 = vpop.f32.mrb[0].mxu0
    %v3333 = vpop.f32.mrb[0].mxu0
    %v3334 = vadd.f32 %v3238, %v3333
    %v3335 = vpop.f32.mrb[0].mxu0
    %3336 = vmatprep.mubr.bf16.mxu0 0
    %3337 = vmatmul.mubr.bf16.gmra.mrb[0].mxu0 %v3203
    %v3338 = vpop.f32.mrb[0].mxu0
    %v3339 = vadd.f32 %v3238, %v3338
    %v3340 = vpop.f32.mrb[0].mxu0
    %v3341 = vpop.f32.mrb[0].mxu0
    %v3342 = vadd.f32 %v3238, %v3341
    %v3343 = vpop.f32.mrb[0].mxu0
    %3344 = vmatprep.mubr.bf16.mxu0 0
    %3345 = vmatmul.mubr.bf16.gmra.mrb[0].mxu0 %v3204
    %v3346 = vpop.f32.mrb[0].mxu0
    %v3347 = vadd.f32 %v3238, %v3346
    %v3348 = vpop.f32.mrb[0].mxu0
    %v3349 = vpop.f32.mrb[0].mxu0
    %v3350 = vadd.f32 %v3238, %v3349
    %v3351 = vpop.f32.mrb[0].mxu0
    %3352 = vmatprep.mubr.bf16.mxu0 0
    %3353 = vmatmul.mubr.bf16.gmra.mrb[0].mxu0 %v3205
    %v3354 = vpop.f32.mrb[0].mxu0
    %v3355 = vadd.f32 %v3238, %v3354
    %v3356 = vpop.f32.mrb[0].mxu0
    %v3357 = vpop.f32.mrb[0].mxu0
    %v3358 = vadd.f32 %v3238, %v3357
    %v3359 = vpop.f32.mrb[0].mxu0
    %3360 = vmatprep.mubr.bf16.mxu0 0
    %3361 = vmatmul.mubr.bf16.gmra.mrb[0].mxu0 %v3206
    %v3362 = vpop.f32.mrb[0].mxu0
    %v3363 = vadd.f32 %v3238, %v3362
    %v3364 = vpop.f32.mrb[0].mxu0
    %v3365 = vpop.f32.mrb[0].mxu0
    %v3366 = vadd.f32 %v3238, %v3365
    %v3367 = vpop.f32.mrb[0].mxu0
    %3368 = vmatprep.mubr.bf16.mxu0 0
    %3369 = vmatmul.mubr.bf16.gmra.mrb[0].mxu0 %v3207
    %v3370 = vpop.f32.mrb[0].mxu0
    %v3371 = vadd.f32 %v3238, %v3370
    %v3372 = vpop.f32.mrb[0].mxu0
    %v3373 = vpop.f32.mrb[0].mxu0
    %v3374 = vpop.f32.mrb[0].mxu0
    %3375 = vmatprep.mubr.bf16.mxu0 0
    %3376 = vmatmul.mubr.bf16.gmra.mrb[0].mxu0 %v3208
    %v3377 = vpop.f32.mrb[0].mxu0
    %v3378 = vpop.f32.mrb[0].mxu0
    %v3379 = vpop.f32.mrb[0].mxu0
    %v3380 = vpop.f32.mrb[0].mxu0
    %3381 = vmatprep.mubr.bf16.mxu0 0
    %3382 = vmatmul.mubr.bf16.gmra.mrb[0].mxu0 %v3209
    %v3383 = vpop.f32.mrb[0].mxu0
    %v3384 = vadd.f32 %v3238, %v3383
    %v3385 = vpop.f32.mrb[0].mxu0
    %v3386 = vpop.f32.mrb[0].mxu0
    %v3387 = vadd.f32 %v3238, %v3386
    %v3388 = vpop.f32.mrb[0].mxu0
    %3389 = vmatprep.mubr.bf16.mxu0 0
    %3390 = vmatmul.mubr.bf16.gmra.mrb[0].mxu0 %v3210
    %v3391 = vpop.f32.mrb[0].mxu0
    %v3392 = vadd.f32 %v3238, %v3391
    %v3393 = vpop.f32.mrb[0].mxu0
    %v3394 = vpop.f32.mrb[0].mxu0
    %v3395 = vadd.f32 %v3238, %v3394
    %v3396 = vpop.f32.mrb[0].mxu0
    %3397 = vmatprep.mubr.bf16.mxu0 0
    %3398 = vmatmul.mubr.bf16.gmra.mrb[0].mxu0 %v3211
    %v3399 = vpop.f32.mrb[0].mxu0
    %v3400 = vadd.f32 %v3238, %v3399
    %v3401 = vpop.f32.mrb[0].mxu0
    %v3402 = vpop.f32.mrb[0].mxu0
    %v3403 = vadd.f32 %v3238, %v3402
    %v3404 = vpop.f32.mrb[0].mxu0
    %3405 = vmatprep.mubr.bf16.mxu0 0
    %3406 = vmatmul.mubr.bf16.gmra.mrb[0].mxu0 %v3212
    %v3407 = vpop.f32.mrb[0].mxu0
    %v3408 = vadd.f32 %v3238, %v3407
    %v3409 = vpop.f32.mrb[0].mxu0
    %v3410 = vpop.f32.mrb[0].mxu0
    %v3411 = vadd.f32 %v3238, %v3410
    %v3412 = vpop.f32.mrb[0].mxu0
    %3413 = vmatprep.mubr.bf16.mxu0 0
    %3414 = vmatmul.mubr.bf16.gmra.mrb[0].mxu0 %v3213
    %v3415 = vpop.f32.mrb[0].mxu0
    %v3416 = vadd.f32 %v3238, %v3415
    %v3417 = vpop.f32.mrb[0].mxu0
    %v3418 = vpop.f32.mrb[0].mxu0
    %v3419 = vadd.f32 %v3238, %v3418
    %v3420 = vpop.f32.mrb[0].mxu0
    %3421 = vmatprep.mubr.bf16.mxu0 0
    %3422 = vmatmul.mubr.bf16.gmra.mrb[0].mxu0 %v3214
    %v3423 = vpop.f32.mrb[0].mxu0
    %v3424 = vadd.f32 %v3238, %v3423
    %v3425 = vpop.f32.mrb[0].mxu0
    %v3426 = vpop.f32.mrb[0].mxu0
    %v3427 = vadd.f32 %v3238, %v3426
    %v3428 = vpop.f32.mrb[0].mxu0
    %3429 = vmatprep.mubr.bf16.mxu0 0
    %3430 = vmatmul.mubr.bf16.gmra.mrb[0].mxu0 %v3215
    %v3431 = vpop.f32.mrb[0].mxu0
    %v3432 = vadd.f32 %v3238, %v3431
    %v3433 = vpop.f32.mrb[0].mxu0
    %v3434 = vpop.f32.mrb[0].mxu0
    %v3435 = vpop.f32.mrb[0].mxu0
    %3436 = vmatprep.mubr.bf16.mxu0 0
    %3437 = vmatmul.mubr.bf16.gmra.mrb[0].mxu0 %v3216
    %v3438 = vpop.f32.mrb[0].mxu0
    %v3439 = vpop.f32.mrb[0].mxu0
    %v3440 = vpop.f32.mrb[0].mxu0
    %v3441 = vpop.f32.mrb[0].mxu0
    %3442 = vdwg.mxu0
    %v3443 = vmax.f32 %v3323, 0.0
    %v3444 = vmax.f32 %v3326, 0.0
    %v3445 = vmax.f32 %v3331, 0.0
    %v3446 = vmax.f32 %v3334, 0.0
    %v3447 = vmax.f32 %v3339, 0.0
    %v3448 = vmax.f32 %v3342, 0.0
    %v3449 = vmax.f32 %v3347, 0.0
    %v3450 = vmax.f32 %v3350, 0.0
    %v3451 = vmax.f32 %v3355, 0.0
    %v3452 = vmax.f32 %v3358, 0.0
    %v3453 = vmax.f32 %v3363, 0.0
    %v3454 = vmax.f32 %v3366, 0.0
    %v3455 = vmax.f32 %v3371, 0.0
    %v3456 = vmax.f32 %v3384, 0.0
    %v3457 = vmax.f32 %v3387, 0.0
    %v3458 = vmax.f32 %v3392, 0.0
    %v3459 = vmax.f32 %v3395, 0.0
    %v3460 = vmax.f32 %v3400, 0.0
    %v3461 = vmax.f32 %v3403, 0.0
    %v3462 = vmax.f32 %v3408, 0.0
    %v3463 = vmax.f32 %v3411, 0.0
    %v3464 = vmax.f32 %v3416, 0.0
    %v3465 = vmax.f32 %v3419, 0.0
    %v3466 = vmax.f32 %v3424, 0.0
    %v3467 = vmax.f32 %v3427, 0.0
    %v3468 = vmax.f32 %v3432, 0.0
    %v3469 = vld [vmem:[%s7] sm:$0x1]
    %v3470 = vld [vmem:[%s6] sm:$0xff]
    %v3471 = vld [vmem:[%s6 + $0x8] sm:$0xff]
    %v3472 = vld [vmem:[%s6 + $0x10] sm:$0xff]
    %v3473 = vld [vmem:[%s6 + $0x18] sm:$0xff]
    %v3474 = vld [vmem:[%s6 + $0x20] sm:$0xff]
    %v3475 = vld [vmem:[%s6 + $0x28] sm:$0xff]
    %v3476 = vld [vmem:[%s6 + $0x30] sm:$0xff]
    %v3477 = vld [vmem:[%s6 + $0x38] sm:$0xff]
    %v3478 = vld [vmem:[%s6 + $0x40] sm:$0xff]
    %v3479 = vld [vmem:[%s6 + $0x48] sm:$0xff]
    %v3480 = vld [vmem:[%s6 + $0x50] sm:$0xff]
    %v3481 = vld [vmem:[%s6 + $0x58] sm:$0xff]
    %v3482 = vld [vmem:[%s6 + $0x60] sm:$0xff]
    %3484 = vset.pattern.permute.xlu0 0
    %3485 = vperm.xlu0 %3484, %v3443
    %v3486 = vpop.permute.xlu0 %3485
    %3489 = vset.pattern.permute.xlu0 0
    %3490 = vperm.xlu0 %3489, %v3444
    %v3491 = vpop.permute.xlu0 %3490
    %3494 = vset.pattern.permute.xlu0 0
    %3495 = vperm.xlu0 %3494, %v3445
    %v3496 = vpop.permute.xlu0 %3495
    %3499 = vset.pattern.permute.xlu0 0
    %3500 = vperm.xlu0 %3499, %v3446
    %v3501 = vpop.permute.xlu0 %3500
    %3504 = vset.pattern.permute.xlu0 0
    %3505 = vperm.xlu0 %3504, %v3447
    %v3506 = vpop.permute.xlu0 %3505
    %3509 = vset.pattern.permute.xlu0 0
    %3510 = vperm.xlu0 %3509, %v3448
    %v3511 = vpop.permute.xlu0 %3510
    %3514 = vset.pattern.permute.xlu0 0
    %3515 = vperm.xlu0 %3514, %v3449
    %v3516 = vpop.permute.xlu0 %3515
    %3519 = vset.pattern.permute.xlu0 0
    %3520 = vperm.xlu0 %3519, %v3450
    %v3521 = vpop.permute.xlu0 %3520
    %3524 = vset.pattern.permute.xlu0 0
    %3525 = vperm.xlu0 %3524, %v3451
    %v3526 = vpop.permute.xlu0 %3525
    %3529 = vset.pattern.permute.xlu0 0
    %3530 = vperm.xlu0 %3529, %v3452
    %v3531 = vpop.permute.xlu0 %3530
    %3534 = vset.pattern.permute.xlu0 0
    %3535 = vperm.xlu0 %3534, %v3453
    %v3536 = vpop.permute.xlu0 %3535
    %3539 = vset.pattern.permute.xlu0 0
    %3540 = vperm.xlu0 %3539, %v3454
    %v3541 = vpop.permute.xlu0 %3540
    %3544 = vset.pattern.permute.xlu0 0
    %3545 = vperm.xlu0 %3544, %v3455
    %v3546 = vpop.permute.xlu0 %3545
    %v3548 = vmul.f32 %v3486, %v3470
    %v3549 = vmul.f32 %v3491, %v3471
    %v3550 = vmul.f32 %v3496, %v3472
    %v3551 = vmul.f32 %v3501, %v3473
    %v3552 = vmul.f32 %v3506, %v3474
    %v3553 = vmul.f32 %v3511, %v3475
    %v3554 = vmul.f32 %v3516, %v3476
    %v3555 = vmul.f32 %v3521, %v3477
    %v3556 = vmul.f32 %v3526, %v3478
    %v3557 = vmul.f32 %v3531, %v3479
    %v3558 = vmul.f32 %v3536, %v3480
    %v3559 = vmul.f32 %v3541, %v3481
    %v3560 = vmul.f32 %v3546, %v3482
    %vm3561 = vcmask 64512
    %v3562 = vsel %vm3561, %v3548, 0.0
    %v3563 = vsel %vm3561, %v3549, 0.0
    %v3564 = vadd.f32 %v3562, %v3563
    %v3565 = vsel %vm3561, %v3550, 0.0
    %v3566 = vadd.f32 %v3564, %v3565
    %v3567 = vsel %vm3561, %v3551, 0.0
    %v3568 = vadd.f32 %v3566, %v3567
    %v3569 = vsel %vm3561, %v3552, 0.0
    %v3570 = vadd.f32 %v3568, %v3569
    %v3571 = vsel %vm3561, %v3553, 0.0
    %v3572 = vadd.f32 %v3570, %v3571
    %v3573 = vsel %vm3561, %v3554, 0.0
    %v3574 = vadd.f32 %v3572, %v3573
    %v3575 = vsel %vm3561, %v3555, 0.0
    %v3576 = vadd.f32 %v3574, %v3575
    %v3577 = vsel %vm3561, %v3556, 0.0
    %v3578 = vadd.f32 %v3576, %v3577
    %v3579 = vsel %vm3561, %v3557, 0.0
    %v3580 = vadd.f32 %v3578, %v3579
    %v3581 = vsel %vm3561, %v3558, 0.0
    %v3582 = vadd.f32 %v3580, %v3581
    %v3583 = vsel %vm3561, %v3559, 0.0
    %v3584 = vadd.f32 %v3582, %v3583
    %v3585 = vsel %vm3561, %v3560, 0.0
    %v3586 = vadd.f32 %v3584, %v3585
    %v3587 = vrot.slane %v3586, 4
    %v3588 = vadd.f32 %v3586, %v3587
    %v3589 = vrot.slane %v3588, 2
    %v3590 = vadd.f32 %v3588, %v3589
    %v3591 = vrot.slane %v3590, 1
    %v3592 = vadd.f32 %v3590, %v3591
    %v3593 = vadd.f32 %v3469, %v3592
    %s3594 = scalar_lea.vmem %s6, 104
    %v3595 = vld [vmem:[%s3594] sm:$0xff]
    %v3596 = vld [vmem:[%s3594 + $0x8] sm:$0xff]
    %v3597 = vld [vmem:[%s3594 + $0x10] sm:$0xff]
    %v3598 = vld [vmem:[%s3594 + $0x18] sm:$0xff]
    %v3599 = vld [vmem:[%s3594 + $0x20] sm:$0xff]
    %v3600 = vld [vmem:[%s3594 + $0x28] sm:$0xff]
    %v3601 = vld [vmem:[%s3594 + $0x30] sm:$0xff]
    %v3602 = vld [vmem:[%s3594 + $0x38] sm:$0xff]
    %v3603 = vld [vmem:[%s3594 + $0x40] sm:$0xff]
    %v3604 = vld [vmem:[%s3594 + $0x48] sm:$0xff]
    %v3605 = vld [vmem:[%s3594 + $0x50] sm:$0xff]
    %v3606 = vld [vmem:[%s3594 + $0x58] sm:$0xff]
    %v3607 = vld [vmem:[%s3594 + $0x60] sm:$0xff]
    %3608 = vset.pattern.permute.xlu0 1
    %3609 = vperm.xlu0 %3608, %v3443
    %v3610 = vpop.permute.xlu0 %3609
    %3612 = vset.pattern.permute.xlu0 1
    %3613 = vperm.xlu0 %3612, %v3444
    %v3614 = vpop.permute.xlu0 %3613
    %3616 = vset.pattern.permute.xlu0 1
    %3617 = vperm.xlu0 %3616, %v3445
    %v3618 = vpop.permute.xlu0 %3617
    %3620 = vset.pattern.permute.xlu0 1
    %3621 = vperm.xlu0 %3620, %v3446
    %v3622 = vpop.permute.xlu0 %3621
    %3624 = vset.pattern.permute.xlu0 1
    %3625 = vperm.xlu0 %3624, %v3447
    %v3626 = vpop.permute.xlu0 %3625
    %3628 = vset.pattern.permute.xlu0 1
    %3629 = vperm.xlu0 %3628, %v3448
    %v3630 = vpop.permute.xlu0 %3629
    %3632 = vset.pattern.permute.xlu0 1
    %3633 = vperm.xlu0 %3632, %v3449
    %v3634 = vpop.permute.xlu0 %3633
    %3636 = vset.pattern.permute.xlu0 1
    %3637 = vperm.xlu0 %3636, %v3450
    %v3638 = vpop.permute.xlu0 %3637
    %3640 = vset.pattern.permute.xlu0 1
    %3641 = vperm.xlu0 %3640, %v3451
    %v3642 = vpop.permute.xlu0 %3641
    %3644 = vset.pattern.permute.xlu0 1
    %3645 = vperm.xlu0 %3644, %v3452
    %v3646 = vpop.permute.xlu0 %3645
    %3648 = vset.pattern.permute.xlu0 1
    %3649 = vperm.xlu0 %3648, %v3453
    %v3650 = vpop.permute.xlu0 %3649
    %3652 = vset.pattern.permute.xlu0 1
    %3653 = vperm.xlu0 %3652, %v3454
    %v3654 = vpop.permute.xlu0 %3653
    %3656 = vset.pattern.permute.xlu0 1
    %3657 = vperm.xlu0 %3656, %v3455
    %v3658 = vpop.permute.xlu0 %3657
    %v3660 = vmul.f32 %v3610, %v3595
    %v3661 = vmul.f32 %v3614, %v3596
    %v3662 = vmul.f32 %v3618, %v3597
    %v3663 = vmul.f32 %v3622, %v3598
    %v3664 = vmul.f32 %v3626, %v3599
    %v3665 = vmul.f32 %v3630, %v3600
    %v3666 = vmul.f32 %v3634, %v3601
    %v3667 = vmul.f32 %v3638, %v3602
    %v3668 = vmul.f32 %v3642, %v3603
    %v3669 = vmul.f32 %v3646, %v3604
    %v3670 = vmul.f32 %v3650, %v3605
    %v3671 = vmul.f32 %v3654, %v3606
    %v3672 = vmul.f32 %v3658, %v3607
    %v3673 = vsel %vm3561, %v3660, 0.0
    %v3674 = vsel %vm3561, %v3661, 0.0
    %v3675 = vadd.f32 %v3673, %v3674
    %v3676 = vsel %vm3561, %v3662, 0.0
    %v3677 = vadd.f32 %v3675, %v3676
    %v3678 = vsel %vm3561, %v3663, 0.0
    %v3679 = vadd.f32 %v3677, %v3678
    %v3680 = vsel %vm3561, %v3664, 0.0
    %v3681 = vadd.f32 %v3679, %v3680
    %v3682 = vsel %vm3561, %v3665, 0.0
    %v3683 = vadd.f32 %v3681, %v3682
    %v3684 = vsel %vm3561, %v3666, 0.0
    %v3685 = vadd.f32 %v3683, %v3684
    %v3686 = vsel %vm3561, %v3667, 0.0
    %v3687 = vadd.f32 %v3685, %v3686
    %v3688 = vsel %vm3561, %v3668, 0.0
    %v3689 = vadd.f32 %v3687, %v3688
    %v3690 = vsel %vm3561, %v3669, 0.0
    %v3691 = vadd.f32 %v3689, %v3690
    %v3692 = vsel %vm3561, %v3670, 0.0
    %v3693 = vadd.f32 %v3691, %v3692
    %v3694 = vsel %vm3561, %v3671, 0.0
    %v3695 = vadd.f32 %v3693, %v3694
    %v3696 = vsel %vm3561, %v3672, 0.0
    %v3697 = vadd.f32 %v3695, %v3696
    %v3698 = vrot.slane %v3697, 4
    %v3699 = vadd.f32 %v3697, %v3698
    %v3700 = vrot.slane %v3699, 2
    %v3701 = vadd.f32 %v3699, %v3700
    %v3702 = vrot.slane %v3701, 1
    %v3703 = vadd.f32 %v3701, %v3702
    %v3704 = vadd.f32 %v3593, %v3703
    %v3705 = vld [vmem:[%s8] sm:$0xff]
    %v3706 = vld [vmem:[%s8 + $0x8] sm:$0xff]
    %v3707 = vld [vmem:[%s8 + $0x10] sm:$0xff]
    %v3708 = vld [vmem:[%s8 + $0x18] sm:$0xff]
    %v3709 = vld [vmem:[%s8 + $0x20] sm:$0xff]
    %v3710 = vld [vmem:[%s8 + $0x28] sm:$0xff]
    %v3711 = vld [vmem:[%s8 + $0x30] sm:$0xff]
    %v3712 = vld [vmem:[%s8 + $0x38] sm:$0xff]
    %v3713 = vld [vmem:[%s8 + $0x40] sm:$0xff]
    %v3714 = vld [vmem:[%s8 + $0x48] sm:$0xff]
    %v3715 = vld [vmem:[%s8 + $0x50] sm:$0xff]
    %v3716 = vld [vmem:[%s8 + $0x58] sm:$0xff]
    %v3717 = vld [vmem:[%s8 + $0x60] sm:$0xff]
    %3731 = vrot.lane.b32.xlu0 %v3705, 2
    %v3732 = vpop.permute.xlu0 %3731
    %3733 = vrot.lane.b32.xlu0 %v3706, 2
    %v3734 = vpop.permute.xlu0 %3733
    %3735 = vrot.lane.b32.xlu0 %v3707, 2
    %v3736 = vpop.permute.xlu0 %3735
    %3737 = vrot.lane.b32.xlu0 %v3708, 2
    %v3738 = vpop.permute.xlu0 %3737
    %3739 = vrot.lane.b32.xlu0 %v3709, 2
    %v3740 = vpop.permute.xlu0 %3739
    %3741 = vrot.lane.b32.xlu0 %v3710, 2
    %v3742 = vpop.permute.xlu0 %3741
    %3743 = vrot.lane.b32.xlu0 %v3711, 2
    %v3744 = vpop.permute.xlu0 %3743
    %3745 = vrot.lane.b32.xlu0 %v3712, 2
    %v3746 = vpop.permute.xlu0 %3745
    %3747 = vrot.lane.b32.xlu0 %v3713, 2
    %v3748 = vpop.permute.xlu0 %3747
    %3749 = vrot.lane.b32.xlu0 %v3714, 2
    %v3750 = vpop.permute.xlu0 %3749
    %3751 = vrot.lane.b32.xlu0 %v3715, 2
    %v3752 = vpop.permute.xlu0 %3751
    %3753 = vrot.lane.b32.xlu0 %v3716, 2
    %v3754 = vpop.permute.xlu0 %3753
    %3755 = vrot.lane.b32.xlu0 %v3717, 2
    %v3756 = vpop.permute.xlu0 %3755
    %v3770 = vmul.f32 %v3443, %v3732
    %v3771 = vmul.f32 %v3444, %v3734
    %v3772 = vmul.f32 %v3445, %v3736
    %v3773 = vmul.f32 %v3446, %v3738
    %v3774 = vmul.f32 %v3447, %v3740
    %v3775 = vmul.f32 %v3448, %v3742
    %v3776 = vmul.f32 %v3449, %v3744
    %v3777 = vmul.f32 %v3450, %v3746
    %v3778 = vmul.f32 %v3451, %v3748
    %v3779 = vmul.f32 %v3452, %v3750
    %v3780 = vmul.f32 %v3453, %v3752
    %v3781 = vmul.f32 %v3454, %v3754
    %v3782 = vmul.f32 %v3455, %v3756
    %vm3783 = vcmask 23568
    %v3784 = vsel %vm3783, %v3770, 0.0
    %v3785 = vsel %vm3783, %v3771, 0.0
    %v3786 = vadd.f32 %v3784, %v3785
    %v3787 = vsel %vm3783, %v3772, 0.0
    %v3788 = vadd.f32 %v3786, %v3787
    %v3789 = vsel %vm3783, %v3773, 0.0
    %v3790 = vadd.f32 %v3788, %v3789
    %v3791 = vsel %vm3783, %v3774, 0.0
    %v3792 = vadd.f32 %v3790, %v3791
    %v3793 = vsel %vm3783, %v3775, 0.0
    %v3794 = vadd.f32 %v3792, %v3793
    %v3795 = vsel %vm3783, %v3776, 0.0
    %v3796 = vadd.f32 %v3794, %v3795
    %v3797 = vsel %vm3783, %v3777, 0.0
    %v3798 = vadd.f32 %v3796, %v3797
    %v3799 = vsel %vm3783, %v3778, 0.0
    %v3800 = vadd.f32 %v3798, %v3799
    %v3801 = vsel %vm3783, %v3779, 0.0
    %v3802 = vadd.f32 %v3800, %v3801
    %v3803 = vsel %vm3783, %v3780, 0.0
    %v3804 = vadd.f32 %v3802, %v3803
    %v3805 = vsel %vm3783, %v3781, 0.0
    %v3806 = vadd.f32 %v3804, %v3805
    %v3807 = vsel %vm3783, %v3782, 0.0
    %v3808 = vadd.f32 %v3806, %v3807
    %v3809 = vrot.slane %v3808, 4
    %v3810 = vadd.f32 %v3808, %v3809
    %v3811 = vrot.slane %v3810, 2
    %v3812 = vadd.f32 %v3810, %v3811
    %v3813 = vrot.slane %v3812, 1
    %v3814 = vadd.f32 %v3812, %v3813
    %3816 = vset.pattern.permute.xlu0 0
    %3817 = vperm.xlu0 %3816, %v3456
    %v3818 = vpop.permute.xlu0 %3817
    %3821 = vset.pattern.permute.xlu0 0
    %3822 = vperm.xlu0 %3821, %v3457
    %v3823 = vpop.permute.xlu0 %3822
    %3826 = vset.pattern.permute.xlu0 0
    %3827 = vperm.xlu0 %3826, %v3458
    %v3828 = vpop.permute.xlu0 %3827
    %3831 = vset.pattern.permute.xlu0 0
    %3832 = vperm.xlu0 %3831, %v3459
    %v3833 = vpop.permute.xlu0 %3832
    %3836 = vset.pattern.permute.xlu0 0
    %3837 = vperm.xlu0 %3836, %v3460
    %v3838 = vpop.permute.xlu0 %3837
    %3841 = vset.pattern.permute.xlu0 0
    %3842 = vperm.xlu0 %3841, %v3461
    %v3843 = vpop.permute.xlu0 %3842
    %3846 = vset.pattern.permute.xlu0 0
    %3847 = vperm.xlu0 %3846, %v3462
    %v3848 = vpop.permute.xlu0 %3847
    %3851 = vset.pattern.permute.xlu0 0
    %3852 = vperm.xlu0 %3851, %v3463
    %v3853 = vpop.permute.xlu0 %3852
    %3856 = vset.pattern.permute.xlu0 0
    %3857 = vperm.xlu0 %3856, %v3464
    %v3858 = vpop.permute.xlu0 %3857
    %3861 = vset.pattern.permute.xlu0 0
    %3862 = vperm.xlu0 %3861, %v3465
    %v3863 = vpop.permute.xlu0 %3862
    %3866 = vset.pattern.permute.xlu0 0
    %3867 = vperm.xlu0 %3866, %v3466
    %v3868 = vpop.permute.xlu0 %3867
    %3871 = vset.pattern.permute.xlu0 0
    %3872 = vperm.xlu0 %3871, %v3467
    %v3873 = vpop.permute.xlu0 %3872
    %3876 = vset.pattern.permute.xlu0 0
    %3877 = vperm.xlu0 %3876, %v3468
    %v3878 = vpop.permute.xlu0 %3877
    %v3880 = vmul.f32 %v3818, %v3470
    %v3881 = vmul.f32 %v3823, %v3471
    %v3882 = vmul.f32 %v3828, %v3472
    %v3883 = vmul.f32 %v3833, %v3473
    %v3884 = vmul.f32 %v3838, %v3474
    %v3885 = vmul.f32 %v3843, %v3475
    %v3886 = vmul.f32 %v3848, %v3476
    %v3887 = vmul.f32 %v3853, %v3477
    %v3888 = vmul.f32 %v3858, %v3478
    %v3889 = vmul.f32 %v3863, %v3479
    %v3890 = vmul.f32 %v3868, %v3480
    %v3891 = vmul.f32 %v3873, %v3481
    %v3892 = vmul.f32 %v3878, %v3482
    %v3893 = vsel %vm3561, %v3880, 0.0
    %v3894 = vsel %vm3561, %v3881, 0.0
    %v3895 = vadd.f32 %v3893, %v3894
    %v3896 = vsel %vm3561, %v3882, 0.0
    %v3897 = vadd.f32 %v3895, %v3896
    %v3898 = vsel %vm3561, %v3883, 0.0
    %v3899 = vadd.f32 %v3897, %v3898
    %v3900 = vsel %vm3561, %v3884, 0.0
    %v3901 = vadd.f32 %v3899, %v3900
    %v3902 = vsel %vm3561, %v3885, 0.0
    %v3903 = vadd.f32 %v3901, %v3902
    %v3904 = vsel %vm3561, %v3886, 0.0
    %v3905 = vadd.f32 %v3903, %v3904
    %v3906 = vsel %vm3561, %v3887, 0.0
    %v3907 = vadd.f32 %v3905, %v3906
    %v3908 = vsel %vm3561, %v3888, 0.0
    %v3909 = vadd.f32 %v3907, %v3908
    %v3910 = vsel %vm3561, %v3889, 0.0
    %v3911 = vadd.f32 %v3909, %v3910
    %v3912 = vsel %vm3561, %v3890, 0.0
    %v3913 = vadd.f32 %v3911, %v3912
    %v3914 = vsel %vm3561, %v3891, 0.0
    %v3915 = vadd.f32 %v3913, %v3914
    %v3916 = vsel %vm3561, %v3892, 0.0
    %v3917 = vadd.f32 %v3915, %v3916
    %v3918 = vrot.slane %v3917, 4
    %v3919 = vadd.f32 %v3917, %v3918
    %v3920 = vrot.slane %v3919, 2
    %v3921 = vadd.f32 %v3919, %v3920
    %v3922 = vrot.slane %v3921, 1
    %v3923 = vadd.f32 %v3921, %v3922
    %v3924 = vadd.f32 %v3469, %v3923
    %3925 = vset.pattern.permute.xlu0 1
    %3926 = vperm.xlu0 %3925, %v3456
    %v3927 = vpop.permute.xlu0 %3926
    %3929 = vset.pattern.permute.xlu0 1
    %3930 = vperm.xlu0 %3929, %v3457
    %v3931 = vpop.permute.xlu0 %3930
    %3933 = vset.pattern.permute.xlu0 1
    %3934 = vperm.xlu0 %3933, %v3458
    %v3935 = vpop.permute.xlu0 %3934
    %3937 = vset.pattern.permute.xlu0 1
    %3938 = vperm.xlu0 %3937, %v3459
    %v3939 = vpop.permute.xlu0 %3938
    %3941 = vset.pattern.permute.xlu0 1
    %3942 = vperm.xlu0 %3941, %v3460
    %v3943 = vpop.permute.xlu0 %3942
    %3945 = vset.pattern.permute.xlu0 1
    %3946 = vperm.xlu0 %3945, %v3461
    %v3947 = vpop.permute.xlu0 %3946
    %3949 = vset.pattern.permute.xlu0 1
    %3950 = vperm.xlu0 %3949, %v3462
    %v3951 = vpop.permute.xlu0 %3950
    %3953 = vset.pattern.permute.xlu0 1
    %3954 = vperm.xlu0 %3953, %v3463
    %v3955 = vpop.permute.xlu0 %3954
    %3957 = vset.pattern.permute.xlu0 1
    %3958 = vperm.xlu0 %3957, %v3464
    %v3959 = vpop.permute.xlu0 %3958
    %3961 = vset.pattern.permute.xlu0 1
    %3962 = vperm.xlu0 %3961, %v3465
    %v3963 = vpop.permute.xlu0 %3962
    %3965 = vset.pattern.permute.xlu0 1
    %3966 = vperm.xlu0 %3965, %v3466
    %v3967 = vpop.permute.xlu0 %3966
    %3969 = vset.pattern.permute.xlu0 1
    %3970 = vperm.xlu0 %3969, %v3467
    %v3971 = vpop.permute.xlu0 %3970
    %3973 = vset.pattern.permute.xlu0 1
    %3974 = vperm.xlu0 %3973, %v3468
    %v3975 = vpop.permute.xlu0 %3974
    %v3977 = vmul.f32 %v3927, %v3595
    %v3978 = vmul.f32 %v3931, %v3596
    %v3979 = vmul.f32 %v3935, %v3597
    %v3980 = vmul.f32 %v3939, %v3598
    %v3981 = vmul.f32 %v3943, %v3599
    %v3982 = vmul.f32 %v3947, %v3600
    %v3983 = vmul.f32 %v3951, %v3601
    %v3984 = vmul.f32 %v3955, %v3602
    %v3985 = vmul.f32 %v3959, %v3603
    %v3986 = vmul.f32 %v3963, %v3604
    %v3987 = vmul.f32 %v3967, %v3605
    %v3988 = vmul.f32 %v3971, %v3606
    %v3989 = vmul.f32 %v3975, %v3607
    %v3990 = vsel %vm3561, %v3977, 0.0
    %v3991 = vsel %vm3561, %v3978, 0.0
    %v3992 = vadd.f32 %v3990, %v3991
    %v3993 = vsel %vm3561, %v3979, 0.0
    %v3994 = vadd.f32 %v3992, %v3993
    %v3995 = vsel %vm3561, %v3980, 0.0
    %v3996 = vadd.f32 %v3994, %v3995
    %v3997 = vsel %vm3561, %v3981, 0.0
    %v3998 = vadd.f32 %v3996, %v3997
    %v3999 = vsel %vm3561, %v3982, 0.0
    %v4000 = vadd.f32 %v3998, %v3999
    %v4001 = vsel %vm3561, %v3983, 0.0
    %v4002 = vadd.f32 %v4000, %v4001
    %v4003 = vsel %vm3561, %v3984, 0.0
    %v4004 = vadd.f32 %v4002, %v4003
    %v4005 = vsel %vm3561, %v3985, 0.0
    %v4006 = vadd.f32 %v4004, %v4005
    %v4007 = vsel %vm3561, %v3986, 0.0
    %v4008 = vadd.f32 %v4006, %v4007
    %v4009 = vsel %vm3561, %v3987, 0.0
    %v4010 = vadd.f32 %v4008, %v4009
    %v4011 = vsel %vm3561, %v3988, 0.0
    %v4012 = vadd.f32 %v4010, %v4011
    %v4013 = vsel %vm3561, %v3989, 0.0
    %v4014 = vadd.f32 %v4012, %v4013
    %v4015 = vrot.slane %v4014, 4
    %v4016 = vadd.f32 %v4014, %v4015
    %v4017 = vrot.slane %v4016, 2
    %v4018 = vadd.f32 %v4016, %v4017
    %v4019 = vrot.slane %v4018, 1
    %v4020 = vadd.f32 %v4018, %v4019
    %v4021 = vadd.f32 %v3924, %v4020
    %v4022 = vmul.f32 %v3456, %v3732
    %v4023 = vmul.f32 %v3457, %v3734
    %v4024 = vmul.f32 %v3458, %v3736
    %v4025 = vmul.f32 %v3459, %v3738
    %v4026 = vmul.f32 %v3460, %v3740
    %v4027 = vmul.f32 %v3461, %v3742
    %v4028 = vmul.f32 %v3462, %v3744
    %v4029 = vmul.f32 %v3463, %v3746
    %v4030 = vmul.f32 %v3464, %v3748
    %v4031 = vmul.f32 %v3465, %v3750
    %v4032 = vmul.f32 %v3466, %v3752
    %v4033 = vmul.f32 %v3467, %v3754
    %v4034 = vmul.f32 %v3468, %v3756
    %v4035 = vsel %vm3783, %v4022, 0.0
    %v4036 = vsel %vm3783, %v4023, 0.0
    %v4037 = vadd.f32 %v4035, %v4036
    %v4038 = vsel %vm3783, %v4024, 0.0
    %v4039 = vadd.f32 %v4037, %v4038
    %v4040 = vsel %vm3783, %v4025, 0.0
    %v4041 = vadd.f32 %v4039, %v4040
    %v4042 = vsel %vm3783, %v4026, 0.0
    %v4043 = vadd.f32 %v4041, %v4042
    %v4044 = vsel %vm3783, %v4027, 0.0
    %v4045 = vadd.f32 %v4043, %v4044
    %v4046 = vsel %vm3783, %v4028, 0.0
    %v4047 = vadd.f32 %v4045, %v4046
    %v4048 = vsel %vm3783, %v4029, 0.0
    %v4049 = vadd.f32 %v4047, %v4048
    %v4050 = vsel %vm3783, %v4030, 0.0
    %v4051 = vadd.f32 %v4049, %v4050
    %v4052 = vsel %vm3783, %v4031, 0.0
    %v4053 = vadd.f32 %v4051, %v4052
    %v4054 = vsel %vm3783, %v4032, 0.0
    %v4055 = vadd.f32 %v4053, %v4054
    %v4056 = vsel %vm3783, %v4033, 0.0
    %v4057 = vadd.f32 %v4055, %v4056
    %v4058 = vsel %vm3783, %v4034, 0.0
    %v4059 = vadd.f32 %v4057, %v4058
    %v4060 = vrot.slane %v4059, 4
    %v4061 = vadd.f32 %v4059, %v4060
    %v4062 = vrot.slane %v4061, 2
    %v4063 = vadd.f32 %v4061, %v4062
    %v4064 = vrot.slane %v4063, 1
    %v4065 = vadd.f32 %v4063, %v4064
    %v4067 = vlaneseq
    %v4068 = vshrl.u32 %v4067, 7
    %v4069 = vsub.s32 0, %v4068
    %v4070 = vrot.slane %v4021, %v4069
    %vm4072 = vcmask 1040384
    %v4073 = vsel %vm4072, %v3704, %v4070
    %vm4074 = vcmask 58368
    %v4075 = vsel %vm4074, %v4073, -inf
    %4076 = vmax.xlane.f32.xlu0 %v4075
    %v4077 = vpop.xlane.xlu0 %4076
    %v4078 = vsub.f32 %v4073, %v4077
    %v4079 = vmul.f32 %v4078, 1.442695
    %v4080 = vpow.pop %v4079
    %v4081 = vsel %vm4074, %v4080, 0.0
    %4082 = vadd.xlane.f32.xlu0 %v4081
    %v4083 = vpop.xlane.xlu0 %4082
    %v4084 = vrcp.pop %v4083
    %v4085 = vmul.f32 %v4080, %v4084
    %4086 = vst.msk [vmem:[#allocation4] sm:$0x3] %vm4074, %v4085
    %v4087 = vsel %vm4072, %v3814, %v4065
    %v4088 = vld [vmem:[#allocation3] sm:$0x1]
    %v4090 = vlaneseq
    %v4091 = vshrl.u32 %v4090, 7
    %v4092 = vsub.s32 0, %v4091
    %v4093 = vrot.slane %v4088, %v4092
    %4094 = vrot.lane.b32.xlu0 %v4093, 2
    %v4095 = vpop.permute.xlu0 %4094
    %v4097 = vadd.f32 %v4087, %v4095
    %v4098 = vtanh.pop %v4097
    %4100 = vrot.lane.b32.xlu0 %v4098, 126
    %v4101 = vpop.permute.xlu0 %4100
    %vm4103 = vcmask 1024
    %4104 = vst.msk [vmem:[%s11] sm:$0x3] %vm4103, %v4101
    // Predicated region
    $region42: #{alphazero_forward.1} parent=1 // pred_check
      _
    $region43: #{alphazero_forward.1} parent=1 // pred_check_branch
      %4106 = sbr.rel (0) target = $region45
    $region44: #{alphazero_forward.1} parent=1 // pred_region
      %s4108 = ssub.s32 32, 32
      %4109 = vsyncadd [#allocation5], %s4108
      %s4111 = sshll.u32 [#allocation4], 4
      %s4112 = int_to_ptr.vmem [resolvable:$true] %s4111
      %4114 = dma.vmem_to_hbm [thread:$0]  %s4112, 32, %s10, [#allocation5]
    $region45: #{alphazero_forward.1} parent=1 // pred_fallthru
      _
    // Predicated region
    $region46: #{alphazero_forward.1} parent=1 // pred_check
      _
    $region47: #{alphazero_forward.1} parent=1 // pred_check_branch
      %4116 = sbr.rel (0) target = $region49
    $region48: #{alphazero_forward.1} parent=1 // pred_region
      _
    $region49: #{alphazero_forward.1} parent=1 // pred_fallthru
      _
    // Predicated region
    $region50: #{alphazero_forward.1} parent=1 // pred_check
      _
    $region51: #{alphazero_forward.1} parent=1 // pred_check_branch
      %4118 = sbr.rel (0) target = $region53
    $region52: #{alphazero_forward.1} parent=1 // pred_region
      %4119 = dma.done [#allocation5], 32
    $region53: #{alphazero_forward.1} parent=1 // pred_fallthru
      _
    // Predicated region
    $region54: #{alphazero_forward.1} parent=1 // pred_check
      _
    $region55: #{alphazero_forward.1} parent=1 // pred_check_branch
      %4121 = sbr.rel (0) target = $region57
    $region56: #{alphazero_forward.1} parent=1 // pred_region
      _
    $region57: #{alphazero_forward.1} parent=1 // pred_fallthru
      _
    %4122 = vsyncpa [#allocation5], 1

</llo_original>
